<compile_context>
chip_gen: v7x
topology: tpu7x:2x2x1
jax: 0.10.0
libtpu: 0.0.40
codegen_flags: <defaults>
</compile_context>

<pallas_src>
import functools

import jax
import jax.numpy as jnp
from jax.experimental import pallas as pl
from jax.experimental.pallas import tpu as pltpu

BN_EPS = 1e-5   # PyTorch BatchNorm2d default
LANE = 128      # TPU lane width
SUBLANE = 8     # TPU sublane count (f32)


def _round_up(x, m):
    return (x + m - 1) // m * m


def _vmem_limit_bytes():
    """Per-generation scoped-VMEM limit (<= ~48 MiB on v7x, up to ~96 MiB on v5e/v6e)."""
    try:
        phys = pltpu.get_tpu_info().vmem_capacity_bytes
    except Exception:
        phys = 64 * 1024 * 1024          # conservative default: assume the smallest (v7x)
    return int(max(32 * 2**20, min(phys - 16 * 2**20, 96 * 2**20)))


# ---------------------------------------------------------------------------
# shared pass-2 kernel:  o = y * scale + shift   (bf16 staging in, f32 out)
# Broadcasting covers both layouts used below: (tm, Fp)*(1, Fp) and (g, F8, M)*(F8, 1).
# ---------------------------------------------------------------------------
def _bn_apply_kernel(y_ref, scale_ref, shift_ref, o_ref):
    o_ref[...] = (y_ref[...].astype(jnp.float32) * scale_ref[...]
                  + shift_ref[...]).astype(o_ref.dtype)


# ---------------------------------------------------------------------------
# primary path: conv with the im2col gather folded into the kernel
# ---------------------------------------------------------------------------
def _make_fused_conv_kernel(KH, KW, C, OW, T_R, FpL, F8):
    M_TILE = T_R * OW

    def kernel(x_ref, w_ref, y_ref, stats_ref):
        # x_ref:     (1, Hp, Wp, C)    bf16 padded NHWC image of batch n (resident per n)
        # w_ref:     (KH*KW, C, FpL)   bf16 resident weights
        # y_ref:     (1, F8, M_TILE)   bf16 transposed (channel-major) pre-BN activations
        # stats_ref: (1, 2, FpL)       f32  per-tile (sum, sum of squares)
        j = pl.program_id(1)
        row0 = j * T_R                       # first padded input row of this tile (stride 1)
        acc = jnp.zeros((M_TILE, FpL), jnp.float32)
        for kh in range(KH):
            for kw in range(KW):
                # Shifted window read straight from the resident image: no HBM im2col.
                win = x_ref[0, pl.ds(row0 + kh, T_R), pl.ds(kw, OW), :]
                # Cast to f32 first so the (T_R, OW, C) -> (T_R*OW, C) collapse is
                # layout-trivial (this path requires OW % 8 == 0), then back to bf16
                # for the MXU.
                lhs = win.astype(jnp.float32).reshape(M_TILE, C).astype(jnp.bfloat16)
                acc = acc + jnp.dot(lhs, w_ref[kh * KW + kw],
                                    preferred_element_type=jnp.float32)
        # Per-channel partial BN statistics (f32), stored via direct sub-view stores.
        stats_ref[:, 0, :] = jnp.sum(acc, axis=0, keepdims=True)
        stats_ref[:, 1, :] = jnp.sum(acc * acc, axis=0, keepdims=True)
        # Lane-dense transposed store: channels on sublanes (padded to 8, not 128),
        # output pixels on lanes -> no write amplification for small Fout and a cheap
        # leading-axis NCHW permute at the end.
        y_ref[0] = acc.T[:F8, :].astype(y_ref.dtype)

    return kernel


def _fused_path(x, weight, gamma, beta, padding, block_m, vmem_limit):
    N, C, H, W = x.shape
    Fout, _, KH, KW = weight.shape
    OH = H + 2 * padding - KH + 1            # stride == 1 on this path
    OW = W + 2 * padding - KW + 1
    Hp, Wp = H + 2 * padding, W + 2 * padding
    FpL = _round_up(Fout, LANE)              # matmul lane width (VMEM-only padding)
    F8 = _round_up(Fout, SUBLANE)            # stored channel count (HBM padding)

    # ---- output-row tile: largest divisor of OH whose per-step footprint fits VMEM ----
    budget = int(vmem_limit * 0.6)
    img_bytes = Hp * Wp * C * 2
    w_bytes = KH * KW * C * FpL * 2

    def fits(t_r):
        m_tile = t_r * OW
        return (2 * img_bytes + 2 * w_bytes + 2 * F8 * m_tile * 2
                + m_tile * FpL * 4 + (t_r + KH) * Wp * C * 4) <= budget

    divisors = [d for d in range(OH, 0, -1) if OH % d == 0]
    if N == 1 and OH > 1:
        # keep >= 2 grid steps so both v7x TensorCores get work
        divisors = [d for d in divisors if d < OH] or [OH]
    t_r = None
    for d in divisors:
        if d * OW <= max(block_m, OW) and fits(d):
            t_r = d
            break
    if t_r is None:
        return None                          # image too large for VMEM residency -> fallback

    n_rt = OH // t_r
    T1 = N * n_rt
    M_TILE = t_r * OW
    M_total = N * OH * OW

    # ---- XLA-side prep: NCHW -> padded NHWC bf16 image; weights (KH*KW, C, FpL) bf16 ----
    x_nhwc = jnp.transpose(x, (0, 2, 3, 1))
    xp = jnp.pad(x_nhwc, ((0, 0), (padding, padding), (padding, padding), (0, 0)))
    xp = xp.astype(jnp.bfloat16)
    w3 = jnp.transpose(weight, (2, 3, 1, 0)).reshape(KH * KW, C, Fout)
    w3 = jnp.pad(w3, ((0, 0), (0, 0), (0, FpL - Fout))).astype(jnp.bfloat16)

    params = pltpu.CompilerParams(dimension_semantics=("parallel", "parallel"),
                                  vmem_limit_bytes=vmem_limit)
    kernel = _make_fused_conv_kernel(KH, KW, C, OW, t_r, FpL, F8)

    # ---- pass 1: fused im2col + conv matmul + per-tile partial BN statistics ----
    y, stats = pl.pallas_call(
        kernel,
        out_shape=(
            jax.ShapeDtypeStruct((T1, F8, M_TILE), jnp.bfloat16),
            jax.ShapeDtypeStruct((T1, 2, FpL), jnp.float32),
        ),
        grid=(N, n_rt),
        in_specs=[
            pl.BlockSpec((1, Hp, Wp, C), lambda n, j: (n, 0, 0, 0)),        # resident per n
            pl.BlockSpec((KH * KW, C, FpL), lambda n, j: (0, 0, 0)),        # resident
        ],
        out_specs=(
            pl.BlockSpec((1, F8, M_TILE), lambda n, j: (n * n_rt + j, 0, 0)),
            pl.BlockSpec((1, 2, FpL), lambda n, j: (n * n_rt + j, 0, 0)),
        ),
        compiler_params=params,
        cost_estimate=pl.CostEstimate(
            flops=2 * M_total * KH * KW * C * FpL,
            transcendentals=0,
            bytes_accessed=(N * Hp * Wp * C * 2 + KH * KW * C * FpL * 2
                            + T1 * F8 * M_TILE * 2 + T1 * 2 * FpL * 4),
        ),
    )(xp, w3)

    # ---- tiny global stats reduction + BN coefficients (plain JAX, all f32) ----
    total = jnp.sum(stats, axis=0)                               # (2, FpL)
    mean = total[0, :Fout] / M_total
    var = jnp.maximum(total[1, :Fout] / M_total - mean * mean, 0.0)   # biased var
    inv_std = jax.lax.rsqrt(var + BN_EPS)
    scale_v = gamma.astype(jnp.float32) * inv_std
    shift_v = beta.astype(jnp.float32) - mean * scale_v
    scale = jnp.pad(scale_v, (0, F8 - Fout)).reshape(F8, 1)
    shift = jnp.pad(shift_v, (0, F8 - Fout)).reshape(F8, 1)

    # ---- pass 2: y * scale + shift; groups several pass-1 tiles per step (no weights
    #      resident here, so it can afford larger tiles), keeping >= 2 steps for megacore.
    per_tile = F8 * M_TILE * (2 + 4)
    cap_bytes = max(8 * 1024 * 1024, per_tile)
    g_candidates = [d for d in range(T1, 0, -1) if T1 % d == 0 and d * per_tile <= cap_bytes]
    g = next((d for d in g_candidates if T1 // d >= 2), g_candidates[0])

    out = pl.pallas_call(
        _bn_apply_kernel,
        out_shape=jax.ShapeDtypeStruct((T1, F8, M_TILE), jnp.float32),
        grid=(T1 // g,),
        in_specs=[
            pl.BlockSpec((g, F8, M_TILE), lambda i: (i, 0, 0)),
            pl.BlockSpec((F8, 1), lambda i: (0, 0)),             # resident
            pl.BlockSpec((F8, 1), lambda i: (0, 0)),             # resident
        ],
        out_specs=pl.BlockSpec((g, F8, M_TILE), lambda i: (i, 0, 0)),
        compiler_params=pltpu.CompilerParams(dimension_semantics=("parallel",),
                                             vmem_limit_bytes=vmem_limit),
        cost_estimate=pl.CostEstimate(
            flops=2 * T1 * F8 * M_TILE,
            transcendentals=0,
            bytes_accessed=T1 * F8 * M_TILE * (2 + 4) + 2 * F8 * 4,
        ),
    )(y, scale, shift)
    # NOTE: input_output_aliases is intentionally not used: y is a bf16 staging buffer
    # while the module output is f32 (aliasing needs matching dtypes); writing f32
    # directly here avoids a separate upcast pass over the output.

    # channel-major kernel output -> NCHW via a cheap leading-axis permute only.
    out = out.reshape(N, n_rt, F8, t_r, OW)
    out = jnp.transpose(out, (0, 2, 1, 3, 4)).reshape(N, F8, OH, OW)
    return out[:, :Fout]


# ---------------------------------------------------------------------------
# fallback path: materialized im2col GEMM (handles stride > 1 / ragged OW / huge images)
# ---------------------------------------------------------------------------
def _im2col_conv_stats_kernel(p_ref, w_ref, y_ref, stats_ref):
    # p_ref: (tm, K) bf16 patches; w_ref: (K, Fp) bf16 (resident)
    # y_ref: (tm, Fp) bf16 staging; stats_ref: (1, 2, Fp) f32
    y = jnp.dot(p_ref[...], w_ref[...], preferred_element_type=jnp.float32)
    stats_ref[:, 0, :] = jnp.sum(y, axis=0, keepdims=True)
    stats_ref[:, 1, :] = jnp.sum(y * y, axis=0, keepdims=True)
    y_ref[...] = y.astype(y_ref.dtype)


def _im2col_path(x, weight, gamma, beta, stride, padding, block_m, vmem_limit):
    N, C, H, W = x.shape
    Fout, _, KH, KW = weight.shape
    OH = (H + 2 * padding - KH) // stride + 1
    OW = (W + 2 * padding - KW) // stride + 1
    M = N * OH * OW
    K = C * KH * KW
    Fp = _round_up(Fout, LANE)

    # M-tile: start from the (bigger) default and shrink per-generation to fit VMEM.
    tm = _round_up(min(block_m, _round_up(M, SUBLANE)), SUBLANE)
    budget = int(vmem_limit * 0.6)
    while tm > 2 * SUBLANE and (2 * tm * K * 2 + 2 * K * Fp * 2 + 2 * tm * Fp * 2) > budget:
        tm = _round_up(tm // 2, SUBLANE)
    # keep >= 2 grid steps so both v7x TensorCores get work
    if _round_up(M, tm) // tm < 2 and M > SUBLANE:
        tm = _round_up((M + 1) // 2, SUBLANE)
    m_pad = _round_up(M, tm)
    grid_m = m_pad // tm

    # im2col built directly in (N, OH, OW, (kh, kw, c)) order from an NHWC view.
    x_nhwc = jnp.transpose(x, (0, 2, 3, 1))
    xp = jnp.pad(x_nhwc, ((0, 0), (padding, padding), (padding, padding), (0, 0)))
    cols = [xp[:, kh:kh + stride * OH:stride, kw:kw + stride * OW:stride, :]
            for kh in range(KH) for kw in range(KW)]
    patches = jnp.concatenate(cols, axis=-1).reshape(M, K)
    # Zero-padded rows contribute 0 to sum/sumsq and are sliced off, so BN stats
    # (divided by the true M) stay exact.
    patches = jnp.pad(patches, ((0, m_pad - M), (0, 0))).astype(jnp.bfloat16)

    w2 = jnp.transpose(weight, (0, 2, 3, 1)).reshape(Fout, K).T
    w2 = jnp.pad(w2, ((0, 0), (0, Fp - Fout))).astype(jnp.bfloat16)

    params = pltpu.CompilerParams(dimension_semantics=("parallel",),
                                  vmem_limit_bytes=vmem_limit)

    y, stats = pl.pallas_call(
        _im2col_conv_stats_kernel,
        out_shape=(
            jax.ShapeDtypeStruct((m_pad, Fp), jnp.bfloat16),
            jax.ShapeDtypeStruct((grid_m, 2, Fp), jnp.float32),
        ),
        grid=(grid_m,),
        in_specs=[
            pl.BlockSpec((tm, K), lambda i: (i, 0)),
            pl.BlockSpec((K, Fp), lambda i: (0, 0)),             # resident
        ],
        out_specs=(
            pl.BlockSpec((tm, Fp), lambda i: (i, 0)),
            pl.BlockSpec((1, 2, Fp), lambda i: (i, 0, 0)),
        ),
        compiler_params=params,
        cost_estimate=pl.CostEstimate(
            flops=2 * m_pad * K * Fp,
            transcendentals=0,
            bytes_accessed=m_pad * K * 2 + K * Fp * 2 + m_pad * Fp * 2 + grid_m * 2 * Fp * 4,
        ),
    )(patches, w2)

    total = jnp.sum(stats, axis=0)
    mean = total[0, :Fout] / M
    var = jnp.maximum(total[1, :Fout] / M - mean * mean, 0.0)
    inv_std = jax.lax.rsqrt(var + BN_EPS)
    scale_v = gamma.astype(jnp.float32) * inv_std
    shift_v = beta.astype(jnp.float32) - mean * scale_v
    scale = jnp.pad(scale_v, (0, Fp - Fout)).reshape(1, Fp)
    shift = jnp.pad(shift_v, (0, Fp - Fout)).reshape(1, Fp)

    # pass 2 uses a larger tile than pass 1 (it holds no weights).
    tm2 = tm
    for mult in (8, 4, 2):
        if grid_m % mult == 0 and grid_m // mult >= 2:
            tm2 = tm * mult
            break

    out = pl.pallas_call(
        _bn_apply_kernel,
        out_shape=jax.ShapeDtypeStruct((m_pad, Fp), jnp.float32),
        grid=(m_pad // tm2,),
        in_specs=[
            pl.BlockSpec((tm2, Fp), lambda i: (i, 0)),
            pl.BlockSpec((1, Fp), lambda i: (0, 0)),             # resident
            pl.BlockSpec((1, Fp), lambda i: (0, 0)),             # resident
        ],
        out_specs=pl.BlockSpec((tm2, Fp), lambda i: (i, 0)),
        compiler_params=params,
        cost_estimate=pl.CostEstimate(
            flops=2 * m_pad * Fp,
            transcendentals=0,
            bytes_accessed=m_pad * Fp * (2 + 4) + 2 * Fp * 4,
        ),
    )(y, scale, shift)

    # TODO(synk): emit channel-major blocks here too (as the fused path does) so the final
    #             NCHW conversion avoids this minor-dim transpose.
    out = out[:M, :Fout].reshape(N, OH, OW, Fout)
    return jnp.transpose(out, (0, 3, 1, 2))


# ---------------------------------------------------------------------------
# public entry point
# ---------------------------------------------------------------------------
@functools.partial(jax.jit, static_argnames=("stride", "padding", "block_m"))
def conv2d_batchnorm(x, weight, bias, gamma, beta, *, stride, padding, block_m=1024):
    """x: (N, C, H, W); weight: (F, C, KH, KW); bias/gamma/beta: (F,). Returns (N, F, OH, OW) f32.

    block_m is the target number of output pixels per grid step (sweep 512-1024)."""
    N, C, H, W = x.shape
    Fout, Cw, KH, KW = weight.shape
    assert Cw == C
    # Training-mode BatchNorm subtracts the batch mean, so a per-channel constant conv
    # bias cancels exactly in the normalized output; it is intentionally unused.
    del bias

    OW = (W + 2 * padding - KW) // stride + 1
    vmem_limit = _vmem_limit_bytes()

    if stride == 1 and OW % SUBLANE == 0:
        out = _fused_path(x, weight, gamma, beta, padding, block_m, vmem_limit)
        if out is not None:
            return out
    return _im2col_path(x, weight, gamma, beta, stride, padding, block_m, vmem_limit)


def init_params(key, in_channels, n_filters, k_size):
    """Deterministic parameter init mimicking init_weights(..., 'kaiming'):
       conv weight: kaiming-normal (std = sqrt(2/fan_in)), conv bias: 0,
       BN gamma: N(1.0, 0.02), BN beta: 0."""
    kw_key, bn_key = jax.random.split(key)
    fan_in = in_channels * k_size * k_size
    std = (2.0 / fan_in) ** 0.5
    weight = std * jax.random.normal(
        kw_key, (n_filters, in_channels, k_size, k_size), dtype=jnp.float32)
    bias = jnp.zeros((n_filters,), dtype=jnp.float32)
    gamma = 1.0 + 0.02 * jax.random.normal(bn_key, (n_filters,), dtype=jnp.float32)
    beta = jnp.zeros((n_filters,), dtype=jnp.float32)
    return weight, bias, gamma, beta


if __name__ == "__main__":
    key = jax.random.PRNGKey(0)
    xkey, pkey = jax.random.split(key)

    # conv2DBatchNorm(in_channels=4, n_filters=8, k_size=3, stride=1, padding=1, bias=True)
    N, C, H, W = 2, 4, 16, 16
    Fout, K_SIZE, STRIDE, PAD = 8, 3, 1, 1

    x = jax.random.normal(xkey, (N, C, H, W), dtype=jnp.float32)
    weight, bias, gamma, beta = init_params(pkey, C, Fout, K_SIZE)

    y = conv2d_batchnorm(x, weight, bias, gamma, beta, stride=STRIDE, padding=PAD)
    jax.block_until_ready(y)

    assert y.shape == (N, Fout, H, W), y.shape
    assert bool(jnp.isfinite(y).all())

    # Loose numerical check against a plain-JAX reference (conv runs in bf16 in-kernel,
    # so bf16-level tolerance on the O(1)-scale normalized outputs).
    ref = jax.lax.conv_general_dilated(
        x, weight, window_strides=(STRIDE, STRIDE), padding=[(PAD, PAD), (PAD, PAD)],
        dimension_numbers=("NCHW", "OIHW", "NCHW"))
    ref = ref + bias[None, :, None, None]
    mu = ref.mean(axis=(0, 2, 3), keepdims=True)
    vr = ref.var(axis=(0, 2, 3), keepdims=True)
    ref = (ref - mu) * jax.lax.rsqrt(vr + BN_EPS) * gamma[None, :, None, None] \
        + beta[None, :, None, None]
    err = float(jnp.max(jnp.abs(y - ref)))
    assert err < 0.25, f"max abs err vs reference: {err}"

    print("KERNEL_OK")
</pallas_src>

<mosaic_0001>
module attributes {stable_mosaic.version = 11 : i64} {
  func.func @kernel(%arg0: i32, %arg1: i32, %arg2: memref<1x18x18x4xbf16, #tpu.memory_space<vmem>>, %arg3: memref<9x4x128xbf16, #tpu.memory_space<vmem>>, %arg4: memref<1x8x256xbf16, #tpu.memory_space<vmem>>, %arg5: memref<1x2x128xf32, #tpu.memory_space<vmem>>) attributes {dimension_semantics = [#tpu.dimension_semantics<parallel>, #tpu.dimension_semantics<parallel>], iteration_bounds = array<i64: 2, 1>, scalar_prefetch = 0 : i64, scratch_operands = 0 : i64, tpu.core_type = #tpu.core_type<tc>, window_params = [{transform_indices = @transform_0, window_bounds = array<i64: 1, 18, 18, 4>}, {pipeline_mode = #tpu.pipeline_mode<synchronous>, transform_indices = @transform_1, window_bounds = array<i64: 9, 4, 128>}, {transform_indices = @transform_2, window_bounds = array<i64: 1, 8, 256>}, {transform_indices = @transform_3, window_bounds = array<i64: 1, 2, 128>}]} {
    %c16_i32 = arith.constant 16 : i32
    %0 = arith.muli %arg1, %c16_i32 : i32
    %cst = arith.constant 0.000000e+00 : f32
    %1 = vector.broadcast %cst : f32 to vector<256x128xf32>
    %c0_i32 = arith.constant 0 : i32
    %2 = arith.addi %0, %c0_i32 : i32
    %c0 = arith.constant 0 : index
    %3 = arith.index_cast %2 : i32 to index
    %c0_0 = arith.constant 0 : index
    %c0_1 = arith.constant 0 : index
    %4 = vector.load %arg2[%c0, %3, %c0_0, %c0_1] : memref<1x18x18x4xbf16, #tpu.memory_space<vmem>>, vector<1x16x16x4xbf16>
    %5 = vector.shape_cast %4 : vector<1x16x16x4xbf16> to vector<16x16x4xbf16>
    %6 = arith.extf %5 : vector<16x16x4xbf16> to vector<16x16x4xf32>
    %7 = vector.shape_cast %6 : vector<16x16x4xf32> to vector<256x4xf32>
    %8 = arith.truncf %7 : vector<256x4xf32> to vector<256x4xbf16>
    %c0_2 = arith.constant 0 : index
    %c0_3 = arith.constant 0 : index
    %c0_4 = arith.constant 0 : index
    %9 = vector.load %arg3[%c0_2, %c0_3, %c0_4] : memref<9x4x128xbf16, #tpu.memory_space<vmem>>, vector<1x4x128xbf16>
    %10 = vector.shape_cast %9 : vector<1x4x128xbf16> to vector<4x128xbf16>
    %cst_5 = arith.constant dense<0.000000e+00> : vector<256x128xf32>
    %11 = tpu.matmul %8, %10, %cst_5 {dimension_numbers = #tpu.dot_dimension_numbers<[1], [0], [0], [1], [0, 0, 1, 1], [], []>} : vector<256x4xbf16>, vector<4x128xbf16>, vector<256x128xf32> -> vector<256x128xf32>
    %12 = arith.addf %1, %11 : vector<256x128xf32>
    %c0_i32_6 = arith.constant 0 : i32
    %13 = arith.addi %0, %c0_i32_6 : i32
    %c0_7 = arith.constant 0 : index
    %14 = arith.index_cast %13 : i32 to index
    %c1 = arith.constant 1 : index
    %c0_8 = arith.constant 0 : index
    %15 = vector.load %arg2[%c0_7, %14, %c1, %c0_8] : memref<1x18x18x4xbf16, #tpu.memory_space<vmem>>, vector<1x16x16x4xbf16>
    %16 = vector.shape_cast %15 : vector<1x16x16x4xbf16> to vector<16x16x4xbf16>
    %17 = arith.extf %16 : vector<16x16x4xbf16> to vector<16x16x4xf32>
    %18 = vector.shape_cast %17 : vector<16x16x4xf32> to vector<256x4xf32>
    %19 = arith.truncf %18 : vector<256x4xf32> to vector<256x4xbf16>
    %c1_9 = arith.constant 1 : index
    %c0_10 = arith.constant 0 : index
    %c0_11 = arith.constant 0 : index
    %20 = vector.load %arg3[%c1_9, %c0_10, %c0_11] : memref<9x4x128xbf16, #tpu.memory_space<vmem>>, vector<1x4x128xbf16>
    %21 = vector.shape_cast %20 : vector<1x4x128xbf16> to vector<4x128xbf16>
    %cst_12 = arith.constant dense<0.000000e+00> : vector<256x128xf32>
    %22 = tpu.matmul %19, %21, %cst_12 {dimension_numbers = #tpu.dot_dimension_numbers<[1], [0], [0], [1], [0, 0, 1, 1], [], []>} : vector<256x4xbf16>, vector<4x128xbf16>, vector<256x128xf32> -> vector<256x128xf32>
    %23 = arith.addf %12, %22 : vector<256x128xf32>
    %c0_i32_13 = arith.constant 0 : i32
    %24 = arith.addi %0, %c0_i32_13 : i32
    %c0_14 = arith.constant 0 : index
    %25 = arith.index_cast %24 : i32 to index
    %c2 = arith.constant 2 : index
    %c0_15 = arith.constant 0 : index
    %26 = vector.load %arg2[%c0_14, %25, %c2, %c0_15] : memref<1x18x18x4xbf16, #tpu.memory_space<vmem>>, vector<1x16x16x4xbf16>
    %27 = vector.shape_cast %26 : vector<1x16x16x4xbf16> to vector<16x16x4xbf16>
    %28 = arith.extf %27 : vector<16x16x4xbf16> to vector<16x16x4xf32>
    %29 = vector.shape_cast %28 : vector<16x16x4xf32> to vector<256x4xf32>
    %30 = arith.truncf %29 : vector<256x4xf32> to vector<256x4xbf16>
    %c2_16 = arith.constant 2 : index
    %c0_17 = arith.constant 0 : index
    %c0_18 = arith.constant 0 : index
    %31 = vector.load %arg3[%c2_16, %c0_17, %c0_18] : memref<9x4x128xbf16, #tpu.memory_space<vmem>>, vector<1x4x128xbf16>
    %32 = vector.shape_cast %31 : vector<1x4x128xbf16> to vector<4x128xbf16>
    %cst_19 = arith.constant dense<0.000000e+00> : vector<256x128xf32>
    %33 = tpu.matmul %30, %32, %cst_19 {dimension_numbers = #tpu.dot_dimension_numbers<[1], [0], [0], [1], [0, 0, 1, 1], [], []>} : vector<256x4xbf16>, vector<4x128xbf16>, vector<256x128xf32> -> vector<256x128xf32>
    %34 = arith.addf %23, %33 : vector<256x128xf32>
    %c1_i32 = arith.constant 1 : i32
    %35 = arith.addi %0, %c1_i32 : i32
    %c0_20 = arith.constant 0 : index
    %36 = arith.index_cast %35 : i32 to index
    %c0_21 = arith.constant 0 : index
    %c0_22 = arith.constant 0 : index
    %37 = vector.load %arg2[%c0_20, %36, %c0_21, %c0_22] : memref<1x18x18x4xbf16, #tpu.memory_space<vmem>>, vector<1x16x16x4xbf16>
    %38 = vector.shape_cast %37 : vector<1x16x16x4xbf16> to vector<16x16x4xbf16>
    %39 = arith.extf %38 : vector<16x16x4xbf16> to vector<16x16x4xf32>
    %40 = vector.shape_cast %39 : vector<16x16x4xf32> to vector<256x4xf32>
    %41 = arith.truncf %40 : vector<256x4xf32> to vector<256x4xbf16>
    %c3 = arith.constant 3 : index
    %c0_23 = arith.constant 0 : index
    %c0_24 = arith.constant 0 : index
    %42 = vector.load %arg3[%c3, %c0_23, %c0_24] : memref<9x4x128xbf16, #tpu.memory_space<vmem>>, vector<1x4x128xbf16>
    %43 = vector.shape_cast %42 : vector<1x4x128xbf16> to vector<4x128xbf16>
    %cst_25 = arith.constant dense<0.000000e+00> : vector<256x128xf32>
    %44 = tpu.matmul %41, %43, %cst_25 {dimension_numbers = #tpu.dot_dimension_numbers<[1], [0], [0], [1], [0, 0, 1, 1], [], []>} : vector<256x4xbf16>, vector<4x128xbf16>, vector<256x128xf32> -> vector<256x128xf32>
    %45 = arith.addf %34, %44 : vector<256x128xf32>
    %c1_i32_26 = arith.constant 1 : i32
    %46 = arith.addi %0, %c1_i32_26 : i32
    %c0_27 = arith.constant 0 : index
    %47 = arith.index_cast %46 : i32 to index
    %c1_28 = arith.constant 1 : index
    %c0_29 = arith.constant 0 : index
    %48 = vector.load %arg2[%c0_27, %47, %c1_28, %c0_29] : memref<1x18x18x4xbf16, #tpu.memory_space<vmem>>, vector<1x16x16x4xbf16>
    %49 = vector.shape_cast %48 : vector<1x16x16x4xbf16> to vector<16x16x4xbf16>
    %50 = arith.extf %49 : vector<16x16x4xbf16> to vector<16x16x4xf32>
    %51 = vector.shape_cast %50 : vector<16x16x4xf32> to vector<256x4xf32>
    %52 = arith.truncf %51 : vector<256x4xf32> to vector<256x4xbf16>
    %c4 = arith.constant 4 : index
    %c0_30 = arith.constant 0 : index
    %c0_31 = arith.constant 0 : index
    %53 = vector.load %arg3[%c4, %c0_30, %c0_31] : memref<9x4x128xbf16, #tpu.memory_space<vmem>>, vector<1x4x128xbf16>
    %54 = vector.shape_cast %53 : vector<1x4x128xbf16> to vector<4x128xbf16>
    %cst_32 = arith.constant dense<0.000000e+00> : vector<256x128xf32>
    %55 = tpu.matmul %52, %54, %cst_32 {dimension_numbers = #tpu.dot_dimension_numbers<[1], [0], [0], [1], [0, 0, 1, 1], [], []>} : vector<256x4xbf16>, vector<4x128xbf16>, vector<256x128xf32> -> vector<256x128xf32>
    %56 = arith.addf %45, %55 : vector<256x128xf32>
    %c1_i32_33 = arith.constant 1 : i32
    %57 = arith.addi %0, %c1_i32_33 : i32
    %c0_34 = arith.constant 0 : index
    %58 = arith.index_cast %57 : i32 to index
    %c2_35 = arith.constant 2 : index
    %c0_36 = arith.constant 0 : index
    %59 = vector.load %arg2[%c0_34, %58, %c2_35, %c0_36] : memref<1x18x18x4xbf16, #tpu.memory_space<vmem>>, vector<1x16x16x4xbf16>
    %60 = vector.shape_cast %59 : vector<1x16x16x4xbf16> to vector<16x16x4xbf16>
    %61 = arith.extf %60 : vector<16x16x4xbf16> to vector<16x16x4xf32>
    %62 = vector.shape_cast %61 : vector<16x16x4xf32> to vector<256x4xf32>
    %63 = arith.truncf %62 : vector<256x4xf32> to vector<256x4xbf16>
    %c5 = arith.constant 5 : index
    %c0_37 = arith.constant 0 : index
    %c0_38 = arith.constant 0 : index
    %64 = vector.load %arg3[%c5, %c0_37, %c0_38] : memref<9x4x128xbf16, #tpu.memory_space<vmem>>, vector<1x4x128xbf16>
    %65 = vector.shape_cast %64 : vector<1x4x128xbf16> to vector<4x128xbf16>
    %cst_39 = arith.constant dense<0.000000e+00> : vector<256x128xf32>
    %66 = tpu.matmul %63, %65, %cst_39 {dimension_numbers = #tpu.dot_dimension_numbers<[1], [0], [0], [1], [0, 0, 1, 1], [], []>} : vector<256x4xbf16>, vector<4x128xbf16>, vector<256x128xf32> -> vector<256x128xf32>
    %67 = arith.addf %56, %66 : vector<256x128xf32>
    %c2_i32 = arith.constant 2 : i32
    %68 = arith.addi %0, %c2_i32 : i32
    %c0_40 = arith.constant 0 : index
    %69 = arith.index_cast %68 : i32 to index
    %c0_41 = arith.constant 0 : index
    %c0_42 = arith.constant 0 : index
    %70 = vector.load %arg2[%c0_40, %69, %c0_41, %c0_42] : memref<1x18x18x4xbf16, #tpu.memory_space<vmem>>, vector<1x16x16x4xbf16>
    %71 = vector.shape_cast %70 : vector<1x16x16x4xbf16> to vector<16x16x4xbf16>
    %72 = arith.extf %71 : vector<16x16x4xbf16> to vector<16x16x4xf32>
    %73 = vector.shape_cast %72 : vector<16x16x4xf32> to vector<256x4xf32>
    %74 = arith.truncf %73 : vector<256x4xf32> to vector<256x4xbf16>
    %c6 = arith.constant 6 : index
    %c0_43 = arith.constant 0 : index
    %c0_44 = arith.constant 0 : index
    %75 = vector.load %arg3[%c6, %c0_43, %c0_44] : memref<9x4x128xbf16, #tpu.memory_space<vmem>>, vector<1x4x128xbf16>
    %76 = vector.shape_cast %75 : vector<1x4x128xbf16> to vector<4x128xbf16>
    %cst_45 = arith.constant dense<0.000000e+00> : vector<256x128xf32>
    %77 = tpu.matmul %74, %76, %cst_45 {dimension_numbers = #tpu.dot_dimension_numbers<[1], [0], [0], [1], [0, 0, 1, 1], [], []>} : vector<256x4xbf16>, vector<4x128xbf16>, vector<256x128xf32> -> vector<256x128xf32>
    %78 = arith.addf %67, %77 : vector<256x128xf32>
    %c2_i32_46 = arith.constant 2 : i32
    %79 = arith.addi %0, %c2_i32_46 : i32
    %c0_47 = arith.constant 0 : index
    %80 = arith.index_cast %79 : i32 to index
    %c1_48 = arith.constant 1 : index
    %c0_49 = arith.constant 0 : index
    %81 = vector.load %arg2[%c0_47, %80, %c1_48, %c0_49] : memref<1x18x18x4xbf16, #tpu.memory_space<vmem>>, vector<1x16x16x4xbf16>
    %82 = vector.shape_cast %81 : vector<1x16x16x4xbf16> to vector<16x16x4xbf16>
    %83 = arith.extf %82 : vector<16x16x4xbf16> to vector<16x16x4xf32>
    %84 = vector.shape_cast %83 : vector<16x16x4xf32> to vector<256x4xf32>
    %85 = arith.truncf %84 : vector<256x4xf32> to vector<256x4xbf16>
    %c7 = arith.constant 7 : index
    %c0_50 = arith.constant 0 : index
    %c0_51 = arith.constant 0 : index
    %86 = vector.load %arg3[%c7, %c0_50, %c0_51] : memref<9x4x128xbf16, #tpu.memory_space<vmem>>, vector<1x4x128xbf16>
    %87 = vector.shape_cast %86 : vector<1x4x128xbf16> to vector<4x128xbf16>
    %cst_52 = arith.constant dense<0.000000e+00> : vector<256x128xf32>
    %88 = tpu.matmul %85, %87, %cst_52 {dimension_numbers = #tpu.dot_dimension_numbers<[1], [0], [0], [1], [0, 0, 1, 1], [], []>} : vector<256x4xbf16>, vector<4x128xbf16>, vector<256x128xf32> -> vector<256x128xf32>
    %89 = arith.addf %78, %88 : vector<256x128xf32>
    %c2_i32_53 = arith.constant 2 : i32
    %90 = arith.addi %0, %c2_i32_53 : i32
    %c0_54 = arith.constant 0 : index
    %91 = arith.index_cast %90 : i32 to index
    %c2_55 = arith.constant 2 : index
    %c0_56 = arith.constant 0 : index
    %92 = vector.load %arg2[%c0_54, %91, %c2_55, %c0_56] : memref<1x18x18x4xbf16, #tpu.memory_space<vmem>>, vector<1x16x16x4xbf16>
    %93 = vector.shape_cast %92 : vector<1x16x16x4xbf16> to vector<16x16x4xbf16>
    %94 = arith.extf %93 : vector<16x16x4xbf16> to vector<16x16x4xf32>
    %95 = vector.shape_cast %94 : vector<16x16x4xf32> to vector<256x4xf32>
    %96 = arith.truncf %95 : vector<256x4xf32> to vector<256x4xbf16>
    %c8 = arith.constant 8 : index
    %c0_57 = arith.constant 0 : index
    %c0_58 = arith.constant 0 : index
    %97 = vector.load %arg3[%c8, %c0_57, %c0_58] : memref<9x4x128xbf16, #tpu.memory_space<vmem>>, vector<1x4x128xbf16>
    %98 = vector.shape_cast %97 : vector<1x4x128xbf16> to vector<4x128xbf16>
    %cst_59 = arith.constant dense<0.000000e+00> : vector<256x128xf32>
    %99 = tpu.matmul %96, %98, %cst_59 {dimension_numbers = #tpu.dot_dimension_numbers<[1], [0], [0], [1], [0, 0, 1, 1], [], []>} : vector<256x4xbf16>, vector<4x128xbf16>, vector<256x128xf32> -> vector<256x128xf32>
    %100 = arith.addf %89, %99 : vector<256x128xf32>
    %cst_60 = arith.constant dense<0.000000e+00> : vector<128xf32>
    %101 = vector.multi_reduction <add>, %100, %cst_60 [0] : vector<256x128xf32> to vector<128xf32>
    %102 = vector.shape_cast %101 : vector<128xf32> to vector<1x128xf32>
    %c0_61 = arith.constant 0 : index
    %c0_62 = arith.constant 0 : index
    %c0_63 = arith.constant 0 : index
    %103 = vector.load %arg5[%c0_61, %c0_62, %c0_63] : memref<1x2x128xf32, #tpu.memory_space<vmem>>, vector<1x1x128xf32>
    %104 = vector.shape_cast %103 : vector<1x1x128xf32> to vector<1x128xf32>
    %105 = vector.shape_cast %102 : vector<1x128xf32> to vector<1x1x128xf32>
    tpu.vector_store %arg5[%c0_61, %c0_62, %c0_63], %105 {strides = array<i32>} : memref<1x2x128xf32, #tpu.memory_space<vmem>>, vector<1x1x128xf32>,
    %106 = arith.mulf %100, %100 : vector<256x128xf32>
    %cst_64 = arith.constant dense<0.000000e+00> : vector<128xf32>
    %107 = vector.multi_reduction <add>, %106, %cst_64 [0] : vector<256x128xf32> to vector<128xf32>
    %108 = vector.shape_cast %107 : vector<128xf32> to vector<1x128xf32>
    %c0_65 = arith.constant 0 : index
    %c1_66 = arith.constant 1 : index
    %c0_67 = arith.constant 0 : index
    %109 = vector.load %arg5[%c0_65, %c1_66, %c0_67] : memref<1x2x128xf32, #tpu.memory_space<vmem>>, vector<1x1x128xf32>
    %110 = vector.shape_cast %109 : vector<1x1x128xf32> to vector<1x128xf32>
    %111 = vector.shape_cast %108 : vector<1x128xf32> to vector<1x1x128xf32>
    tpu.vector_store %arg5[%c0_65, %c1_66, %c0_67], %111 {strides = array<i32>} : memref<1x2x128xf32, #tpu.memory_space<vmem>>, vector<1x1x128xf32>,
    %112 = tpu.transpose %100, [1, 0] : vector<256x128xf32> -> vector<128x256xf32>
    %113 = vector.extract_strided_slice %112 {offsets = [0, 0], sizes = [8, 256], strides = [1, 1]} : vector<128x256xf32> to vector<8x256xf32>
    %114 = arith.truncf %113 : vector<8x256xf32> to vector<8x256xbf16>
    %c0_68 = arith.constant 0 : index
    %c0_69 = arith.constant 0 : index
    %c0_70 = arith.constant 0 : index
    %115 = vector.load %arg4[%c0_68, %c0_69, %c0_70] : memref<1x8x256xbf16, #tpu.memory_space<vmem>>, vector<1x8x256xbf16>
    %116 = vector.shape_cast %115 : vector<1x8x256xbf16> to vector<8x256xbf16>
    %117 = vector.shape_cast %114 : vector<8x256xbf16> to vector<1x8x256xbf16>
    tpu.vector_store %arg4[%c0_68, %c0_69, %c0_70], %117 {strides = array<i32>} : memref<1x8x256xbf16, #tpu.memory_space<vmem>>, vector<1x8x256xbf16>,
    return
  }
  func.func @transform_0(%arg0: i32, %arg1: i32) -> (i32, i32, i32, i32) {
    %c0_i32 = arith.constant 0 : i32
    %c0_i32_0 = arith.constant 0 : i32
    %c0_i32_1 = arith.constant 0 : i32
    %c0_i32_2 = arith.constant 0 : i32
    return %arg0, %c0_i32, %c0_i32_0, %c0_i32_1 : i32, i32, i32, i32
  }
  func.func @transform_1(%arg0: i32, %arg1: i32) -> (i32, i32, i32) {
    %c0_i32 = arith.constant 0 : i32
    %c0_i32_0 = arith.constant 0 : i32
    %c0_i32_1 = arith.constant 0 : i32
    %c0_i32_2 = arith.constant 0 : i32
    return %c0_i32, %c0_i32_0, %c0_i32_1 : i32, i32, i32
  }
  func.func @transform_2(%arg0: i32, %arg1: i32) -> (i32, i32, i32) {
    %c1_i32 = arith.constant 1 : i32
    %0 = arith.muli %arg0, %c1_i32 : i32
    %1 = arith.addi %0, %arg1 : i32
    %c0_i32 = arith.constant 0 : i32
    %c0_i32_0 = arith.constant 0 : i32
    %c0_i32_1 = arith.constant 0 : i32
    return %1, %c0_i32, %c0_i32_0 : i32, i32, i32
  }
  func.func @transform_3(%arg0: i32, %arg1: i32) -> (i32, i32, i32) {
    %c1_i32 = arith.constant 1 : i32
    %0 = arith.muli %arg0, %c1_i32 : i32
    %1 = arith.addi %0, %arg1 : i32
    %c0_i32 = arith.constant 0 : i32
    %c0_i32_0 = arith.constant 0 : i32
    %c0_i32_1 = arith.constant 0 : i32
    return %1, %c0_i32, %c0_i32_0 : i32, i32, i32
  }
}

module attributes {stable_mosaic.version = 11 : i64} {
  func.func @_bn_apply_kernel(%arg0: i32, %arg1: memref<1x8x256xbf16, #tpu.memory_space<vmem>>, %arg2: memref<8x1xf32, #tpu.memory_space<vmem>>, %arg3: memref<8x1xf32, #tpu.memory_space<vmem>>, %arg4: memref<1x8x256xf32, #tpu.memory_space<vmem>>) attributes {dimension_semantics = [#tpu.dimension_semantics<parallel>], iteration_bounds = array<i64: 2>, scalar_prefetch = 0 : i64, scratch_operands = 0 : i64, tpu.core_type = #tpu.core_type<tc>, window_params = [{transform_indices = @transform_0, window_bounds = array<i64: 1, 8, 256>}, {pipeline_mode = #tpu.pipeline_mode<synchronous>, transform_indices = @transform_1, window_bounds = array<i64: 8, 1>}, {pipeline_mode = #tpu.pipeline_mode<synchronous>, transform_indices = @transform_2, window_bounds = array<i64: 8, 1>}, {transform_indices = @transform_3, window_bounds = array<i64: 1, 8, 256>}]} {
    %c0 = arith.constant 0 : index
    %c0_0 = arith.constant 0 : index
    %c0_1 = arith.constant 0 : index
    %0 = vector.load %arg1[%c0, %c0_0, %c0_1] : memref<1x8x256xbf16, #tpu.memory_space<vmem>>, vector<1x8x256xbf16>
    %1 = arith.extf %0 : vector<1x8x256xbf16> to vector<1x8x256xf32>
    %c0_2 = arith.constant 0 : index
    %c0_3 = arith.constant 0 : index
    %2 = vector.load %arg2[%c0_2, %c0_3] : memref<8x1xf32, #tpu.memory_space<vmem>>, vector<8x1xf32>
    %3 = vector.shape_cast %2 : vector<8x1xf32> to vector<1x8x1xf32>
    %4 = vector.broadcast %3 : vector<1x8x1xf32> to vector<1x8x256xf32>
    %5 = arith.mulf %1, %4 : vector<1x8x256xf32>
    %c0_4 = arith.constant 0 : index
    %c0_5 = arith.constant 0 : index
    %6 = vector.load %arg3[%c0_4, %c0_5] : memref<8x1xf32, #tpu.memory_space<vmem>>, vector<8x1xf32>
    %7 = vector.shape_cast %6 : vector<8x1xf32> to vector<1x8x1xf32>
    %8 = vector.broadcast %7 : vector<1x8x1xf32> to vector<1x8x256xf32>
    %9 = arith.addf %5, %8 : vector<1x8x256xf32>
    %c0_6 = arith.constant 0 : index
    %c0_7 = arith.constant 0 : index
    %c0_8 = arith.constant 0 : index
    %10 = vector.load %arg4[%c0_6, %c0_7, %c0_8] : memref<1x8x256xf32, #tpu.memory_space<vmem>>, vector<1x8x256xf32>
    tpu.vector_store %arg4[%c0_6, %c0_7, %c0_8], %9 {strides = array<i32>} : memref<1x8x256xf32, #tpu.memory_space<vmem>>, vector<1x8x256xf32>,
    return
  }
  func.func @transform_0(%arg0: i32) -> (i32, i32, i32) {
    %c0_i32 = arith.constant 0 : i32
    %c0_i32_0 = arith.constant 0 : i32
    %c0_i32_1 = arith.constant 0 : i32
    return %arg0, %c0_i32, %c0_i32_0 : i32, i32, i32
  }
  func.func @transform_1(%arg0: i32) -> (i32, i32) {
    %c0_i32 = arith.constant 0 : i32
    %c0_i32_0 = arith.constant 0 : i32
    %c0_i32_1 = arith.constant 0 : i32
    return %c0_i32, %c0_i32_0 : i32, i32
  }
  func.func @transform_2(%arg0: i32) -> (i32, i32) {
    %c0_i32 = arith.constant 0 : i32
    %c0_i32_0 = arith.constant 0 : i32
    %c0_i32_1 = arith.constant 0 : i32
    return %c0_i32, %c0_i32_0 : i32, i32
  }
  func.func @transform_3(%arg0: i32) -> (i32, i32, i32) {
    %c0_i32 = arith.constant 0 : i32
    %c0_i32_0 = arith.constant 0 : i32
    %c0_i32_1 = arith.constant 0 : i32
    return %arg0, %c0_i32, %c0_i32_0 : i32, i32, i32
  }
}

</mosaic_0001>

<llo_original>
// kernel: conv2d_batchnorm.3
$region0: #{conv2d_batchnorm.3}
  #allocation0 [shape = 'u32[]', space=smem, size = 0x4, offset = 0x4, fixed_abs, tag = 'smem constant byte address 0x4 - core index']
  #allocation1 [shape = 'u32[144,128]{1,0:T(1,128)}', space=vmem, size = 0x12000, scoped, tag = 'internal scratch']
  %s0 = inlined_call_operand.vmem [shape: bf16[2,8,256], index: 0, kind: input, shape index: {}]
  %s1 = inlined_call_operand.vmem [shape: f32[8,1], index: 1, kind: input, shape index: {}]
  %s2 = inlined_call_operand.vmem [shape: f32[8,1], index: 2, kind: input, shape index: {}]
  %s3 = inlined_call_operand.vmem [shape: f32[2,8,256], index: 3, kind: output, shape index: {}]
  %s4 = sld [smem:[#allocation0]]
  $region45: #{conv2d_batchnorm.3} parent=0
    _
  %s6 = ssub.s32 1, %s4
  %s7 = scalar_select 0, %s6, %s4
  loop: start=0, step=1, limit=4
  $region2: #{conv2d_batchnorm.3} parent=0 // loop_pre_header
    _
  $region3: #{conv2d_batchnorm.3} parent=0 // loop_header
    %s9 = sphi 0, %s13
    %p10 = scmp.ge.s32.totalorder %s9, 4
    %s19 = sphi 0, %s21
    %s22 = sphi 0, %s19
    %s23 = sphi 0, %s22
    %s39 = sphi 0, %s23
    %s43 = sphi 0, %s43
    %s45 = sphi 0, %s43
    %s46 = sphi 0, %s45
    %s60 = sphi 0, %s46
    %s64 = sphi 0, %s64
    %s66 = sphi 0, %s64
    %s67 = sphi 0, %s66
    %s81 = sphi 0, %s67
    %s87 = sphi 0, %s89
    %s90 = sphi 0, %s87
    %s91 = sphi 0, %s90
    %s107 = sphi 0, %s91
  $region4: #{conv2d_batchnorm.3} parent=0 // loop_header_branch
    %12 = sbr.rel (%p10) target = $region8
  $region5: #{conv2d_batchnorm.3} parent=0 // loop_body
    %s14 = ssub.s32 %s9, 1
    %s15 = ssub.s32 %s9, 2
    %s16 = sadd.s32 %s9, 1
    %s17 = ssub.s32 %s9, %s16
    %p18 = scmp.eq.s32.totalorder %s17, 0
    %s20 = sadd.s32 %s19, 1
    %s21 = scalar_select %p18, %s19, %s20
    %p24 = pneg %p18
    %p25 = scmp.eq.s32.totalorder %s9, 1
    %p26 = por %p24, %p25
    %p27 = scmp.ne.s32.totalorder %s19, %s22
    %p28 = scmp.eq.s32.totalorder %s9, 0
    %p29 = por %p27, %p28
    %p30 = scmp.ne.s32.totalorder %s19, %s22
    %p31 = scmp.eq.s32.totalorder %s14, 1
    %p32 = por %p30, %p31
    %p33 = scmp.ne.s32.totalorder %s22, %s23
    %p34 = scmp.eq.s32.totalorder %s14, 0
    %p35 = por %p33, %p34
    %p36 = scmp.ne.s32.totalorder %s22, %s23
    %p37 = scmp.eq.s32.totalorder %s15, 1
    %p38 = por %p36, %p37
    %p40 = scmp.ne.s32.totalorder %s23, %s39
    %p41 = scmp.eq.s32.totalorder %s15, 0
    %p42 = por %p40, %p41
    %s44 = sadd.s32 %s43, 1
    %p47 = scmp.eq.s32.totalorder %s9, 1
    %p48 = scmp.ne.s32.totalorder %s43, %s45
    %p49 = scmp.eq.s32.totalorder %s9, 0
    %p50 = por %p48, %p49
    %p51 = scmp.ne.s32.totalorder %s43, %s45
    %p52 = scmp.eq.s32.totalorder %s14, 1
    %p53 = por %p51, %p52
    %p54 = scmp.ne.s32.totalorder %s45, %s46
    %p55 = scmp.eq.s32.totalorder %s14, 0
    %p56 = por %p54, %p55
    %p57 = scmp.ne.s32.totalorder %s45, %s46
    %p58 = scmp.eq.s32.totalorder %s15, 1
    %p59 = por %p57, %p58
    %p61 = scmp.ne.s32.totalorder %s46, %s60
    %p62 = scmp.eq.s32.totalorder %s15, 0
    %p63 = por %p61, %p62
    %s65 = sadd.s32 %s64, 1
    %p68 = scmp.eq.s32.totalorder %s9, 1
    %p69 = scmp.ne.s32.totalorder %s64, %s66
    %p70 = scmp.eq.s32.totalorder %s9, 0
    %p71 = por %p69, %p70
    %p72 = scmp.ne.s32.totalorder %s64, %s66
    %p73 = scmp.eq.s32.totalorder %s14, 1
    %p74 = por %p72, %p73
    %p75 = scmp.ne.s32.totalorder %s66, %s67
    %p76 = scmp.eq.s32.totalorder %s14, 0
    %p77 = por %p75, %p76
    %p78 = scmp.ne.s32.totalorder %s66, %s67
    %p79 = scmp.eq.s32.totalorder %s15, 1
    %p80 = por %p78, %p79
    %p82 = scmp.ne.s32.totalorder %s67, %s81
    %p83 = scmp.eq.s32.totalorder %s15, 0
    %p84 = por %p82, %p83
    %s85 = ssub.s32 %s9, %s16
    %p86 = scmp.eq.s32.totalorder %s85, 0
    %s88 = sadd.s32 %s87, 1
    %s89 = scalar_select %p86, %s87, %s88
    %p92 = pneg %p86
    %p93 = scmp.eq.s32.totalorder %s9, 1
    %p94 = por %p92, %p93
    %p95 = scmp.ne.s32.totalorder %s87, %s90
    %p96 = scmp.eq.s32.totalorder %s9, 0
    %p97 = por %p95, %p96
    %p98 = scmp.ne.s32.totalorder %s87, %s90
    %p99 = scmp.eq.s32.totalorder %s14, 1
    %p100 = por %p98, %p99
    %p101 = scmp.ne.s32.totalorder %s90, %s91
    %p102 = scmp.eq.s32.totalorder %s14, 0
    %p103 = por %p101, %p102
    %p104 = scmp.ne.s32.totalorder %s90, %s91
    %p105 = scmp.eq.s32.totalorder %s15, 1
    %p106 = por %p104, %p105
    %p108 = scmp.ne.s32.totalorder %s91, %s107
    %p109 = scmp.eq.s32.totalorder %s15, 0
    %p110 = por %p108, %p109
    %p111 = scmp.le.s32.totalorder 1, %s9
    %p112 = scmp.lt.s32.totalorder %s9, 3
    %p113 = pnand %p111, %p112
    %p114 = pneg %p113
    // Predicated region
    $region9: #{conv2d_batchnorm.3} parent=5 // pred_check
      _
    $region10: #{conv2d_batchnorm.3} parent=5 // pred_check_branch
      %116 = sbr.rel (%p113) target = $region12
    $region11: #{conv2d_batchnorm.3} parent=5 // pred_region
      %s117 = ssub.s32 %s9, 1
      // Predicated region
      $region13: #{conv2d_batchnorm.3} parent=11 // pred_check
        %p118 = pneg %p56
      $region14: #{conv2d_batchnorm.3} parent=11 // pred_check_branch
        %120 = sbr.rel (%p118) target = $region16
      $region15: #{conv2d_batchnorm.3} parent=11 // pred_region
        _
      $region16: #{conv2d_batchnorm.3} parent=11 // pred_fallthru
        _
      // Predicated region
      $region17: #{conv2d_batchnorm.3} parent=11 // pred_check
        %p121 = pneg %p77
      $region18: #{conv2d_batchnorm.3} parent=11 // pred_check_branch
        %123 = sbr.rel (%p121) target = $region20
      $region19: #{conv2d_batchnorm.3} parent=11 // pred_region
        _
      $region20: #{conv2d_batchnorm.3} parent=11 // pred_fallthru
        _
    $region12: #{conv2d_batchnorm.3} parent=5 // pred_fallthru
      _
    %p124 = scmp.lt.s32.totalorder %s9, 2
    // Predicated region
    $region21: #{conv2d_batchnorm.3} parent=5 // pred_check
      %p125 = pneg %p124
    $region22: #{conv2d_batchnorm.3} parent=5 // pred_check_branch
      %127 = sbr.rel (%p125) target = $region24
    $region23: #{conv2d_batchnorm.3} parent=5 // pred_region
      // Predicated region
      $region25: #{conv2d_batchnorm.3} parent=23 // pred_check
        %p128 = pneg %p29
      $region26: #{conv2d_batchnorm.3} parent=23 // pred_check_branch
        %130 = sbr.rel (%p128) target = $region28
      $region27: #{conv2d_batchnorm.3} parent=23 // pred_region
        %p131 = scmp.lt.s32.totalorder %s9, 1
        %s132 = scalar_select %p131, %s9, 1
        %s133 = smul.addr %s132, 2
        %s134 = smul.addr %s133, 4
        %s135 = scalar_lea.vmem %s0, %s134
      $region28: #{conv2d_batchnorm.3} parent=23 // pred_fallthru
        _
    $region24: #{conv2d_batchnorm.3} parent=5 // pred_fallthru
      _
    %p136 = scmp.le.s32.totalorder 1, %s9
    %p137 = scmp.lt.s32.totalorder %s9, 3
    %p138 = pnand %p136, %p137
    %p139 = pneg %p138
    // Predicated region
    $region29: #{conv2d_batchnorm.3} parent=5 // pred_check
      _
    $region30: #{conv2d_batchnorm.3} parent=5 // pred_check_branch
      %141 = sbr.rel (%p138) target = $region32
    $region31: #{conv2d_batchnorm.3} parent=5 // pred_region
      %s142 = ssub.s32 %s9, 1
      %p143 = scmp.lt.s32.totalorder %s14, 1
      %s144 = scalar_select %p143, %s14, 1
      %s145 = smul.addr %s144, 2
      %s146 = smul.addr %s145, 4
      %s147 = scalar_lea.vmem %s0, %s146
      %p148 = pneg %p35
      %p149 = pneg %p32
      %p150 = pneg %p56
      %p151 = pneg %p53
      %p152 = pneg %p77
      %p153 = pneg %p74
      %p154 = pneg %p103
      %p155 = pneg %p100
      %p156 = scmp.lt.s32.totalorder %s14, 1
      %s157 = scalar_select %p156, %s14, 1
      %s158 = smul.addr %s157, 2
      %s159 = smul.addr %s158, 8
      %s160 = scalar_lea.vmem %s3, %s159
      %p161 = scmp.lt.s32.totalorder %s14, 1
      %s162 = scalar_select %p161, %s14, 1
      %s163 = smul.addr %s162, 2
      %s164 = smul.addr %s163, 4
      %s165 = scalar_lea.vmem %s0, %s164
      %p166 = scmp.lt.s32.totalorder %s14, 1
      %s167 = scalar_select %p166, %s14, 1
      %s168 = smul.addr %s167, 2
      %s169 = smul.addr %s168, 8
      %s170 = scalar_lea.vmem %s3, %s169
      %v171 = vld [vmem:[%s165] sm:$0xff]
      %v172 = vunpack.c.l.bf16 %v171
      %v173 = vunpack.c.h.bf16 %v171
      %v174 = vld [vmem:[%s1] sm:$0xff]
      %176 = vset.pattern.permute.xlu0 0
      %177 = vperm.xlu0 %176, %v174
      %v178 = vpop.permute.xlu0 %177
      %v180 = vmul.f32 %v172, %v178
      %v181 = vmul.f32 %v173, %v178
      %v182 = vld [vmem:[%s2] sm:$0xff]
      %184 = vset.pattern.permute.xlu0 0
      %185 = vperm.xlu0 %184, %v182
      %v186 = vpop.permute.xlu0 %185
      %v188 = vadd.f32 %v180, %v186
      %v189 = vadd.f32 %v181, %v186
      %190 = vst [vmem:[%s170] sm:$0xff] %v188
      %191 = vst [vmem:[%s170 + $0x8] sm:$0xff] %v189
      %p192 = scmp.lt.s32.totalorder %s14, 1
      %s193 = scalar_select %p192, %s14, 1
      %s194 = smul.addr %s193, 2
      %s195 = smul.addr %s194, 8
      %s196 = scalar_lea.vmem %s3, %s195
      // Predicated region
      $region33: #{conv2d_batchnorm.3} parent=31 // pred_check
        %p197 = pneg %p100
      $region34: #{conv2d_batchnorm.3} parent=31 // pred_check_branch
        %199 = sbr.rel (%p197) target = $region36
      $region35: #{conv2d_batchnorm.3} parent=31 // pred_region
        _
      $region36: #{conv2d_batchnorm.3} parent=31 // pred_fallthru
        _
    $region32: #{conv2d_batchnorm.3} parent=5 // pred_fallthru
      _
    %p200 = scmp.le.s32.totalorder 2, %s9
    // Predicated region
    $region37: #{conv2d_batchnorm.3} parent=5 // pred_check
      %p201 = pneg %p200
    $region38: #{conv2d_batchnorm.3} parent=5 // pred_check_branch
      %203 = sbr.rel (%p201) target = $region40
    $region39: #{conv2d_batchnorm.3} parent=5 // pred_region
      %s204 = ssub.s32 %s9, 2
      // Predicated region
      $region41: #{conv2d_batchnorm.3} parent=39 // pred_check
        %p205 = pneg %p106
      $region42: #{conv2d_batchnorm.3} parent=39 // pred_check_branch
        %207 = sbr.rel (%p205) target = $region44
      $region43: #{conv2d_batchnorm.3} parent=39 // pred_region
        %p208 = scmp.lt.s32.totalorder %s15, 1
        %s209 = scalar_select %p208, %s15, 1
        %s210 = smul.addr %s209, 2
        %s211 = smul.addr %s210, 8
        %s212 = scalar_lea.vmem %s3, %s211
      $region44: #{conv2d_batchnorm.3} parent=39 // pred_fallthru
        _
    $region40: #{conv2d_batchnorm.3} parent=5 // pred_fallthru
      _
  $region6: #{conv2d_batchnorm.3} parent=0 // loop_footer
    %s13 = sadd.s32 1, %s9
  $region7: #{conv2d_batchnorm.3} parent=0 // loop_footer_branch
    %8 = sbr.rel target = $region3
  $region8: #{conv2d_batchnorm.3} parent=0 // loop_exit
    _

// kernel: conv2d_batchnorm.2
$region0: #{conv2d_batchnorm.2}
  #allocation0 [shape = 'u32[]', space=smem, size = 0x4, offset = 0x4, fixed_abs, tag = 'smem constant byte address 0x4 - core index']
  #allocation1 [shape = 'u32[144,128]{1,0:T(1,128)}', space=vmem, size = 0x12000, scoped, tag = 'internal scratch']
  %s0 = inlined_call_operand.vmem [shape: bf16[2,18,18,4], index: 0, kind: input, shape index: {}]
  %s1 = inlined_call_operand.vmem [shape: bf16[9,4,128], index: 1, kind: input, shape index: {}]
  %s2 = inlined_call_operand.vmem [shape: bf16[2,8,256], index: 2, kind: output, shape index: {0}]
  %s3 = inlined_call_operand.vmem [shape: f32[2,2,128], index: 3, kind: output, shape index: {1}]
  %4 = xla_tuple %s2, %s3
  %s5 = sld [smem:[#allocation0]]
  $region49: #{conv2d_batchnorm.2} parent=0
    _
  %s7 = ssub.s32 1, %s5
  %s8 = scalar_select 0, %s7, %s5
  loop: start=0, step=1, limit=4
  $region2: #{conv2d_batchnorm.2} parent=0 // loop_pre_header
    _
  $region3: #{conv2d_batchnorm.2} parent=0 // loop_header
    %s10 = sphi 0, %s14
    %p11 = scmp.ge.s32.totalorder %s10, 4
    %s17 = sphi 0, %s29
    %s18 = sphi 0, %s25
    %s19 = sphi 0, %s17
    %s20 = sphi 0, %s18
    %s21 = sphi 0, %s19
    %s22 = sphi 0, %s20
    %s32 = sphi 0, %s34
    %s35 = sphi 0, %s32
    %s36 = sphi 0, %s35
    %s52 = sphi 0, %s36
    %s56 = sphi 0, %s56
    %s58 = sphi 0, %s56
    %s59 = sphi 0, %s58
    %s73 = sphi 0, %s59
    %s81 = sphi 0, %s83
    %s84 = sphi 0, %s81
    %s85 = sphi 0, %s84
    %s101 = sphi 0, %s85
    %s109 = sphi 0, %s111
    %s112 = sphi 0, %s109
    %s113 = sphi 0, %s112
    %s129 = sphi 0, %s113
  $region4: #{conv2d_batchnorm.2} parent=0 // loop_header_branch
    %13 = sbr.rel (%p11) target = $region8
  $region5: #{conv2d_batchnorm.2} parent=0 // loop_body
    %s15 = ssub.s32 %s10, 1
    %s16 = ssub.s32 %s10, 2
    %s23 = sadd.s32 1, %s18
    %p24 = scmp.ge.s32.totalorder %s23, 1
    %s25 = scalar_select %p24, 0, %s23
    %s26 = sadd.s32 1, %s17
    %s27 = scalar_select %p24, %s26, %s17
    %p28 = scmp.ge.s32.totalorder %s27, 2
    %s29 = scalar_select %p28, 0, %s27
    %s30 = ssub.s32 %s17, %s29
    %p31 = scmp.eq.s32.totalorder %s30, 0
    %s33 = sadd.s32 %s32, 1
    %s34 = scalar_select %p31, %s32, %s33
    %p37 = pneg %p31
    %p38 = scmp.eq.s32.totalorder %s10, 1
    %p39 = por %p37, %p38
    %p40 = scmp.ne.s32.totalorder %s32, %s35
    %p41 = scmp.eq.s32.totalorder %s10, 0
    %p42 = por %p40, %p41
    %p43 = scmp.ne.s32.totalorder %s32, %s35
    %p44 = scmp.eq.s32.totalorder %s15, 1
    %p45 = por %p43, %p44
    %p46 = scmp.ne.s32.totalorder %s35, %s36
    %p47 = scmp.eq.s32.totalorder %s15, 0
    %p48 = por %p46, %p47
    %p49 = scmp.ne.s32.totalorder %s35, %s36
    %p50 = scmp.eq.s32.totalorder %s16, 1
    %p51 = por %p49, %p50
    %p53 = scmp.ne.s32.totalorder %s36, %s52
    %p54 = scmp.eq.s32.totalorder %s16, 0
    %p55 = por %p53, %p54
    %s57 = sadd.s32 %s56, 1
    %p60 = scmp.eq.s32.totalorder %s10, 1
    %p61 = scmp.ne.s32.totalorder %s56, %s58
    %p62 = scmp.eq.s32.totalorder %s10, 0
    %p63 = por %p61, %p62
    %p64 = scmp.ne.s32.totalorder %s56, %s58
    %p65 = scmp.eq.s32.totalorder %s15, 1
    %p66 = por %p64, %p65
    %p67 = scmp.ne.s32.totalorder %s58, %s59
    %p68 = scmp.eq.s32.totalorder %s15, 0
    %p69 = por %p67, %p68
    %p70 = scmp.ne.s32.totalorder %s58, %s59
    %p71 = scmp.eq.s32.totalorder %s16, 1
    %p72 = por %p70, %p71
    %p74 = scmp.ne.s32.totalorder %s59, %s73
    %p75 = scmp.eq.s32.totalorder %s16, 0
    %p76 = por %p74, %p75
    %s77 = sadd.s32 %s17, %s18
    %s78 = sadd.s32 %s29, %s25
    %s79 = ssub.s32 %s77, %s78
    %p80 = scmp.eq.s32.totalorder %s79, 0
    %s82 = sadd.s32 %s81, 1
    %s83 = scalar_select %p80, %s81, %s82
    %p86 = pneg %p80
    %p87 = scmp.eq.s32.totalorder %s10, 1
    %p88 = por %p86, %p87
    %p89 = scmp.ne.s32.totalorder %s81, %s84
    %p90 = scmp.eq.s32.totalorder %s10, 0
    %p91 = por %p89, %p90
    %p92 = scmp.ne.s32.totalorder %s81, %s84
    %p93 = scmp.eq.s32.totalorder %s15, 1
    %p94 = por %p92, %p93
    %p95 = scmp.ne.s32.totalorder %s84, %s85
    %p96 = scmp.eq.s32.totalorder %s15, 0
    %p97 = por %p95, %p96
    %p98 = scmp.ne.s32.totalorder %s84, %s85
    %p99 = scmp.eq.s32.totalorder %s16, 1
    %p100 = por %p98, %p99
    %p102 = scmp.ne.s32.totalorder %s85, %s101
    %p103 = scmp.eq.s32.totalorder %s16, 0
    %p104 = por %p102, %p103
    %s105 = sadd.s32 %s17, %s18
    %s106 = sadd.s32 %s29, %s25
    %s107 = ssub.s32 %s105, %s106
    %p108 = scmp.eq.s32.totalorder %s107, 0
    %s110 = sadd.s32 %s109, 1
    %s111 = scalar_select %p108, %s109, %s110
    %p114 = pneg %p108
    %p115 = scmp.eq.s32.totalorder %s10, 1
    %p116 = por %p114, %p115
    %p117 = scmp.ne.s32.totalorder %s109, %s112
    %p118 = scmp.eq.s32.totalorder %s10, 0
    %p119 = por %p117, %p118
    %p120 = scmp.ne.s32.totalorder %s109, %s112
    %p121 = scmp.eq.s32.totalorder %s15, 1
    %p122 = por %p120, %p121
    %p123 = scmp.ne.s32.totalorder %s112, %s113
    %p124 = scmp.eq.s32.totalorder %s15, 0
    %p125 = por %p123, %p124
    %p126 = scmp.ne.s32.totalorder %s112, %s113
    %p127 = scmp.eq.s32.totalorder %s16, 1
    %p128 = por %p126, %p127
    %p130 = scmp.ne.s32.totalorder %s113, %s129
    %p131 = scmp.eq.s32.totalorder %s16, 0
    %p132 = por %p130, %p131
    %p133 = scmp.le.s32.totalorder 1, %s10
    %p134 = scmp.lt.s32.totalorder %s10, 3
    %p135 = pnand %p133, %p134
    %p136 = pneg %p135
    // Predicated region
    $region9: #{conv2d_batchnorm.2} parent=5 // pred_check
      _
    $region10: #{conv2d_batchnorm.2} parent=5 // pred_check_branch
      %138 = sbr.rel (%p135) target = $region12
    $region11: #{conv2d_batchnorm.2} parent=5 // pred_region
      %s139 = ssub.s32 %s10, 1
      // Predicated region
      $region13: #{conv2d_batchnorm.2} parent=11 // pred_check
        %p140 = pneg %p69
      $region14: #{conv2d_batchnorm.2} parent=11 // pred_check_branch
        %142 = sbr.rel (%p140) target = $region16
      $region15: #{conv2d_batchnorm.2} parent=11 // pred_region
        _
      $region16: #{conv2d_batchnorm.2} parent=11 // pred_fallthru
        _
    $region12: #{conv2d_batchnorm.2} parent=5 // pred_fallthru
      _
    %p143 = scmp.lt.s32.totalorder %s10, 2
    // Predicated region
    $region17: #{conv2d_batchnorm.2} parent=5 // pred_check
      %p144 = pneg %p143
    $region18: #{conv2d_batchnorm.2} parent=5 // pred_check_branch
      %146 = sbr.rel (%p144) target = $region20
    $region19: #{conv2d_batchnorm.2} parent=5 // pred_region
      // Predicated region
      $region21: #{conv2d_batchnorm.2} parent=19 // pred_check
        %p147 = pneg %p42
      $region22: #{conv2d_batchnorm.2} parent=19 // pred_check_branch
        %149 = sbr.rel (%p147) target = $region24
      $region23: #{conv2d_batchnorm.2} parent=19 // pred_region
        %p150 = scmp.lt.s32.totalorder %s17, 1
        %s151 = scalar_select %p150, %s17, 1
        %s152 = smul.addr %s151, 54
        %s153 = smul.addr %s152, 4
        %s154 = scalar_lea.vmem %s0, %s153
      $region24: #{conv2d_batchnorm.2} parent=19 // pred_fallthru
        _
    $region20: #{conv2d_batchnorm.2} parent=5 // pred_fallthru
      _
    %p155 = scmp.le.s32.totalorder 1, %s10
    %p156 = scmp.lt.s32.totalorder %s10, 3
    %p157 = pnand %p155, %p156
    %p158 = pneg %p157
    // Predicated region
    $region25: #{conv2d_batchnorm.2} parent=5 // pred_check
      _
    $region26: #{conv2d_batchnorm.2} parent=5 // pred_check_branch
      %160 = sbr.rel (%p157) target = $region28
    $region27: #{conv2d_batchnorm.2} parent=5 // pred_region
      %s161 = ssub.s32 %s10, 1
      %p162 = scmp.lt.s32.totalorder %s19, 1
      %s163 = scalar_select %p162, %s19, 1
      %s164 = smul.addr %s163, 54
      %s165 = smul.addr %s164, 4
      %s166 = scalar_lea.vmem %s0, %s165
      %p167 = pneg %p48
      %p168 = pneg %p45
      %p169 = pneg %p69
      %p170 = pneg %p66
      %p171 = pneg %p97
      %p172 = pneg %p94
      %s173 = sadd.s32 %s19, %s20
      %p174 = scmp.lt.s32.totalorder %s173, 1
      %s175 = scalar_select %p174, %s173, 1
      %s176 = smul.addr %s175, 2
      %s177 = smul.addr %s176, 4
      %s178 = scalar_lea.vmem %s2, %s177
      %p179 = pneg %p125
      %p180 = pneg %p122
      %s181 = sadd.s32 %s19, %s20
      %p182 = scmp.lt.s32.totalorder %s181, 1
      %s183 = scalar_select %p182, %s181, 1
      %s184 = smul.addr %s183, 2
      %s185 = scalar_lea.vmem %s3, %s184
      %p186 = scmp.lt.s32.totalorder %s19, 1
      %s187 = scalar_select %p186, %s19, 1
      %s188 = smul.addr %s187, 54
      %s189 = smul.addr %s188, 4
      %s190 = scalar_lea.vmem %s0, %s189
      %s191 = sadd.s32 %s19, %s20
      %p192 = scmp.lt.s32.totalorder %s191, 1
      %s193 = scalar_select %p192, %s191, 1
      %s194 = smul.addr %s193, 2
      %s195 = smul.addr %s194, 4
      %s196 = scalar_lea.vmem %s2, %s195
      %s197 = sadd.s32 %s19, %s20
      %s198 = sadd.s32 %s19, %s20
      %p199 = scmp.lt.s32.totalorder %s198, 1
      %s200 = scalar_select %p199, %s198, 1
      %s201 = smul.addr %s200, 2
      %s202 = scalar_lea.vmem %s3, %s201
      %s203 = sadd.s32 %s19, %s20
      %s205 = smul.u32 %s20, 16
      %s206 = smul.u32 %s205, 3
      %s207 = smul.addr %s206, 4
      %s208 = scalar_lea.vmem %s190, %s207
      %v209 = vld [vmem:[%s208] sm:$0xf]
      %v210 = vld [vmem:[%s208 + $0x4] sm:$0xf]
      %v211 = vld [vmem:[%s208 + $0xc] sm:$0xf]
      %v212 = vld [vmem:[%s208 + $0x10] sm:$0xf]
      %v213 = vld [vmem:[%s208 + $0x18] sm:$0xf]
      %v214 = vld [vmem:[%s208 + $0x1c] sm:$0xf]
      %v215 = vld [vmem:[%s208 + $0x24] sm:$0xf]
      %v216 = vld [vmem:[%s208 + $0x28] sm:$0xf]
      %v217 = vld [vmem:[%s208 + $0x30] sm:$0xf]
      %v218 = vld [vmem:[%s208 + $0x34] sm:$0xf]
      %v219 = vld [vmem:[%s208 + $0x3c] sm:$0xf]
      %v220 = vld [vmem:[%s208 + $0x40] sm:$0xf]
      %v221 = vld [vmem:[%s208 + $0x48] sm:$0xf]
      %v222 = vld [vmem:[%s208 + $0x4c] sm:$0xf]
      %v223 = vld [vmem:[%s208 + $0x54] sm:$0xf]
      %v224 = vld [vmem:[%s208 + $0x58] sm:$0xf]
      %v225 = vld [vmem:[%s208 + $0x60] sm:$0xf]
      %v226 = vld [vmem:[%s208 + $0x64] sm:$0xf]
      %v227 = vld [vmem:[%s208 + $0x6c] sm:$0xf]
      %v228 = vld [vmem:[%s208 + $0x70] sm:$0xf]
      %v229 = vld [vmem:[%s208 + $0x78] sm:$0xf]
      %v230 = vld [vmem:[%s208 + $0x7c] sm:$0xf]
      %v231 = vld [vmem:[%s208 + $0x84] sm:$0xf]
      %v232 = vld [vmem:[%s208 + $0x88] sm:$0xf]
      %v233 = vld [vmem:[%s208 + $0x90] sm:$0xf]
      %v234 = vld [vmem:[%s208 + $0x94] sm:$0xf]
      %v235 = vld [vmem:[%s208 + $0x9c] sm:$0xf]
      %v236 = vld [vmem:[%s208 + $0xa0] sm:$0xf]
      %v237 = vld [vmem:[%s208 + $0xa8] sm:$0xf]
      %v238 = vld [vmem:[%s208 + $0xac] sm:$0xf]
      %v239 = vld [vmem:[%s208 + $0xb4] sm:$0xf]
      %v240 = vld [vmem:[%s208 + $0xb8] sm:$0xf]
      %v241 = vunpack.c.l.bf16 %v209
      %v242 = vunpack.c.l.bf16 %v210
      %v243 = vunpack.c.l.bf16 %v211
      %v244 = vunpack.c.l.bf16 %v212
      %v245 = vunpack.c.l.bf16 %v213
      %v246 = vunpack.c.l.bf16 %v214
      %v247 = vunpack.c.l.bf16 %v215
      %v248 = vunpack.c.l.bf16 %v216
      %v249 = vunpack.c.l.bf16 %v217
      %v250 = vunpack.c.l.bf16 %v218
      %v251 = vunpack.c.l.bf16 %v219
      %v252 = vunpack.c.l.bf16 %v220
      %v253 = vunpack.c.l.bf16 %v221
      %v254 = vunpack.c.l.bf16 %v222
      %v255 = vunpack.c.l.bf16 %v223
      %v256 = vunpack.c.l.bf16 %v224
      %v257 = vunpack.c.l.bf16 %v225
      %v258 = vunpack.c.l.bf16 %v226
      %v259 = vunpack.c.l.bf16 %v227
      %v260 = vunpack.c.l.bf16 %v228
      %v261 = vunpack.c.l.bf16 %v229
      %v262 = vunpack.c.l.bf16 %v230
      %v263 = vunpack.c.l.bf16 %v231
      %v264 = vunpack.c.l.bf16 %v232
      %v265 = vunpack.c.l.bf16 %v233
      %v266 = vunpack.c.l.bf16 %v234
      %v267 = vunpack.c.l.bf16 %v235
      %v268 = vunpack.c.l.bf16 %v236
      %v269 = vunpack.c.l.bf16 %v237
      %v270 = vunpack.c.l.bf16 %v238
      %v271 = vunpack.c.l.bf16 %v239
      %v272 = vunpack.c.l.bf16 %v240
      %v273 = vpack.c.bf16 %v242, %v241
      %v274 = vpack.c.bf16 %v244, %v243
      %v275 = vpack.c.bf16 %v246, %v245
      %v276 = vpack.c.bf16 %v248, %v247
      %v277 = vpack.c.bf16 %v250, %v249
      %v278 = vpack.c.bf16 %v252, %v251
      %v279 = vpack.c.bf16 %v254, %v253
      %v280 = vpack.c.bf16 %v256, %v255
      %v281 = vpack.c.bf16 %v258, %v257
      %v282 = vpack.c.bf16 %v260, %v259
      %v283 = vpack.c.bf16 %v262, %v261
      %v284 = vpack.c.bf16 %v264, %v263
      %v285 = vpack.c.bf16 %v266, %v265
      %v286 = vpack.c.bf16 %v268, %v267
      %v287 = vpack.c.bf16 %v270, %v269
      %v288 = vpack.c.bf16 %v272, %v271
      %v289 = vld [vmem:[%s1] sm:$0x3]
      %v290 = vld [vmem:[%s208 + $0x8] sm:$0x1]
      %v291 = vld [vmem:[%s208 + $0x14] sm:$0x1]
      %v292 = vld [vmem:[%s208 + $0x20] sm:$0x1]
      %v293 = vld [vmem:[%s208 + $0x2c] sm:$0x1]
      %v294 = vld [vmem:[%s208 + $0x38] sm:$0x1]
      %v295 = vld [vmem:[%s208 + $0x44] sm:$0x1]
      %v296 = vld [vmem:[%s208 + $0x50] sm:$0x1]
      %v297 = vld [vmem:[%s208 + $0x5c] sm:$0x1]
      %v298 = vld [vmem:[%s208 + $0x68] sm:$0x1]
      %v299 = vld [vmem:[%s208 + $0x74] sm:$0x1]
      %v300 = vld [vmem:[%s208 + $0x80] sm:$0x1]
      %v301 = vld [vmem:[%s208 + $0x8c] sm:$0x1]
      %v302 = vld [vmem:[%s208 + $0x98] sm:$0x1]
      %v303 = vld [vmem:[%s208 + $0xa4] sm:$0x1]
      %v304 = vld [vmem:[%s208 + $0xb0] sm:$0x1]
      %v305 = vld [vmem:[%s208 + $0xbc] sm:$0x1]
      %v306 = vunpack.c.l.bf16 %v290
      %v307 = vunpack.c.l.bf16 %v291
      %v308 = vunpack.c.l.bf16 %v292
      %v309 = vunpack.c.l.bf16 %v293
      %v310 = vunpack.c.l.bf16 %v294
      %v311 = vunpack.c.l.bf16 %v295
      %v312 = vunpack.c.l.bf16 %v296
      %v313 = vunpack.c.l.bf16 %v297
      %v314 = vunpack.c.l.bf16 %v298
      %v315 = vunpack.c.l.bf16 %v299
      %v316 = vunpack.c.l.bf16 %v300
      %v317 = vunpack.c.l.bf16 %v301
      %v318 = vunpack.c.l.bf16 %v302
      %v319 = vunpack.c.l.bf16 %v303
      %v320 = vunpack.c.l.bf16 %v304
      %v321 = vunpack.c.l.bf16 %v305
      %vm370 = vcmask 1046528
      %v371 = vrot.slane %v241, 1
      %v372 = vrot.slane %v242, 1
      %v373 = vsel %vm370, %v371, %v372
      %v374 = vrot.slane %v306, 1
      %v375 = vsel %vm370, %v372, %v374
      %v376 = vrot.slane %v243, 1
      %v377 = vrot.slane %v244, 1
      %v378 = vsel %vm370, %v376, %v377
      %v379 = vrot.slane %v307, 1
      %v380 = vsel %vm370, %v377, %v379
      %v381 = vrot.slane %v245, 1
      %v382 = vrot.slane %v246, 1
      %v383 = vsel %vm370, %v381, %v382
      %v384 = vrot.slane %v308, 1
      %v385 = vsel %vm370, %v382, %v384
      %v386 = vrot.slane %v247, 1
      %v387 = vrot.slane %v248, 1
      %v388 = vsel %vm370, %v386, %v387
      %v389 = vrot.slane %v309, 1
      %v390 = vsel %vm370, %v387, %v389
      %v391 = vrot.slane %v249, 1
      %v392 = vrot.slane %v250, 1
      %v393 = vsel %vm370, %v391, %v392
      %v394 = vrot.slane %v310, 1
      %v395 = vsel %vm370, %v392, %v394
      %v396 = vrot.slane %v251, 1
      %v397 = vrot.slane %v252, 1
      %v398 = vsel %vm370, %v396, %v397
      %v399 = vrot.slane %v311, 1
      %v400 = vsel %vm370, %v397, %v399
      %v401 = vrot.slane %v253, 1
      %v402 = vrot.slane %v254, 1
      %v403 = vsel %vm370, %v401, %v402
      %v404 = vrot.slane %v312, 1
      %v405 = vsel %vm370, %v402, %v404
      %v406 = vrot.slane %v255, 1
      %v407 = vrot.slane %v256, 1
      %v408 = vsel %vm370, %v406, %v407
      %v409 = vrot.slane %v313, 1
      %v410 = vsel %vm370, %v407, %v409
      %v411 = vrot.slane %v257, 1
      %v412 = vrot.slane %v258, 1
      %v413 = vsel %vm370, %v411, %v412
      %v414 = vrot.slane %v314, 1
      %v415 = vsel %vm370, %v412, %v414
      %v416 = vrot.slane %v259, 1
      %v417 = vrot.slane %v260, 1
      %v418 = vsel %vm370, %v416, %v417
      %v419 = vrot.slane %v315, 1
      %v420 = vsel %vm370, %v417, %v419
      %v421 = vrot.slane %v261, 1
      %v422 = vrot.slane %v262, 1
      %v423 = vsel %vm370, %v421, %v422
      %v424 = vrot.slane %v316, 1
      %v425 = vsel %vm370, %v422, %v424
      %v426 = vrot.slane %v263, 1
      %v427 = vrot.slane %v264, 1
      %v428 = vsel %vm370, %v426, %v427
      %v429 = vrot.slane %v317, 1
      %v430 = vsel %vm370, %v427, %v429
      %v431 = vrot.slane %v265, 1
      %v432 = vrot.slane %v266, 1
      %v433 = vsel %vm370, %v431, %v432
      %v434 = vrot.slane %v318, 1
      %v435 = vsel %vm370, %v432, %v434
      %v436 = vrot.slane %v267, 1
      %v437 = vrot.slane %v268, 1
      %v438 = vsel %vm370, %v436, %v437
      %v439 = vrot.slane %v319, 1
      %v440 = vsel %vm370, %v437, %v439
      %v441 = vrot.slane %v269, 1
      %v442 = vrot.slane %v270, 1
      %v443 = vsel %vm370, %v441, %v442
      %v444 = vrot.slane %v320, 1
      %v445 = vsel %vm370, %v442, %v444
      %v446 = vrot.slane %v271, 1
      %v447 = vrot.slane %v272, 1
      %v448 = vsel %vm370, %v446, %v447
      %v449 = vrot.slane %v321, 1
      %v450 = vsel %vm370, %v447, %v449
      %v483 = vpack.c.bf16 %v375, %v373
      %v484 = vpack.c.bf16 %v380, %v378
      %v485 = vpack.c.bf16 %v385, %v383
      %v486 = vpack.c.bf16 %v390, %v388
      %v487 = vpack.c.bf16 %v395, %v393
      %v488 = vpack.c.bf16 %v400, %v398
      %v489 = vpack.c.bf16 %v405, %v403
      %v490 = vpack.c.bf16 %v410, %v408
      %v491 = vpack.c.bf16 %v415, %v413
      %v492 = vpack.c.bf16 %v420, %v418
      %v493 = vpack.c.bf16 %v425, %v423
      %v494 = vpack.c.bf16 %v430, %v428
      %v495 = vpack.c.bf16 %v435, %v433
      %v496 = vpack.c.bf16 %v440, %v438
      %v497 = vpack.c.bf16 %v445, %v443
      %v498 = vpack.c.bf16 %v450, %v448
      %s499 = scalar_lea.vmem %s1, 2
      %v500 = vld [vmem:[%s499] sm:$0x3]
      %vm501 = vcmask 31744
      %v503 = vsel %vm501, %v483, 0
      %v506 = vsel %vm501, %v484, 0
      %v509 = vsel %vm501, %v485, 0
      %v512 = vsel %vm501, %v486, 0
      %v515 = vsel %vm501, %v487, 0
      %v518 = vsel %vm501, %v488, 0
      %v521 = vsel %vm501, %v489, 0
      %v524 = vsel %vm501, %v490, 0
      %v527 = vsel %vm501, %v491, 0
      %v530 = vsel %vm501, %v492, 0
      %v533 = vsel %vm501, %v493, 0
      %v536 = vsel %vm501, %v494, 0
      %v539 = vsel %vm501, %v495, 0
      %v542 = vsel %vm501, %v496, 0
      %v545 = vsel %vm501, %v497, 0
      %v548 = vsel %vm501, %v498, 0
      %vm550 = vcmask 1041408
      %v552 = vsel %vm550, %v500, 0
      %554 = vmatprep.subr.bf16.mxu0 0
      %555 = vmatpush1.bf16.msra.mxu0 %v552
      %556 = vmatprep.subr.bf16.mxu0 0
      %557 = vmatpush1.bf16.msra.mxu0 0
      %558 = vmatprep.subr.bf16.mxu0 0
      %559 = vmatpush1.bf16.msra.mxu0 0
      %560 = vmatprep.subr.bf16.mxu0 0
      %561 = vmatpush1.bf16.msra.mxu0 0
      %562 = vmatprep.subr.bf16.mxu0 0
      %563 = vmatpush1.bf16.msra.mxu0 0
      %564 = vmatprep.subr.bf16.mxu0 0
      %565 = vmatpush1.bf16.msra.mxu0 0
      %566 = vmatprep.subr.bf16.mxu0 0
      %567 = vmatpush1.bf16.msra.mxu0 0
      %568 = vmatprep.subr.bf16.mxu0 0
      %569 = vmatpush1.bf16.msra.mxu0 0
      %570 = vmatprep.subr.bf16.mxu0 0
      %571 = vmatpush1.bf16.msra.mxu0 0
      %572 = vmatprep.subr.bf16.mxu0 0
      %573 = vmatpush1.bf16.msra.mxu0 0
      %574 = vmatprep.subr.bf16.mxu0 0
      %575 = vmatpush1.bf16.msra.mxu0 0
      %576 = vmatprep.subr.bf16.mxu0 0
      %577 = vmatpush1.bf16.msra.mxu0 0
      %578 = vmatprep.subr.bf16.mxu0 0
      %579 = vmatpush1.bf16.msra.mxu0 0
      %580 = vmatprep.subr.bf16.mxu0 0
      %581 = vmatpush1.bf16.msra.mxu0 0
      %582 = vmatprep.subr.bf16.mxu0 0
      %583 = vmatpush1.bf16.msra.mxu0 0
      %584 = vmatprep.subr.bf16.mxu0 0
      %585 = vmatpush1.bf16.msra.mxu0 0
      %586 = vmatprep.mubr.bf16.mxu0 0
      %587 = vmatmul.mubr.bf16.gmra.mrb[0].mxu0 %v503
      %v588 = vpop.f32.mrb[0].mxu0
      %v589 = vadd.f32 0.0, %v588
      %v590 = vpop.f32.mrb[0].mxu0
      %v591 = vpop.f32.mrb[0].mxu0
      %v592 = vadd.f32 0.0, %v591
      %v593 = vpop.f32.mrb[0].mxu0
      %594 = vmatprep.mubr.bf16.mxu0 0
      %595 = vmatmul.mubr.bf16.gmra.mrb[0].mxu0 %v506
      %v596 = vpop.f32.mrb[0].mxu0
      %v597 = vadd.f32 0.0, %v596
      %v598 = vpop.f32.mrb[0].mxu0
      %v599 = vpop.f32.mrb[0].mxu0
      %v600 = vadd.f32 0.0, %v599
      %v601 = vpop.f32.mrb[0].mxu0
      %602 = vmatprep.mubr.bf16.mxu0 0
      %603 = vmatmul.mubr.bf16.gmra.mrb[0].mxu0 %v509
      %v604 = vpop.f32.mrb[0].mxu0
      %v605 = vadd.f32 0.0, %v604
      %v606 = vpop.f32.mrb[0].mxu0
      %v607 = vpop.f32.mrb[0].mxu0
      %v608 = vadd.f32 0.0, %v607
      %v609 = vpop.f32.mrb[0].mxu0
      %610 = vmatprep.mubr.bf16.mxu0 0
      %611 = vmatmul.mubr.bf16.gmra.mrb[0].mxu0 %v512
      %v612 = vpop.f32.mrb[0].mxu0
      %v613 = vadd.f32 0.0, %v612
      %v614 = vpop.f32.mrb[0].mxu0
      %v615 = vpop.f32.mrb[0].mxu0
      %v616 = vadd.f32 0.0, %v615
      %v617 = vpop.f32.mrb[0].mxu0
      %618 = vmatprep.mubr.bf16.mxu0 0
      %619 = vmatmul.mubr.bf16.gmra.mrb[0].mxu0 %v515
      %v620 = vpop.f32.mrb[0].mxu0
      %v621 = vadd.f32 0.0, %v620
      %v622 = vpop.f32.mrb[0].mxu0
      %v623 = vpop.f32.mrb[0].mxu0
      %v624 = vadd.f32 0.0, %v623
      %v625 = vpop.f32.mrb[0].mxu0
      %626 = vmatprep.mubr.bf16.mxu0 0
      %627 = vmatmul.mubr.bf16.gmra.mrb[0].mxu0 %v518
      %v628 = vpop.f32.mrb[0].mxu0
      %v629 = vadd.f32 0.0, %v628
      %v630 = vpop.f32.mrb[0].mxu0
      %v631 = vpop.f32.mrb[0].mxu0
      %v632 = vadd.f32 0.0, %v631
      %v633 = vpop.f32.mrb[0].mxu0
      %634 = vmatprep.mubr.bf16.mxu0 0
      %635 = vmatmul.mubr.bf16.gmra.mrb[0].mxu0 %v521
      %v636 = vpop.f32.mrb[0].mxu0
      %v637 = vadd.f32 0.0, %v636
      %v638 = vpop.f32.mrb[0].mxu0
      %v639 = vpop.f32.mrb[0].mxu0
      %v640 = vadd.f32 0.0, %v639
      %v641 = vpop.f32.mrb[0].mxu0
      %642 = vmatprep.mubr.bf16.mxu0 0
      %643 = vmatmul.mubr.bf16.gmra.mrb[0].mxu0 %v524
      %v644 = vpop.f32.mrb[0].mxu0
      %v645 = vadd.f32 0.0, %v644
      %v646 = vpop.f32.mrb[0].mxu0
      %v647 = vpop.f32.mrb[0].mxu0
      %v648 = vadd.f32 0.0, %v647
      %v649 = vpop.f32.mrb[0].mxu0
      %650 = vmatprep.mubr.bf16.mxu0 0
      %651 = vmatmul.mubr.bf16.gmra.mrb[0].mxu0 %v527
      %v652 = vpop.f32.mrb[0].mxu0
      %v653 = vadd.f32 0.0, %v652
      %v654 = vpop.f32.mrb[0].mxu0
      %v655 = vpop.f32.mrb[0].mxu0
      %v656 = vadd.f32 0.0, %v655
      %v657 = vpop.f32.mrb[0].mxu0
      %658 = vmatprep.mubr.bf16.mxu0 0
      %659 = vmatmul.mubr.bf16.gmra.mrb[0].mxu0 %v530
      %v660 = vpop.f32.mrb[0].mxu0
      %v661 = vadd.f32 0.0, %v660
      %v662 = vpop.f32.mrb[0].mxu0
      %v663 = vpop.f32.mrb[0].mxu0
      %v664 = vadd.f32 0.0, %v663
      %v665 = vpop.f32.mrb[0].mxu0
      %666 = vmatprep.mubr.bf16.mxu0 0
      %667 = vmatmul.mubr.bf16.gmra.mrb[0].mxu0 %v533
      %v668 = vpop.f32.mrb[0].mxu0
      %v669 = vadd.f32 0.0, %v668
      %v670 = vpop.f32.mrb[0].mxu0
      %v671 = vpop.f32.mrb[0].mxu0
      %v672 = vadd.f32 0.0, %v671
      %v673 = vpop.f32.mrb[0].mxu0
      %674 = vmatprep.mubr.bf16.mxu0 0
      %675 = vmatmul.mubr.bf16.gmra.mrb[0].mxu0 %v536
      %v676 = vpop.f32.mrb[0].mxu0
      %v677 = vadd.f32 0.0, %v676
      %v678 = vpop.f32.mrb[0].mxu0
      %v679 = vpop.f32.mrb[0].mxu0
      %v680 = vadd.f32 0.0, %v679
      %v681 = vpop.f32.mrb[0].mxu0
      %682 = vmatprep.mubr.bf16.mxu0 0
      %683 = vmatmul.mubr.bf16.gmra.mrb[0].mxu0 %v539
      %v684 = vpop.f32.mrb[0].mxu0
      %v685 = vadd.f32 0.0, %v684
      %v686 = vpop.f32.mrb[0].mxu0
      %v687 = vpop.f32.mrb[0].mxu0
      %v688 = vadd.f32 0.0, %v687
      %v689 = vpop.f32.mrb[0].mxu0
      %690 = vmatprep.mubr.bf16.mxu0 0
      %691 = vmatmul.mubr.bf16.gmra.mrb[0].mxu0 %v542
      %v692 = vpop.f32.mrb[0].mxu0
      %v693 = vadd.f32 0.0, %v692
      %v694 = vpop.f32.mrb[0].mxu0
      %v695 = vpop.f32.mrb[0].mxu0
      %v696 = vadd.f32 0.0, %v695
      %v697 = vpop.f32.mrb[0].mxu0
      %698 = vmatprep.mubr.bf16.mxu0 0
      %699 = vmatmul.mubr.bf16.gmra.mrb[0].mxu0 %v545
      %v700 = vpop.f32.mrb[0].mxu0
      %v701 = vadd.f32 0.0, %v700
      %v702 = vpop.f32.mrb[0].mxu0
      %v703 = vpop.f32.mrb[0].mxu0
      %v704 = vadd.f32 0.0, %v703
      %v705 = vpop.f32.mrb[0].mxu0
      %706 = vmatprep.mubr.bf16.mxu0 0
      %707 = vmatmul.mubr.bf16.gmra.mrb[0].mxu0 %v548
      %v708 = vpop.f32.mrb[0].mxu0
      %v709 = vadd.f32 0.0, %v708
      %v710 = vpop.f32.mrb[0].mxu0
      %v711 = vpop.f32.mrb[0].mxu0
      %v712 = vadd.f32 0.0, %v711
      %v713 = vpop.f32.mrb[0].mxu0
      %714 = vdwg.mxu0
      %v716 = vsel %vm501, %v273, 0
      %v719 = vsel %vm501, %v274, 0
      %v722 = vsel %vm501, %v275, 0
      %v725 = vsel %vm501, %v276, 0
      %v728 = vsel %vm501, %v277, 0
      %v731 = vsel %vm501, %v278, 0
      %v734 = vsel %vm501, %v279, 0
      %v737 = vsel %vm501, %v280, 0
      %v740 = vsel %vm501, %v281, 0
      %v743 = vsel %vm501, %v282, 0
      %v746 = vsel %vm501, %v283, 0
      %v749 = vsel %vm501, %v284, 0
      %v752 = vsel %vm501, %v285, 0
      %v755 = vsel %vm501, %v286, 0
      %v758 = vsel %vm501, %v287, 0
      %v761 = vsel %vm501, %v288, 0
      %v764 = vsel %vm550, %v289, 0
      %766 = vmatprep.subr.bf16.mxu0 0
      %767 = vmatpush1.bf16.msra.mxu0 %v764
      %768 = vmatprep.subr.bf16.mxu0 0
      %769 = vmatpush1.bf16.msra.mxu0 0
      %770 = vmatprep.subr.bf16.mxu0 0
      %771 = vmatpush1.bf16.msra.mxu0 0
      %772 = vmatprep.subr.bf16.mxu0 0
      %773 = vmatpush1.bf16.msra.mxu0 0
      %774 = vmatprep.subr.bf16.mxu0 0
      %775 = vmatpush1.bf16.msra.mxu0 0
      %776 = vmatprep.subr.bf16.mxu0 0
      %777 = vmatpush1.bf16.msra.mxu0 0
      %778 = vmatprep.subr.bf16.mxu0 0
      %779 = vmatpush1.bf16.msra.mxu0 0
      %780 = vmatprep.subr.bf16.mxu0 0
      %781 = vmatpush1.bf16.msra.mxu0 0
      %782 = vmatprep.subr.bf16.mxu0 0
      %783 = vmatpush1.bf16.msra.mxu0 0
      %784 = vmatprep.subr.bf16.mxu0 0
      %785 = vmatpush1.bf16.msra.mxu0 0
      %786 = vmatprep.subr.bf16.mxu0 0
      %787 = vmatpush1.bf16.msra.mxu0 0
      %788 = vmatprep.subr.bf16.mxu0 0
      %789 = vmatpush1.bf16.msra.mxu0 0
      %790 = vmatprep.subr.bf16.mxu0 0
      %791 = vmatpush1.bf16.msra.mxu0 0
      %792 = vmatprep.subr.bf16.mxu0 0
      %793 = vmatpush1.bf16.msra.mxu0 0
      %794 = vmatprep.subr.bf16.mxu0 0
      %795 = vmatpush1.bf16.msra.mxu0 0
      %796 = vmatprep.subr.bf16.mxu0 0
      %797 = vmatpush1.bf16.msra.mxu0 0
      %798 = vmatprep.mubr.bf16.mxu0 0
      %799 = vmatmul.mubr.bf16.gmra.mrb[0].mxu0 %v716
      %v800 = vpop.f32.mrb[0].mxu0
      %v801 = vadd.f32 %v589, %v800
      %v802 = vpop.f32.mrb[0].mxu0
      %v803 = vpop.f32.mrb[0].mxu0
      %v804 = vadd.f32 %v592, %v803
      %v805 = vpop.f32.mrb[0].mxu0
      %806 = vmatprep.mubr.bf16.mxu0 0
      %807 = vmatmul.mubr.bf16.gmra.mrb[0].mxu0 %v719
      %v808 = vpop.f32.mrb[0].mxu0
      %v809 = vadd.f32 %v597, %v808
      %v810 = vpop.f32.mrb[0].mxu0
      %v811 = vpop.f32.mrb[0].mxu0
      %v812 = vadd.f32 %v600, %v811
      %v813 = vpop.f32.mrb[0].mxu0
      %814 = vmatprep.mubr.bf16.mxu0 0
      %815 = vmatmul.mubr.bf16.gmra.mrb[0].mxu0 %v722
      %v816 = vpop.f32.mrb[0].mxu0
      %v817 = vadd.f32 %v605, %v816
      %v818 = vpop.f32.mrb[0].mxu0
      %v819 = vpop.f32.mrb[0].mxu0
      %v820 = vadd.f32 %v608, %v819
      %v821 = vpop.f32.mrb[0].mxu0
      %822 = vmatprep.mubr.bf16.mxu0 0
      %823 = vmatmul.mubr.bf16.gmra.mrb[0].mxu0 %v725
      %v824 = vpop.f32.mrb[0].mxu0
      %v825 = vadd.f32 %v613, %v824
      %v826 = vpop.f32.mrb[0].mxu0
      %v827 = vpop.f32.mrb[0].mxu0
      %v828 = vadd.f32 %v616, %v827
      %v829 = vpop.f32.mrb[0].mxu0
      %830 = vmatprep.mubr.bf16.mxu0 0
      %831 = vmatmul.mubr.bf16.gmra.mrb[0].mxu0 %v728
      %v832 = vpop.f32.mrb[0].mxu0
      %v833 = vadd.f32 %v621, %v832
      %v834 = vpop.f32.mrb[0].mxu0
      %v835 = vpop.f32.mrb[0].mxu0
      %v836 = vadd.f32 %v624, %v835
      %v837 = vpop.f32.mrb[0].mxu0
      %838 = vmatprep.mubr.bf16.mxu0 0
      %839 = vmatmul.mubr.bf16.gmra.mrb[0].mxu0 %v731
      %v840 = vpop.f32.mrb[0].mxu0
      %v841 = vadd.f32 %v629, %v840
      %v842 = vpop.f32.mrb[0].mxu0
      %v843 = vpop.f32.mrb[0].mxu0
      %v844 = vadd.f32 %v632, %v843
      %v845 = vpop.f32.mrb[0].mxu0
      %846 = vmatprep.mubr.bf16.mxu0 0
      %847 = vmatmul.mubr.bf16.gmra.mrb[0].mxu0 %v734
      %v848 = vpop.f32.mrb[0].mxu0
      %v849 = vadd.f32 %v637, %v848
      %v850 = vpop.f32.mrb[0].mxu0
      %v851 = vpop.f32.mrb[0].mxu0
      %v852 = vadd.f32 %v640, %v851
      %v853 = vpop.f32.mrb[0].mxu0
      %854 = vmatprep.mubr.bf16.mxu0 0
      %855 = vmatmul.mubr.bf16.gmra.mrb[0].mxu0 %v737
      %v856 = vpop.f32.mrb[0].mxu0
      %v857 = vadd.f32 %v645, %v856
      %v858 = vpop.f32.mrb[0].mxu0
      %v859 = vpop.f32.mrb[0].mxu0
      %v860 = vadd.f32 %v648, %v859
      %v861 = vpop.f32.mrb[0].mxu0
      %862 = vmatprep.mubr.bf16.mxu0 0
      %863 = vmatmul.mubr.bf16.gmra.mrb[0].mxu0 %v740
      %v864 = vpop.f32.mrb[0].mxu0
      %v865 = vadd.f32 %v653, %v864
      %v866 = vpop.f32.mrb[0].mxu0
      %v867 = vpop.f32.mrb[0].mxu0
      %v868 = vadd.f32 %v656, %v867
      %v869 = vpop.f32.mrb[0].mxu0
      %870 = vmatprep.mubr.bf16.mxu0 0
      %871 = vmatmul.mubr.bf16.gmra.mrb[0].mxu0 %v743
      %v872 = vpop.f32.mrb[0].mxu0
      %v873 = vadd.f32 %v661, %v872
      %v874 = vpop.f32.mrb[0].mxu0
      %v875 = vpop.f32.mrb[0].mxu0
      %v876 = vadd.f32 %v664, %v875
      %v877 = vpop.f32.mrb[0].mxu0
      %878 = vmatprep.mubr.bf16.mxu0 0
      %879 = vmatmul.mubr.bf16.gmra.mrb[0].mxu0 %v746
      %v880 = vpop.f32.mrb[0].mxu0
      %v881 = vadd.f32 %v669, %v880
      %v882 = vpop.f32.mrb[0].mxu0
      %v883 = vpop.f32.mrb[0].mxu0
      %v884 = vadd.f32 %v672, %v883
      %v885 = vpop.f32.mrb[0].mxu0
      %886 = vmatprep.mubr.bf16.mxu0 0
      %887 = vmatmul.mubr.bf16.gmra.mrb[0].mxu0 %v749
      %v888 = vpop.f32.mrb[0].mxu0
      %v889 = vadd.f32 %v677, %v888
      %v890 = vpop.f32.mrb[0].mxu0
      %v891 = vpop.f32.mrb[0].mxu0
      %v892 = vadd.f32 %v680, %v891
      %v893 = vpop.f32.mrb[0].mxu0
      %894 = vmatprep.mubr.bf16.mxu0 0
      %895 = vmatmul.mubr.bf16.gmra.mrb[0].mxu0 %v752
      %v896 = vpop.f32.mrb[0].mxu0
      %v897 = vadd.f32 %v685, %v896
      %v898 = vpop.f32.mrb[0].mxu0
      %v899 = vpop.f32.mrb[0].mxu0
      %v900 = vadd.f32 %v688, %v899
      %v901 = vpop.f32.mrb[0].mxu0
      %902 = vmatprep.mubr.bf16.mxu0 0
      %903 = vmatmul.mubr.bf16.gmra.mrb[0].mxu0 %v755
      %v904 = vpop.f32.mrb[0].mxu0
      %v905 = vadd.f32 %v693, %v904
      %v906 = vpop.f32.mrb[0].mxu0
      %v907 = vpop.f32.mrb[0].mxu0
      %v908 = vadd.f32 %v696, %v907
      %v909 = vpop.f32.mrb[0].mxu0
      %910 = vmatprep.mubr.bf16.mxu0 0
      %911 = vmatmul.mubr.bf16.gmra.mrb[0].mxu0 %v758
      %v912 = vpop.f32.mrb[0].mxu0
      %v913 = vadd.f32 %v701, %v912
      %v914 = vpop.f32.mrb[0].mxu0
      %v915 = vpop.f32.mrb[0].mxu0
      %v916 = vadd.f32 %v704, %v915
      %v917 = vpop.f32.mrb[0].mxu0
      %918 = vmatprep.mubr.bf16.mxu0 0
      %919 = vmatmul.mubr.bf16.gmra.mrb[0].mxu0 %v761
      %v920 = vpop.f32.mrb[0].mxu0
      %v921 = vadd.f32 %v709, %v920
      %v922 = vpop.f32.mrb[0].mxu0
      %v923 = vpop.f32.mrb[0].mxu0
      %v924 = vadd.f32 %v712, %v923
      %v925 = vpop.f32.mrb[0].mxu0
      %926 = vdwg.mxu0
      %v927 = vld [vmem:[%s208] sm:$0xe]
      %v928 = vld [vmem:[%s208 + $0xc] sm:$0xe]
      %v929 = vld [vmem:[%s208 + $0x18] sm:$0xe]
      %v930 = vld [vmem:[%s208 + $0x24] sm:$0xe]
      %v931 = vld [vmem:[%s208 + $0x30] sm:$0xe]
      %v932 = vld [vmem:[%s208 + $0x3c] sm:$0xe]
      %v933 = vld [vmem:[%s208 + $0x48] sm:$0xe]
      %v934 = vld [vmem:[%s208 + $0x54] sm:$0xe]
      %v935 = vld [vmem:[%s208 + $0x60] sm:$0xe]
      %v936 = vld [vmem:[%s208 + $0x6c] sm:$0xe]
      %v937 = vld [vmem:[%s208 + $0x78] sm:$0xe]
      %v938 = vld [vmem:[%s208 + $0x84] sm:$0xe]
      %v939 = vld [vmem:[%s208 + $0x90] sm:$0xe]
      %v940 = vld [vmem:[%s208 + $0x9c] sm:$0xe]
      %v941 = vld [vmem:[%s208 + $0xa8] sm:$0xe]
      %v942 = vld [vmem:[%s208 + $0xb4] sm:$0xe]
      %v943 = vunpack.c.l.bf16 %v927
      %v944 = vunpack.c.l.bf16 %v928
      %v945 = vunpack.c.l.bf16 %v929
      %v946 = vunpack.c.l.bf16 %v930
      %v947 = vunpack.c.l.bf16 %v931
      %v948 = vunpack.c.l.bf16 %v932
      %v949 = vunpack.c.l.bf16 %v933
      %v950 = vunpack.c.l.bf16 %v934
      %v951 = vunpack.c.l.bf16 %v935
      %v952 = vunpack.c.l.bf16 %v936
      %v953 = vunpack.c.l.bf16 %v937
      %v954 = vunpack.c.l.bf16 %v938
      %v955 = vunpack.c.l.bf16 %v939
      %v956 = vunpack.c.l.bf16 %v940
      %v957 = vunpack.c.l.bf16 %v941
      %v958 = vunpack.c.l.bf16 %v942
      %vm975 = vcmask 1045504
      %v976 = vrot.slane %v943, 2
      %v977 = vrot.slane %v242, 2
      %v978 = vsel %vm975, %v976, %v977
      %v979 = vrot.slane %v306, 2
      %v980 = vsel %vm975, %v977, %v979
      %v981 = vrot.slane %v944, 2
      %v982 = vrot.slane %v244, 2
      %v983 = vsel %vm975, %v981, %v982
      %v984 = vrot.slane %v307, 2
      %v985 = vsel %vm975, %v982, %v984
      %v986 = vrot.slane %v945, 2
      %v987 = vrot.slane %v246, 2
      %v988 = vsel %vm975, %v986, %v987
      %v989 = vrot.slane %v308, 2
      %v990 = vsel %vm975, %v987, %v989
      %v991 = vrot.slane %v946, 2
      %v992 = vrot.slane %v248, 2
      %v993 = vsel %vm975, %v991, %v992
      %v994 = vrot.slane %v309, 2
      %v995 = vsel %vm975, %v992, %v994
      %v996 = vrot.slane %v947, 2
      %v997 = vrot.slane %v250, 2
      %v998 = vsel %vm975, %v996, %v997
      %v999 = vrot.slane %v310, 2
      %v1000 = vsel %vm975, %v997, %v999
      %v1001 = vrot.slane %v948, 2
      %v1002 = vrot.slane %v252, 2
      %v1003 = vsel %vm975, %v1001, %v1002
      %v1004 = vrot.slane %v311, 2
      %v1005 = vsel %vm975, %v1002, %v1004
      %v1006 = vrot.slane %v949, 2
      %v1007 = vrot.slane %v254, 2
      %v1008 = vsel %vm975, %v1006, %v1007
      %v1009 = vrot.slane %v312, 2
      %v1010 = vsel %vm975, %v1007, %v1009
      %v1011 = vrot.slane %v950, 2
      %v1012 = vrot.slane %v256, 2
      %v1013 = vsel %vm975, %v1011, %v1012
      %v1014 = vrot.slane %v313, 2
      %v1015 = vsel %vm975, %v1012, %v1014
      %v1016 = vrot.slane %v951, 2
      %v1017 = vrot.slane %v258, 2
      %v1018 = vsel %vm975, %v1016, %v1017
      %v1019 = vrot.slane %v314, 2
      %v1020 = vsel %vm975, %v1017, %v1019
      %v1021 = vrot.slane %v952, 2
      %v1022 = vrot.slane %v260, 2
      %v1023 = vsel %vm975, %v1021, %v1022
      %v1024 = vrot.slane %v315, 2
      %v1025 = vsel %vm975, %v1022, %v1024
      %v1026 = vrot.slane %v953, 2
      %v1027 = vrot.slane %v262, 2
      %v1028 = vsel %vm975, %v1026, %v1027
      %v1029 = vrot.slane %v316, 2
      %v1030 = vsel %vm975, %v1027, %v1029
      %v1031 = vrot.slane %v954, 2
      %v1032 = vrot.slane %v264, 2
      %v1033 = vsel %vm975, %v1031, %v1032
      %v1034 = vrot.slane %v317, 2
      %v1035 = vsel %vm975, %v1032, %v1034
      %v1036 = vrot.slane %v955, 2
      %v1037 = vrot.slane %v266, 2
      %v1038 = vsel %vm975, %v1036, %v1037
      %v1039 = vrot.slane %v318, 2
      %v1040 = vsel %vm975, %v1037, %v1039
      %v1041 = vrot.slane %v956, 2
      %v1042 = vrot.slane %v268, 2
      %v1043 = vsel %vm975, %v1041, %v1042
      %v1044 = vrot.slane %v319, 2
      %v1045 = vsel %vm975, %v1042, %v1044
      %v1046 = vrot.slane %v957, 2
      %v1047 = vrot.slane %v270, 2
      %v1048 = vsel %vm975, %v1046, %v1047
      %v1049 = vrot.slane %v320, 2
      %v1050 = vsel %vm975, %v1047, %v1049
      %v1051 = vrot.slane %v958, 2
      %v1052 = vrot.slane %v272, 2
      %v1053 = vsel %vm975, %v1051, %v1052
      %v1054 = vrot.slane %v321, 2
      %v1055 = vsel %vm975, %v1052, %v1054
      %v1088 = vpack.c.bf16 %v980, %v978
      %v1089 = vpack.c.bf16 %v985, %v983
      %v1090 = vpack.c.bf16 %v990, %v988
      %v1091 = vpack.c.bf16 %v995, %v993
      %v1092 = vpack.c.bf16 %v1000, %v998
      %v1093 = vpack.c.bf16 %v1005, %v1003
      %v1094 = vpack.c.bf16 %v1010, %v1008
      %v1095 = vpack.c.bf16 %v1015, %v1013
      %v1096 = vpack.c.bf16 %v1020, %v1018
      %v1097 = vpack.c.bf16 %v1025, %v1023
      %v1098 = vpack.c.bf16 %v1030, %v1028
      %v1099 = vpack.c.bf16 %v1035, %v1033
      %v1100 = vpack.c.bf16 %v1040, %v1038
      %v1101 = vpack.c.bf16 %v1045, %v1043
      %v1102 = vpack.c.bf16 %v1050, %v1048
      %v1103 = vpack.c.bf16 %v1055, %v1053
      %s1104 = scalar_lea.vmem %s1, 4
      %v1105 = vld [vmem:[%s1104] sm:$0x3]
      %v1107 = vsel %vm501, %v1088, 0
      %v1110 = vsel %vm501, %v1089, 0
      %v1113 = vsel %vm501, %v1090, 0
      %v1116 = vsel %vm501, %v1091, 0
      %v1119 = vsel %vm501, %v1092, 0
      %v1122 = vsel %vm501, %v1093, 0
      %v1125 = vsel %vm501, %v1094, 0
      %v1128 = vsel %vm501, %v1095, 0
      %v1131 = vsel %vm501, %v1096, 0
      %v1134 = vsel %vm501, %v1097, 0
      %v1137 = vsel %vm501, %v1098, 0
      %v1140 = vsel %vm501, %v1099, 0
      %v1143 = vsel %vm501, %v1100, 0
      %v1146 = vsel %vm501, %v1101, 0
      %v1149 = vsel %vm501, %v1102, 0
      %v1152 = vsel %vm501, %v1103, 0
      %v1155 = vsel %vm550, %v1105, 0
      %1157 = vmatprep.subr.bf16.mxu0 0
      %1158 = vmatpush1.bf16.msra.mxu0 %v1155
      %1159 = vmatprep.subr.bf16.mxu0 0
      %1160 = vmatpush1.bf16.msra.mxu0 0
      %1161 = vmatprep.subr.bf16.mxu0 0
      %1162 = vmatpush1.bf16.msra.mxu0 0
      %1163 = vmatprep.subr.bf16.mxu0 0
      %1164 = vmatpush1.bf16.msra.mxu0 0
      %1165 = vmatprep.subr.bf16.mxu0 0
      %1166 = vmatpush1.bf16.msra.mxu0 0
      %1167 = vmatprep.subr.bf16.mxu0 0
      %1168 = vmatpush1.bf16.msra.mxu0 0
      %1169 = vmatprep.subr.bf16.mxu0 0
      %1170 = vmatpush1.bf16.msra.mxu0 0
      %1171 = vmatprep.subr.bf16.mxu0 0
      %1172 = vmatpush1.bf16.msra.mxu0 0
      %1173 = vmatprep.subr.bf16.mxu0 0
      %1174 = vmatpush1.bf16.msra.mxu0 0
      %1175 = vmatprep.subr.bf16.mxu0 0
      %1176 = vmatpush1.bf16.msra.mxu0 0
      %1177 = vmatprep.subr.bf16.mxu0 0
      %1178 = vmatpush1.bf16.msra.mxu0 0
      %1179 = vmatprep.subr.bf16.mxu0 0
      %1180 = vmatpush1.bf16.msra.mxu0 0
      %1181 = vmatprep.subr.bf16.mxu0 0
      %1182 = vmatpush1.bf16.msra.mxu0 0
      %1183 = vmatprep.subr.bf16.mxu0 0
      %1184 = vmatpush1.bf16.msra.mxu0 0
      %1185 = vmatprep.subr.bf16.mxu0 0
      %1186 = vmatpush1.bf16.msra.mxu0 0
      %1187 = vmatprep.subr.bf16.mxu0 0
      %1188 = vmatpush1.bf16.msra.mxu0 0
      %1189 = vmatprep.mubr.bf16.mxu0 0
      %1190 = vmatmul.mubr.bf16.gmra.mrb[0].mxu0 %v1107
      %v1191 = vpop.f32.mrb[0].mxu0
      %v1192 = vadd.f32 0.0, %v1191
      %v1193 = vpop.f32.mrb[0].mxu0
      %v1194 = vpop.f32.mrb[0].mxu0
      %v1195 = vadd.f32 0.0, %v1194
      %v1196 = vpop.f32.mrb[0].mxu0
      %1197 = vmatprep.mubr.bf16.mxu0 0
      %1198 = vmatmul.mubr.bf16.gmra.mrb[0].mxu0 %v1110
      %v1199 = vpop.f32.mrb[0].mxu0
      %v1200 = vadd.f32 0.0, %v1199
      %v1201 = vpop.f32.mrb[0].mxu0
      %v1202 = vpop.f32.mrb[0].mxu0
      %v1203 = vadd.f32 0.0, %v1202
      %v1204 = vpop.f32.mrb[0].mxu0
      %1205 = vmatprep.mubr.bf16.mxu0 0
      %1206 = vmatmul.mubr.bf16.gmra.mrb[0].mxu0 %v1113
      %v1207 = vpop.f32.mrb[0].mxu0
      %v1208 = vadd.f32 0.0, %v1207
      %v1209 = vpop.f32.mrb[0].mxu0
      %v1210 = vpop.f32.mrb[0].mxu0
      %v1211 = vadd.f32 0.0, %v1210
      %v1212 = vpop.f32.mrb[0].mxu0
      %1213 = vmatprep.mubr.bf16.mxu0 0
      %1214 = vmatmul.mubr.bf16.gmra.mrb[0].mxu0 %v1116
      %v1215 = vpop.f32.mrb[0].mxu0
      %v1216 = vadd.f32 0.0, %v1215
      %v1217 = vpop.f32.mrb[0].mxu0
      %v1218 = vpop.f32.mrb[0].mxu0
      %v1219 = vadd.f32 0.0, %v1218
      %v1220 = vpop.f32.mrb[0].mxu0
      %1221 = vmatprep.mubr.bf16.mxu0 0
      %1222 = vmatmul.mubr.bf16.gmra.mrb[0].mxu0 %v1119
      %v1223 = vpop.f32.mrb[0].mxu0
      %v1224 = vadd.f32 0.0, %v1223
      %v1225 = vpop.f32.mrb[0].mxu0
      %v1226 = vpop.f32.mrb[0].mxu0
      %v1227 = vadd.f32 0.0, %v1226
      %v1228 = vpop.f32.mrb[0].mxu0
      %1229 = vmatprep.mubr.bf16.mxu0 0
      %1230 = vmatmul.mubr.bf16.gmra.mrb[0].mxu0 %v1122
      %v1231 = vpop.f32.mrb[0].mxu0
      %v1232 = vadd.f32 0.0, %v1231
      %v1233 = vpop.f32.mrb[0].mxu0
      %v1234 = vpop.f32.mrb[0].mxu0
      %v1235 = vadd.f32 0.0, %v1234
      %v1236 = vpop.f32.mrb[0].mxu0
      %1237 = vmatprep.mubr.bf16.mxu0 0
      %1238 = vmatmul.mubr.bf16.gmra.mrb[0].mxu0 %v1125
      %v1239 = vpop.f32.mrb[0].mxu0
      %v1240 = vadd.f32 0.0, %v1239
      %v1241 = vpop.f32.mrb[0].mxu0
      %v1242 = vpop.f32.mrb[0].mxu0
      %v1243 = vadd.f32 0.0, %v1242
      %v1244 = vpop.f32.mrb[0].mxu0
      %1245 = vmatprep.mubr.bf16.mxu0 0
      %1246 = vmatmul.mubr.bf16.gmra.mrb[0].mxu0 %v1128
      %v1247 = vpop.f32.mrb[0].mxu0
      %v1248 = vadd.f32 0.0, %v1247
      %v1249 = vpop.f32.mrb[0].mxu0
      %v1250 = vpop.f32.mrb[0].mxu0
      %v1251 = vadd.f32 0.0, %v1250
      %v1252 = vpop.f32.mrb[0].mxu0
      %1253 = vmatprep.mubr.bf16.mxu0 0
      %1254 = vmatmul.mubr.bf16.gmra.mrb[0].mxu0 %v1131
      %v1255 = vpop.f32.mrb[0].mxu0
      %v1256 = vadd.f32 0.0, %v1255
      %v1257 = vpop.f32.mrb[0].mxu0
      %v1258 = vpop.f32.mrb[0].mxu0
      %v1259 = vadd.f32 0.0, %v1258
      %v1260 = vpop.f32.mrb[0].mxu0
      %1261 = vmatprep.mubr.bf16.mxu0 0
      %1262 = vmatmul.mubr.bf16.gmra.mrb[0].mxu0 %v1134
      %v1263 = vpop.f32.mrb[0].mxu0
      %v1264 = vadd.f32 0.0, %v1263
      %v1265 = vpop.f32.mrb[0].mxu0
      %v1266 = vpop.f32.mrb[0].mxu0
      %v1267 = vadd.f32 0.0, %v1266
      %v1268 = vpop.f32.mrb[0].mxu0
      %1269 = vmatprep.mubr.bf16.mxu0 0
      %1270 = vmatmul.mubr.bf16.gmra.mrb[0].mxu0 %v1137
      %v1271 = vpop.f32.mrb[0].mxu0
      %v1272 = vadd.f32 0.0, %v1271
      %v1273 = vpop.f32.mrb[0].mxu0
      %v1274 = vpop.f32.mrb[0].mxu0
      %v1275 = vadd.f32 0.0, %v1274
      %v1276 = vpop.f32.mrb[0].mxu0
      %1277 = vmatprep.mubr.bf16.mxu0 0
      %1278 = vmatmul.mubr.bf16.gmra.mrb[0].mxu0 %v1140
      %v1279 = vpop.f32.mrb[0].mxu0
      %v1280 = vadd.f32 0.0, %v1279
      %v1281 = vpop.f32.mrb[0].mxu0
      %v1282 = vpop.f32.mrb[0].mxu0
      %v1283 = vadd.f32 0.0, %v1282
      %v1284 = vpop.f32.mrb[0].mxu0
      %1285 = vmatprep.mubr.bf16.mxu0 0
      %1286 = vmatmul.mubr.bf16.gmra.mrb[0].mxu0 %v1143
      %v1287 = vpop.f32.mrb[0].mxu0
      %v1288 = vadd.f32 0.0, %v1287
      %v1289 = vpop.f32.mrb[0].mxu0
      %v1290 = vpop.f32.mrb[0].mxu0
      %v1291 = vadd.f32 0.0, %v1290
      %v1292 = vpop.f32.mrb[0].mxu0
      %1293 = vmatprep.mubr.bf16.mxu0 0
      %1294 = vmatmul.mubr.bf16.gmra.mrb[0].mxu0 %v1146
      %v1295 = vpop.f32.mrb[0].mxu0
      %v1296 = vadd.f32 0.0, %v1295
      %v1297 = vpop.f32.mrb[0].mxu0
      %v1298 = vpop.f32.mrb[0].mxu0
      %v1299 = vadd.f32 0.0, %v1298
      %v1300 = vpop.f32.mrb[0].mxu0
      %1301 = vmatprep.mubr.bf16.mxu0 0
      %1302 = vmatmul.mubr.bf16.gmra.mrb[0].mxu0 %v1149
      %v1303 = vpop.f32.mrb[0].mxu0
      %v1304 = vadd.f32 0.0, %v1303
      %v1305 = vpop.f32.mrb[0].mxu0
      %v1306 = vpop.f32.mrb[0].mxu0
      %v1307 = vadd.f32 0.0, %v1306
      %v1308 = vpop.f32.mrb[0].mxu0
      %1309 = vmatprep.mubr.bf16.mxu0 0
      %1310 = vmatmul.mubr.bf16.gmra.mrb[0].mxu0 %v1152
      %v1311 = vpop.f32.mrb[0].mxu0
      %v1312 = vadd.f32 0.0, %v1311
      %v1313 = vpop.f32.mrb[0].mxu0
      %v1314 = vpop.f32.mrb[0].mxu0
      %v1315 = vadd.f32 0.0, %v1314
      %v1316 = vpop.f32.mrb[0].mxu0
      %1317 = vdwg.mxu0
      %v1318 = vadd.f32 %v801, %v1192
      %v1319 = vadd.f32 %v804, %v1195
      %v1320 = vadd.f32 %v809, %v1200
      %v1321 = vadd.f32 %v812, %v1203
      %v1322 = vadd.f32 %v817, %v1208
      %v1323 = vadd.f32 %v820, %v1211
      %v1324 = vadd.f32 %v825, %v1216
      %v1325 = vadd.f32 %v828, %v1219
      %v1326 = vadd.f32 %v833, %v1224
      %v1327 = vadd.f32 %v836, %v1227
      %v1328 = vadd.f32 %v841, %v1232
      %v1329 = vadd.f32 %v844, %v1235
      %v1330 = vadd.f32 %v849, %v1240
      %v1331 = vadd.f32 %v852, %v1243
      %v1332 = vadd.f32 %v857, %v1248
      %v1333 = vadd.f32 %v860, %v1251
      %v1334 = vadd.f32 %v865, %v1256
      %v1335 = vadd.f32 %v868, %v1259
      %v1336 = vadd.f32 %v873, %v1264
      %v1337 = vadd.f32 %v876, %v1267
      %v1338 = vadd.f32 %v881, %v1272
      %v1339 = vadd.f32 %v884, %v1275
      %v1340 = vadd.f32 %v889, %v1280
      %v1341 = vadd.f32 %v892, %v1283
      %v1342 = vadd.f32 %v897, %v1288
      %v1343 = vadd.f32 %v900, %v1291
      %v1344 = vadd.f32 %v905, %v1296
      %v1345 = vadd.f32 %v908, %v1299
      %v1346 = vadd.f32 %v913, %v1304
      %v1347 = vadd.f32 %v916, %v1307
      %v1348 = vadd.f32 %v921, %v1312
      %v1349 = vadd.f32 %v924, %v1315
      %s1350 = sadd.s32 %s205, 1
      %s1351 = smul.u32 %s1350, 3
      %s1352 = smul.addr %s1351, 4
      %s1353 = scalar_lea.vmem %s190, %s1352
      %v1354 = vld [vmem:[%s1353] sm:$0xf]
      %v1355 = vld [vmem:[%s1353 + $0x4] sm:$0xf]
      %v1356 = vld [vmem:[%s1353 + $0xc] sm:$0xf]
      %v1357 = vld [vmem:[%s1353 + $0x10] sm:$0xf]
      %v1358 = vld [vmem:[%s1353 + $0x18] sm:$0xf]
      %v1359 = vld [vmem:[%s1353 + $0x1c] sm:$0xf]
      %v1360 = vld [vmem:[%s1353 + $0x24] sm:$0xf]
      %v1361 = vld [vmem:[%s1353 + $0x28] sm:$0xf]
      %v1362 = vld [vmem:[%s1353 + $0x30] sm:$0xf]
      %v1363 = vld [vmem:[%s1353 + $0x34] sm:$0xf]
      %v1364 = vld [vmem:[%s1353 + $0x3c] sm:$0xf]
      %v1365 = vld [vmem:[%s1353 + $0x40] sm:$0xf]
      %v1366 = vld [vmem:[%s1353 + $0x48] sm:$0xf]
      %v1367 = vld [vmem:[%s1353 + $0x4c] sm:$0xf]
      %v1368 = vld [vmem:[%s1353 + $0x54] sm:$0xf]
      %v1369 = vld [vmem:[%s1353 + $0x58] sm:$0xf]
      %v1370 = vld [vmem:[%s1353 + $0x60] sm:$0xf]
      %v1371 = vld [vmem:[%s1353 + $0x64] sm:$0xf]
      %v1372 = vld [vmem:[%s1353 + $0x6c] sm:$0xf]
      %v1373 = vld [vmem:[%s1353 + $0x70] sm:$0xf]
      %v1374 = vld [vmem:[%s1353 + $0x78] sm:$0xf]
      %v1375 = vld [vmem:[%s1353 + $0x7c] sm:$0xf]
      %v1376 = vld [vmem:[%s1353 + $0x84] sm:$0xf]
      %v1377 = vld [vmem:[%s1353 + $0x88] sm:$0xf]
      %v1378 = vld [vmem:[%s1353 + $0x90] sm:$0xf]
      %v1379 = vld [vmem:[%s1353 + $0x94] sm:$0xf]
      %v1380 = vld [vmem:[%s1353 + $0x9c] sm:$0xf]
      %v1381 = vld [vmem:[%s1353 + $0xa0] sm:$0xf]
      %v1382 = vld [vmem:[%s1353 + $0xa8] sm:$0xf]
      %v1383 = vld [vmem:[%s1353 + $0xac] sm:$0xf]
      %v1384 = vld [vmem:[%s1353 + $0xb4] sm:$0xf]
      %v1385 = vld [vmem:[%s1353 + $0xb8] sm:$0xf]
      %v1386 = vunpack.c.l.bf16 %v1354
      %v1387 = vunpack.c.l.bf16 %v1355
      %v1388 = vunpack.c.l.bf16 %v1356
      %v1389 = vunpack.c.l.bf16 %v1357
      %v1390 = vunpack.c.l.bf16 %v1358
      %v1391 = vunpack.c.l.bf16 %v1359
      %v1392 = vunpack.c.l.bf16 %v1360
      %v1393 = vunpack.c.l.bf16 %v1361
      %v1394 = vunpack.c.l.bf16 %v1362
      %v1395 = vunpack.c.l.bf16 %v1363
      %v1396 = vunpack.c.l.bf16 %v1364
      %v1397 = vunpack.c.l.bf16 %v1365
      %v1398 = vunpack.c.l.bf16 %v1366
      %v1399 = vunpack.c.l.bf16 %v1367
      %v1400 = vunpack.c.l.bf16 %v1368
      %v1401 = vunpack.c.l.bf16 %v1369
      %v1402 = vunpack.c.l.bf16 %v1370
      %v1403 = vunpack.c.l.bf16 %v1371
      %v1404 = vunpack.c.l.bf16 %v1372
      %v1405 = vunpack.c.l.bf16 %v1373
      %v1406 = vunpack.c.l.bf16 %v1374
      %v1407 = vunpack.c.l.bf16 %v1375
      %v1408 = vunpack.c.l.bf16 %v1376
      %v1409 = vunpack.c.l.bf16 %v1377
      %v1410 = vunpack.c.l.bf16 %v1378
      %v1411 = vunpack.c.l.bf16 %v1379
      %v1412 = vunpack.c.l.bf16 %v1380
      %v1413 = vunpack.c.l.bf16 %v1381
      %v1414 = vunpack.c.l.bf16 %v1382
      %v1415 = vunpack.c.l.bf16 %v1383
      %v1416 = vunpack.c.l.bf16 %v1384
      %v1417 = vunpack.c.l.bf16 %v1385
      %v1418 = vpack.c.bf16 %v1387, %v1386
      %v1419 = vpack.c.bf16 %v1389, %v1388
      %v1420 = vpack.c.bf16 %v1391, %v1390
      %v1421 = vpack.c.bf16 %v1393, %v1392
      %v1422 = vpack.c.bf16 %v1395, %v1394
      %v1423 = vpack.c.bf16 %v1397, %v1396
      %v1424 = vpack.c.bf16 %v1399, %v1398
      %v1425 = vpack.c.bf16 %v1401, %v1400
      %v1426 = vpack.c.bf16 %v1403, %v1402
      %v1427 = vpack.c.bf16 %v1405, %v1404
      %v1428 = vpack.c.bf16 %v1407, %v1406
      %v1429 = vpack.c.bf16 %v1409, %v1408
      %v1430 = vpack.c.bf16 %v1411, %v1410
      %v1431 = vpack.c.bf16 %v1413, %v1412
      %v1432 = vpack.c.bf16 %v1415, %v1414
      %v1433 = vpack.c.bf16 %v1417, %v1416
      %s1434 = scalar_lea.vmem %s1, 6
      %v1435 = vld [vmem:[%s1434] sm:$0x3]
      %v1437 = vsel %vm501, %v1418, 0
      %v1440 = vsel %vm501, %v1419, 0
      %v1443 = vsel %vm501, %v1420, 0
      %v1446 = vsel %vm501, %v1421, 0
      %v1449 = vsel %vm501, %v1422, 0
      %v1452 = vsel %vm501, %v1423, 0
      %v1455 = vsel %vm501, %v1424, 0
      %v1458 = vsel %vm501, %v1425, 0
      %v1461 = vsel %vm501, %v1426, 0
      %v1464 = vsel %vm501, %v1427, 0
      %v1467 = vsel %vm501, %v1428, 0
      %v1470 = vsel %vm501, %v1429, 0
      %v1473 = vsel %vm501, %v1430, 0
      %v1476 = vsel %vm501, %v1431, 0
      %v1479 = vsel %vm501, %v1432, 0
      %v1482 = vsel %vm501, %v1433, 0
      %v1485 = vsel %vm550, %v1435, 0
      %1487 = vmatprep.subr.bf16.mxu0 0
      %1488 = vmatpush1.bf16.msra.mxu0 %v1485
      %1489 = vmatprep.subr.bf16.mxu0 0
      %1490 = vmatpush1.bf16.msra.mxu0 0
      %1491 = vmatprep.subr.bf16.mxu0 0
      %1492 = vmatpush1.bf16.msra.mxu0 0
      %1493 = vmatprep.subr.bf16.mxu0 0
      %1494 = vmatpush1.bf16.msra.mxu0 0
      %1495 = vmatprep.subr.bf16.mxu0 0
      %1496 = vmatpush1.bf16.msra.mxu0 0
      %1497 = vmatprep.subr.bf16.mxu0 0
      %1498 = vmatpush1.bf16.msra.mxu0 0
      %1499 = vmatprep.subr.bf16.mxu0 0
      %1500 = vmatpush1.bf16.msra.mxu0 0
      %1501 = vmatprep.subr.bf16.mxu0 0
      %1502 = vmatpush1.bf16.msra.mxu0 0
      %1503 = vmatprep.subr.bf16.mxu0 0
      %1504 = vmatpush1.bf16.msra.mxu0 0
      %1505 = vmatprep.subr.bf16.mxu0 0
      %1506 = vmatpush1.bf16.msra.mxu0 0
      %1507 = vmatprep.subr.bf16.mxu0 0
      %1508 = vmatpush1.bf16.msra.mxu0 0
      %1509 = vmatprep.subr.bf16.mxu0 0
      %1510 = vmatpush1.bf16.msra.mxu0 0
      %1511 = vmatprep.subr.bf16.mxu0 0
      %1512 = vmatpush1.bf16.msra.mxu0 0
      %1513 = vmatprep.subr.bf16.mxu0 0
      %1514 = vmatpush1.bf16.msra.mxu0 0
      %1515 = vmatprep.subr.bf16.mxu0 0
      %1516 = vmatpush1.bf16.msra.mxu0 0
      %1517 = vmatprep.subr.bf16.mxu0 0
      %1518 = vmatpush1.bf16.msra.mxu0 0
      %1519 = vmatprep.mubr.bf16.mxu0 0
      %1520 = vmatmul.mubr.bf16.gmra.mrb[0].mxu0 %v1437
      %v1521 = vpop.f32.mrb[0].mxu0
      %v1522 = vadd.f32 0.0, %v1521
      %v1523 = vpop.f32.mrb[0].mxu0
      %v1524 = vpop.f32.mrb[0].mxu0
      %v1525 = vadd.f32 0.0, %v1524
      %v1526 = vpop.f32.mrb[0].mxu0
      %1527 = vmatprep.mubr.bf16.mxu0 0
      %1528 = vmatmul.mubr.bf16.gmra.mrb[0].mxu0 %v1440
      %v1529 = vpop.f32.mrb[0].mxu0
      %v1530 = vadd.f32 0.0, %v1529
      %v1531 = vpop.f32.mrb[0].mxu0
      %v1532 = vpop.f32.mrb[0].mxu0
      %v1533 = vadd.f32 0.0, %v1532
      %v1534 = vpop.f32.mrb[0].mxu0
      %1535 = vmatprep.mubr.bf16.mxu0 0
      %1536 = vmatmul.mubr.bf16.gmra.mrb[0].mxu0 %v1443
      %v1537 = vpop.f32.mrb[0].mxu0
      %v1538 = vadd.f32 0.0, %v1537
      %v1539 = vpop.f32.mrb[0].mxu0
      %v1540 = vpop.f32.mrb[0].mxu0
      %v1541 = vadd.f32 0.0, %v1540
      %v1542 = vpop.f32.mrb[0].mxu0
      %1543 = vmatprep.mubr.bf16.mxu0 0
      %1544 = vmatmul.mubr.bf16.gmra.mrb[0].mxu0 %v1446
      %v1545 = vpop.f32.mrb[0].mxu0
      %v1546 = vadd.f32 0.0, %v1545
      %v1547 = vpop.f32.mrb[0].mxu0
      %v1548 = vpop.f32.mrb[0].mxu0
      %v1549 = vadd.f32 0.0, %v1548
      %v1550 = vpop.f32.mrb[0].mxu0
      %1551 = vmatprep.mubr.bf16.mxu0 0
      %1552 = vmatmul.mubr.bf16.gmra.mrb[0].mxu0 %v1449
      %v1553 = vpop.f32.mrb[0].mxu0
      %v1554 = vadd.f32 0.0, %v1553
      %v1555 = vpop.f32.mrb[0].mxu0
      %v1556 = vpop.f32.mrb[0].mxu0
      %v1557 = vadd.f32 0.0, %v1556
      %v1558 = vpop.f32.mrb[0].mxu0
      %1559 = vmatprep.mubr.bf16.mxu0 0
      %1560 = vmatmul.mubr.bf16.gmra.mrb[0].mxu0 %v1452
      %v1561 = vpop.f32.mrb[0].mxu0
      %v1562 = vadd.f32 0.0, %v1561
      %v1563 = vpop.f32.mrb[0].mxu0
      %v1564 = vpop.f32.mrb[0].mxu0
      %v1565 = vadd.f32 0.0, %v1564
      %v1566 = vpop.f32.mrb[0].mxu0
      %1567 = vmatprep.mubr.bf16.mxu0 0
      %1568 = vmatmul.mubr.bf16.gmra.mrb[0].mxu0 %v1455
      %v1569 = vpop.f32.mrb[0].mxu0
      %v1570 = vadd.f32 0.0, %v1569
      %v1571 = vpop.f32.mrb[0].mxu0
      %v1572 = vpop.f32.mrb[0].mxu0
      %v1573 = vadd.f32 0.0, %v1572
      %v1574 = vpop.f32.mrb[0].mxu0
      %1575 = vmatprep.mubr.bf16.mxu0 0
      %1576 = vmatmul.mubr.bf16.gmra.mrb[0].mxu0 %v1458
      %v1577 = vpop.f32.mrb[0].mxu0
      %v1578 = vadd.f32 0.0, %v1577
      %v1579 = vpop.f32.mrb[0].mxu0
      %v1580 = vpop.f32.mrb[0].mxu0
      %v1581 = vadd.f32 0.0, %v1580
      %v1582 = vpop.f32.mrb[0].mxu0
      %1583 = vmatprep.mubr.bf16.mxu0 0
      %1584 = vmatmul.mubr.bf16.gmra.mrb[0].mxu0 %v1461
      %v1585 = vpop.f32.mrb[0].mxu0
      %v1586 = vadd.f32 0.0, %v1585
      %v1587 = vpop.f32.mrb[0].mxu0
      %v1588 = vpop.f32.mrb[0].mxu0
      %v1589 = vadd.f32 0.0, %v1588
      %v1590 = vpop.f32.mrb[0].mxu0
      %1591 = vmatprep.mubr.bf16.mxu0 0
      %1592 = vmatmul.mubr.bf16.gmra.mrb[0].mxu0 %v1464
      %v1593 = vpop.f32.mrb[0].mxu0
      %v1594 = vadd.f32 0.0, %v1593
      %v1595 = vpop.f32.mrb[0].mxu0
      %v1596 = vpop.f32.mrb[0].mxu0
      %v1597 = vadd.f32 0.0, %v1596
      %v1598 = vpop.f32.mrb[0].mxu0
      %1599 = vmatprep.mubr.bf16.mxu0 0
      %1600 = vmatmul.mubr.bf16.gmra.mrb[0].mxu0 %v1467
      %v1601 = vpop.f32.mrb[0].mxu0
      %v1602 = vadd.f32 0.0, %v1601
      %v1603 = vpop.f32.mrb[0].mxu0
      %v1604 = vpop.f32.mrb[0].mxu0
      %v1605 = vadd.f32 0.0, %v1604
      %v1606 = vpop.f32.mrb[0].mxu0
      %1607 = vmatprep.mubr.bf16.mxu0 0
      %1608 = vmatmul.mubr.bf16.gmra.mrb[0].mxu0 %v1470
      %v1609 = vpop.f32.mrb[0].mxu0
      %v1610 = vadd.f32 0.0, %v1609
      %v1611 = vpop.f32.mrb[0].mxu0
      %v1612 = vpop.f32.mrb[0].mxu0
      %v1613 = vadd.f32 0.0, %v1612
      %v1614 = vpop.f32.mrb[0].mxu0
      %1615 = vmatprep.mubr.bf16.mxu0 0
      %1616 = vmatmul.mubr.bf16.gmra.mrb[0].mxu0 %v1473
      %v1617 = vpop.f32.mrb[0].mxu0
      %v1618 = vadd.f32 0.0, %v1617
      %v1619 = vpop.f32.mrb[0].mxu0
      %v1620 = vpop.f32.mrb[0].mxu0
      %v1621 = vadd.f32 0.0, %v1620
      %v1622 = vpop.f32.mrb[0].mxu0
      %1623 = vmatprep.mubr.bf16.mxu0 0
      %1624 = vmatmul.mubr.bf16.gmra.mrb[0].mxu0 %v1476
      %v1625 = vpop.f32.mrb[0].mxu0
      %v1626 = vadd.f32 0.0, %v1625
      %v1627 = vpop.f32.mrb[0].mxu0
      %v1628 = vpop.f32.mrb[0].mxu0
      %v1629 = vadd.f32 0.0, %v1628
      %v1630 = vpop.f32.mrb[0].mxu0
      %1631 = vmatprep.mubr.bf16.mxu0 0
      %1632 = vmatmul.mubr.bf16.gmra.mrb[0].mxu0 %v1479
      %v1633 = vpop.f32.mrb[0].mxu0
      %v1634 = vadd.f32 0.0, %v1633
      %v1635 = vpop.f32.mrb[0].mxu0
      %v1636 = vpop.f32.mrb[0].mxu0
      %v1637 = vadd.f32 0.0, %v1636
      %v1638 = vpop.f32.mrb[0].mxu0
      %1639 = vmatprep.mubr.bf16.mxu0 0
      %1640 = vmatmul.mubr.bf16.gmra.mrb[0].mxu0 %v1482
      %v1641 = vpop.f32.mrb[0].mxu0
      %v1642 = vadd.f32 0.0, %v1641
      %v1643 = vpop.f32.mrb[0].mxu0
      %v1644 = vpop.f32.mrb[0].mxu0
      %v1645 = vadd.f32 0.0, %v1644
      %v1646 = vpop.f32.mrb[0].mxu0
      %1647 = vdwg.mxu0
      %v1648 = vadd.f32 %v1318, %v1522
      %v1649 = vadd.f32 %v1319, %v1525
      %v1650 = vadd.f32 %v1320, %v1530
      %v1651 = vadd.f32 %v1321, %v1533
      %v1652 = vadd.f32 %v1322, %v1538
      %v1653 = vadd.f32 %v1323, %v1541
      %v1654 = vadd.f32 %v1324, %v1546
      %v1655 = vadd.f32 %v1325, %v1549
      %v1656 = vadd.f32 %v1326, %v1554
      %v1657 = vadd.f32 %v1327, %v1557
      %v1658 = vadd.f32 %v1328, %v1562
      %v1659 = vadd.f32 %v1329, %v1565
      %v1660 = vadd.f32 %v1330, %v1570
      %v1661 = vadd.f32 %v1331, %v1573
      %v1662 = vadd.f32 %v1332, %v1578
      %v1663 = vadd.f32 %v1333, %v1581
      %v1664 = vadd.f32 %v1334, %v1586
      %v1665 = vadd.f32 %v1335, %v1589
      %v1666 = vadd.f32 %v1336, %v1594
      %v1667 = vadd.f32 %v1337, %v1597
      %v1668 = vadd.f32 %v1338, %v1602
      %v1669 = vadd.f32 %v1339, %v1605
      %v1670 = vadd.f32 %v1340, %v1610
      %v1671 = vadd.f32 %v1341, %v1613
      %v1672 = vadd.f32 %v1342, %v1618
      %v1673 = vadd.f32 %v1343, %v1621
      %v1674 = vadd.f32 %v1344, %v1626
      %v1675 = vadd.f32 %v1345, %v1629
      %v1676 = vadd.f32 %v1346, %v1634
      %v1677 = vadd.f32 %v1347, %v1637
      %v1678 = vadd.f32 %v1348, %v1642
      %v1679 = vadd.f32 %v1349, %v1645
      %v1680 = vld [vmem:[%s1353] sm:$0xf]
      %v1681 = vld [vmem:[%s1353 + $0x4] sm:$0xf]
      %v1682 = vld [vmem:[%s1353 + $0x8] sm:$0x1]
      %v1683 = vld [vmem:[%s1353 + $0xc] sm:$0xf]
      %v1684 = vld [vmem:[%s1353 + $0x10] sm:$0xf]
      %v1685 = vld [vmem:[%s1353 + $0x14] sm:$0x1]
      %v1686 = vld [vmem:[%s1353 + $0x18] sm:$0xf]
      %v1687 = vld [vmem:[%s1353 + $0x1c] sm:$0xf]
      %v1688 = vld [vmem:[%s1353 + $0x20] sm:$0x1]
      %v1689 = vld [vmem:[%s1353 + $0x24] sm:$0xf]
      %v1690 = vld [vmem:[%s1353 + $0x28] sm:$0xf]
      %v1691 = vld [vmem:[%s1353 + $0x2c] sm:$0x1]
      %v1692 = vld [vmem:[%s1353 + $0x30] sm:$0xf]
      %v1693 = vld [vmem:[%s1353 + $0x34] sm:$0xf]
      %v1694 = vld [vmem:[%s1353 + $0x38] sm:$0x1]
      %v1695 = vld [vmem:[%s1353 + $0x3c] sm:$0xf]
      %v1696 = vld [vmem:[%s1353 + $0x40] sm:$0xf]
      %v1697 = vld [vmem:[%s1353 + $0x44] sm:$0x1]
      %v1698 = vld [vmem:[%s1353 + $0x48] sm:$0xf]
      %v1699 = vld [vmem:[%s1353 + $0x4c] sm:$0xf]
      %v1700 = vld [vmem:[%s1353 + $0x50] sm:$0x1]
      %v1701 = vld [vmem:[%s1353 + $0x54] sm:$0xf]
      %v1702 = vld [vmem:[%s1353 + $0x58] sm:$0xf]
      %v1703 = vld [vmem:[%s1353 + $0x5c] sm:$0x1]
      %v1704 = vld [vmem:[%s1353 + $0x60] sm:$0xf]
      %v1705 = vld [vmem:[%s1353 + $0x64] sm:$0xf]
      %v1706 = vld [vmem:[%s1353 + $0x68] sm:$0x1]
      %v1707 = vld [vmem:[%s1353 + $0x6c] sm:$0xf]
      %v1708 = vld [vmem:[%s1353 + $0x70] sm:$0xf]
      %v1709 = vld [vmem:[%s1353 + $0x74] sm:$0x1]
      %v1710 = vld [vmem:[%s1353 + $0x78] sm:$0xf]
      %v1711 = vld [vmem:[%s1353 + $0x7c] sm:$0xf]
      %v1712 = vld [vmem:[%s1353 + $0x80] sm:$0x1]
      %v1713 = vld [vmem:[%s1353 + $0x84] sm:$0xf]
      %v1714 = vld [vmem:[%s1353 + $0x88] sm:$0xf]
      %v1715 = vld [vmem:[%s1353 + $0x8c] sm:$0x1]
      %v1716 = vld [vmem:[%s1353 + $0x90] sm:$0xf]
      %v1717 = vld [vmem:[%s1353 + $0x94] sm:$0xf]
      %v1718 = vld [vmem:[%s1353 + $0x98] sm:$0x1]
      %v1719 = vld [vmem:[%s1353 + $0x9c] sm:$0xf]
      %v1720 = vld [vmem:[%s1353 + $0xa0] sm:$0xf]
      %v1721 = vld [vmem:[%s1353 + $0xa4] sm:$0x1]
      %v1722 = vld [vmem:[%s1353 + $0xa8] sm:$0xf]
      %v1723 = vld [vmem:[%s1353 + $0xac] sm:$0xf]
      %v1724 = vld [vmem:[%s1353 + $0xb0] sm:$0x1]
      %v1725 = vld [vmem:[%s1353 + $0xb4] sm:$0xf]
      %v1726 = vld [vmem:[%s1353 + $0xb8] sm:$0xf]
      %v1727 = vld [vmem:[%s1353 + $0xbc] sm:$0x1]
      %v1728 = vunpack.c.l.bf16 %v1680
      %v1729 = vunpack.c.l.bf16 %v1681
      %v1730 = vunpack.c.l.bf16 %v1682
      %v1731 = vunpack.c.l.bf16 %v1683
      %v1732 = vunpack.c.l.bf16 %v1684
      %v1733 = vunpack.c.l.bf16 %v1685
      %v1734 = vunpack.c.l.bf16 %v1686
      %v1735 = vunpack.c.l.bf16 %v1687
      %v1736 = vunpack.c.l.bf16 %v1688
      %v1737 = vunpack.c.l.bf16 %v1689
      %v1738 = vunpack.c.l.bf16 %v1690
      %v1739 = vunpack.c.l.bf16 %v1691
      %v1740 = vunpack.c.l.bf16 %v1692
      %v1741 = vunpack.c.l.bf16 %v1693
      %v1742 = vunpack.c.l.bf16 %v1694
      %v1743 = vunpack.c.l.bf16 %v1695
      %v1744 = vunpack.c.l.bf16 %v1696
      %v1745 = vunpack.c.l.bf16 %v1697
      %v1746 = vunpack.c.l.bf16 %v1698
      %v1747 = vunpack.c.l.bf16 %v1699
      %v1748 = vunpack.c.l.bf16 %v1700
      %v1749 = vunpack.c.l.bf16 %v1701
      %v1750 = vunpack.c.l.bf16 %v1702
      %v1751 = vunpack.c.l.bf16 %v1703
      %v1752 = vunpack.c.l.bf16 %v1704
      %v1753 = vunpack.c.l.bf16 %v1705
      %v1754 = vunpack.c.l.bf16 %v1706
      %v1755 = vunpack.c.l.bf16 %v1707
      %v1756 = vunpack.c.l.bf16 %v1708
      %v1757 = vunpack.c.l.bf16 %v1709
      %v1758 = vunpack.c.l.bf16 %v1710
      %v1759 = vunpack.c.l.bf16 %v1711
      %v1760 = vunpack.c.l.bf16 %v1712
      %v1761 = vunpack.c.l.bf16 %v1713
      %v1762 = vunpack.c.l.bf16 %v1714
      %v1763 = vunpack.c.l.bf16 %v1715
      %v1764 = vunpack.c.l.bf16 %v1716
      %v1765 = vunpack.c.l.bf16 %v1717
      %v1766 = vunpack.c.l.bf16 %v1718
      %v1767 = vunpack.c.l.bf16 %v1719
      %v1768 = vunpack.c.l.bf16 %v1720
      %v1769 = vunpack.c.l.bf16 %v1721
      %v1770 = vunpack.c.l.bf16 %v1722
      %v1771 = vunpack.c.l.bf16 %v1723
      %v1772 = vunpack.c.l.bf16 %v1724
      %v1773 = vunpack.c.l.bf16 %v1725
      %v1774 = vunpack.c.l.bf16 %v1726
      %v1775 = vunpack.c.l.bf16 %v1727
      %v1824 = vrot.slane %v1728, 1
      %v1825 = vrot.slane %v1729, 1
      %v1826 = vsel %vm370, %v1824, %v1825
      %v1827 = vrot.slane %v1730, 1
      %v1828 = vsel %vm370, %v1825, %v1827
      %v1829 = vrot.slane %v1731, 1
      %v1830 = vrot.slane %v1732, 1
      %v1831 = vsel %vm370, %v1829, %v1830
      %v1832 = vrot.slane %v1733, 1
      %v1833 = vsel %vm370, %v1830, %v1832
      %v1834 = vrot.slane %v1734, 1
      %v1835 = vrot.slane %v1735, 1
      %v1836 = vsel %vm370, %v1834, %v1835
      %v1837 = vrot.slane %v1736, 1
      %v1838 = vsel %vm370, %v1835, %v1837
      %v1839 = vrot.slane %v1737, 1
      %v1840 = vrot.slane %v1738, 1
      %v1841 = vsel %vm370, %v1839, %v1840
      %v1842 = vrot.slane %v1739, 1
      %v1843 = vsel %vm370, %v1840, %v1842
      %v1844 = vrot.slane %v1740, 1
      %v1845 = vrot.slane %v1741, 1
      %v1846 = vsel %vm370, %v1844, %v1845
      %v1847 = vrot.slane %v1742, 1
      %v1848 = vsel %vm370, %v1845, %v1847
      %v1849 = vrot.slane %v1743, 1
      %v1850 = vrot.slane %v1744, 1
      %v1851 = vsel %vm370, %v1849, %v1850
      %v1852 = vrot.slane %v1745, 1
      %v1853 = vsel %vm370, %v1850, %v1852
      %v1854 = vrot.slane %v1746, 1
      %v1855 = vrot.slane %v1747, 1
      %v1856 = vsel %vm370, %v1854, %v1855
      %v1857 = vrot.slane %v1748, 1
      %v1858 = vsel %vm370, %v1855, %v1857
      %v1859 = vrot.slane %v1749, 1
      %v1860 = vrot.slane %v1750, 1
      %v1861 = vsel %vm370, %v1859, %v1860
      %v1862 = vrot.slane %v1751, 1
      %v1863 = vsel %vm370, %v1860, %v1862
      %v1864 = vrot.slane %v1752, 1
      %v1865 = vrot.slane %v1753, 1
      %v1866 = vsel %vm370, %v1864, %v1865
      %v1867 = vrot.slane %v1754, 1
      %v1868 = vsel %vm370, %v1865, %v1867
      %v1869 = vrot.slane %v1755, 1
      %v1870 = vrot.slane %v1756, 1
      %v1871 = vsel %vm370, %v1869, %v1870
      %v1872 = vrot.slane %v1757, 1
      %v1873 = vsel %vm370, %v1870, %v1872
      %v1874 = vrot.slane %v1758, 1
      %v1875 = vrot.slane %v1759, 1
      %v1876 = vsel %vm370, %v1874, %v1875
      %v1877 = vrot.slane %v1760, 1
      %v1878 = vsel %vm370, %v1875, %v1877
      %v1879 = vrot.slane %v1761, 1
      %v1880 = vrot.slane %v1762, 1
      %v1881 = vsel %vm370, %v1879, %v1880
      %v1882 = vrot.slane %v1763, 1
      %v1883 = vsel %vm370, %v1880, %v1882
      %v1884 = vrot.slane %v1764, 1
      %v1885 = vrot.slane %v1765, 1
      %v1886 = vsel %vm370, %v1884, %v1885
      %v1887 = vrot.slane %v1766, 1
      %v1888 = vsel %vm370, %v1885, %v1887
      %v1889 = vrot.slane %v1767, 1
      %v1890 = vrot.slane %v1768, 1
      %v1891 = vsel %vm370, %v1889, %v1890
      %v1892 = vrot.slane %v1769, 1
      %v1893 = vsel %vm370, %v1890, %v1892
      %v1894 = vrot.slane %v1770, 1
      %v1895 = vrot.slane %v1771, 1
      %v1896 = vsel %vm370, %v1894, %v1895
      %v1897 = vrot.slane %v1772, 1
      %v1898 = vsel %vm370, %v1895, %v1897
      %v1899 = vrot.slane %v1773, 1
      %v1900 = vrot.slane %v1774, 1
      %v1901 = vsel %vm370, %v1899, %v1900
      %v1902 = vrot.slane %v1775, 1
      %v1903 = vsel %vm370, %v1900, %v1902
      %v1936 = vpack.c.bf16 %v1828, %v1826
      %v1937 = vpack.c.bf16 %v1833, %v1831
      %v1938 = vpack.c.bf16 %v1838, %v1836
      %v1939 = vpack.c.bf16 %v1843, %v1841
      %v1940 = vpack.c.bf16 %v1848, %v1846
      %v1941 = vpack.c.bf16 %v1853, %v1851
      %v1942 = vpack.c.bf16 %v1858, %v1856
      %v1943 = vpack.c.bf16 %v1863, %v1861
      %v1944 = vpack.c.bf16 %v1868, %v1866
      %v1945 = vpack.c.bf16 %v1873, %v1871
      %v1946 = vpack.c.bf16 %v1878, %v1876
      %v1947 = vpack.c.bf16 %v1883, %v1881
      %v1948 = vpack.c.bf16 %v1888, %v1886
      %v1949 = vpack.c.bf16 %v1893, %v1891
      %v1950 = vpack.c.bf16 %v1898, %v1896
      %v1951 = vpack.c.bf16 %v1903, %v1901
      %s1952 = scalar_lea.vmem %s1, 8
      %v1953 = vld [vmem:[%s1952] sm:$0x3]
      %v1955 = vsel %vm501, %v1936, 0
      %v1958 = vsel %vm501, %v1937, 0
      %v1961 = vsel %vm501, %v1938, 0
      %v1964 = vsel %vm501, %v1939, 0
      %v1967 = vsel %vm501, %v1940, 0
      %v1970 = vsel %vm501, %v1941, 0
      %v1973 = vsel %vm501, %v1942, 0
      %v1976 = vsel %vm501, %v1943, 0
      %v1979 = vsel %vm501, %v1944, 0
      %v1982 = vsel %vm501, %v1945, 0
      %v1985 = vsel %vm501, %v1946, 0
      %v1988 = vsel %vm501, %v1947, 0
      %v1991 = vsel %vm501, %v1948, 0
      %v1994 = vsel %vm501, %v1949, 0
      %v1997 = vsel %vm501, %v1950, 0
      %v2000 = vsel %vm501, %v1951, 0
      %v2003 = vsel %vm550, %v1953, 0
      %2005 = vmatprep.subr.bf16.mxu0 0
      %2006 = vmatpush1.bf16.msra.mxu0 %v2003
      %2007 = vmatprep.subr.bf16.mxu0 0
      %2008 = vmatpush1.bf16.msra.mxu0 0
      %2009 = vmatprep.subr.bf16.mxu0 0
      %2010 = vmatpush1.bf16.msra.mxu0 0
      %2011 = vmatprep.subr.bf16.mxu0 0
      %2012 = vmatpush1.bf16.msra.mxu0 0
      %2013 = vmatprep.subr.bf16.mxu0 0
      %2014 = vmatpush1.bf16.msra.mxu0 0
      %2015 = vmatprep.subr.bf16.mxu0 0
      %2016 = vmatpush1.bf16.msra.mxu0 0
      %2017 = vmatprep.subr.bf16.mxu0 0
      %2018 = vmatpush1.bf16.msra.mxu0 0
      %2019 = vmatprep.subr.bf16.mxu0 0
      %2020 = vmatpush1.bf16.msra.mxu0 0
      %2021 = vmatprep.subr.bf16.mxu0 0
      %2022 = vmatpush1.bf16.msra.mxu0 0
      %2023 = vmatprep.subr.bf16.mxu0 0
      %2024 = vmatpush1.bf16.msra.mxu0 0
      %2025 = vmatprep.subr.bf16.mxu0 0
      %2026 = vmatpush1.bf16.msra.mxu0 0
      %2027 = vmatprep.subr.bf16.mxu0 0
      %2028 = vmatpush1.bf16.msra.mxu0 0
      %2029 = vmatprep.subr.bf16.mxu0 0
      %2030 = vmatpush1.bf16.msra.mxu0 0
      %2031 = vmatprep.subr.bf16.mxu0 0
      %2032 = vmatpush1.bf16.msra.mxu0 0
      %2033 = vmatprep.subr.bf16.mxu0 0
      %2034 = vmatpush1.bf16.msra.mxu0 0
      %2035 = vmatprep.subr.bf16.mxu0 0
      %2036 = vmatpush1.bf16.msra.mxu0 0
      %2037 = vmatprep.mubr.bf16.mxu0 0
      %2038 = vmatmul.mubr.bf16.gmra.mrb[0].mxu0 %v1955
      %v2039 = vpop.f32.mrb[0].mxu0
      %v2040 = vadd.f32 0.0, %v2039
      %v2041 = vpop.f32.mrb[0].mxu0
      %v2042 = vpop.f32.mrb[0].mxu0
      %v2043 = vadd.f32 0.0, %v2042
      %v2044 = vpop.f32.mrb[0].mxu0
      %2045 = vmatprep.mubr.bf16.mxu0 0
      %2046 = vmatmul.mubr.bf16.gmra.mrb[0].mxu0 %v1958
      %v2047 = vpop.f32.mrb[0].mxu0
      %v2048 = vadd.f32 0.0, %v2047
      %v2049 = vpop.f32.mrb[0].mxu0
      %v2050 = vpop.f32.mrb[0].mxu0
      %v2051 = vadd.f32 0.0, %v2050
      %v2052 = vpop.f32.mrb[0].mxu0
      %2053 = vmatprep.mubr.bf16.mxu0 0
      %2054 = vmatmul.mubr.bf16.gmra.mrb[0].mxu0 %v1961
      %v2055 = vpop.f32.mrb[0].mxu0
      %v2056 = vadd.f32 0.0, %v2055
      %v2057 = vpop.f32.mrb[0].mxu0
      %v2058 = vpop.f32.mrb[0].mxu0
      %v2059 = vadd.f32 0.0, %v2058
      %v2060 = vpop.f32.mrb[0].mxu0
      %2061 = vmatprep.mubr.bf16.mxu0 0
      %2062 = vmatmul.mubr.bf16.gmra.mrb[0].mxu0 %v1964
      %v2063 = vpop.f32.mrb[0].mxu0
      %v2064 = vadd.f32 0.0, %v2063
      %v2065 = vpop.f32.mrb[0].mxu0
      %v2066 = vpop.f32.mrb[0].mxu0
      %v2067 = vadd.f32 0.0, %v2066
      %v2068 = vpop.f32.mrb[0].mxu0
      %2069 = vmatprep.mubr.bf16.mxu0 0
      %2070 = vmatmul.mubr.bf16.gmra.mrb[0].mxu0 %v1967
      %v2071 = vpop.f32.mrb[0].mxu0
      %v2072 = vadd.f32 0.0, %v2071
      %v2073 = vpop.f32.mrb[0].mxu0
      %v2074 = vpop.f32.mrb[0].mxu0
      %v2075 = vadd.f32 0.0, %v2074
      %v2076 = vpop.f32.mrb[0].mxu0
      %2077 = vmatprep.mubr.bf16.mxu0 0
      %2078 = vmatmul.mubr.bf16.gmra.mrb[0].mxu0 %v1970
      %v2079 = vpop.f32.mrb[0].mxu0
      %v2080 = vadd.f32 0.0, %v2079
      %v2081 = vpop.f32.mrb[0].mxu0
      %v2082 = vpop.f32.mrb[0].mxu0
      %v2083 = vadd.f32 0.0, %v2082
      %v2084 = vpop.f32.mrb[0].mxu0
      %2085 = vmatprep.mubr.bf16.mxu0 0
      %2086 = vmatmul.mubr.bf16.gmra.mrb[0].mxu0 %v1973
      %v2087 = vpop.f32.mrb[0].mxu0
      %v2088 = vadd.f32 0.0, %v2087
      %v2089 = vpop.f32.mrb[0].mxu0
      %v2090 = vpop.f32.mrb[0].mxu0
      %v2091 = vadd.f32 0.0, %v2090
      %v2092 = vpop.f32.mrb[0].mxu0
      %2093 = vmatprep.mubr.bf16.mxu0 0
      %2094 = vmatmul.mubr.bf16.gmra.mrb[0].mxu0 %v1976
      %v2095 = vpop.f32.mrb[0].mxu0
      %v2096 = vadd.f32 0.0, %v2095
      %v2097 = vpop.f32.mrb[0].mxu0
      %v2098 = vpop.f32.mrb[0].mxu0
      %v2099 = vadd.f32 0.0, %v2098
      %v2100 = vpop.f32.mrb[0].mxu0
      %2101 = vmatprep.mubr.bf16.mxu0 0
      %2102 = vmatmul.mubr.bf16.gmra.mrb[0].mxu0 %v1979
      %v2103 = vpop.f32.mrb[0].mxu0
      %v2104 = vadd.f32 0.0, %v2103
      %v2105 = vpop.f32.mrb[0].mxu0
      %v2106 = vpop.f32.mrb[0].mxu0
      %v2107 = vadd.f32 0.0, %v2106
      %v2108 = vpop.f32.mrb[0].mxu0
      %2109 = vmatprep.mubr.bf16.mxu0 0
      %2110 = vmatmul.mubr.bf16.gmra.mrb[0].mxu0 %v1982
      %v2111 = vpop.f32.mrb[0].mxu0
      %v2112 = vadd.f32 0.0, %v2111
      %v2113 = vpop.f32.mrb[0].mxu0
      %v2114 = vpop.f32.mrb[0].mxu0
      %v2115 = vadd.f32 0.0, %v2114
      %v2116 = vpop.f32.mrb[0].mxu0
      %2117 = vmatprep.mubr.bf16.mxu0 0
      %2118 = vmatmul.mubr.bf16.gmra.mrb[0].mxu0 %v1985
      %v2119 = vpop.f32.mrb[0].mxu0
      %v2120 = vadd.f32 0.0, %v2119
      %v2121 = vpop.f32.mrb[0].mxu0
      %v2122 = vpop.f32.mrb[0].mxu0
      %v2123 = vadd.f32 0.0, %v2122
      %v2124 = vpop.f32.mrb[0].mxu0
      %2125 = vmatprep.mubr.bf16.mxu0 0
      %2126 = vmatmul.mubr.bf16.gmra.mrb[0].mxu0 %v1988
      %v2127 = vpop.f32.mrb[0].mxu0
      %v2128 = vadd.f32 0.0, %v2127
      %v2129 = vpop.f32.mrb[0].mxu0
      %v2130 = vpop.f32.mrb[0].mxu0
      %v2131 = vadd.f32 0.0, %v2130
      %v2132 = vpop.f32.mrb[0].mxu0
      %2133 = vmatprep.mubr.bf16.mxu0 0
      %2134 = vmatmul.mubr.bf16.gmra.mrb[0].mxu0 %v1991
      %v2135 = vpop.f32.mrb[0].mxu0
      %v2136 = vadd.f32 0.0, %v2135
      %v2137 = vpop.f32.mrb[0].mxu0
      %v2138 = vpop.f32.mrb[0].mxu0
      %v2139 = vadd.f32 0.0, %v2138
      %v2140 = vpop.f32.mrb[0].mxu0
      %2141 = vmatprep.mubr.bf16.mxu0 0
      %2142 = vmatmul.mubr.bf16.gmra.mrb[0].mxu0 %v1994
      %v2143 = vpop.f32.mrb[0].mxu0
      %v2144 = vadd.f32 0.0, %v2143
      %v2145 = vpop.f32.mrb[0].mxu0
      %v2146 = vpop.f32.mrb[0].mxu0
      %v2147 = vadd.f32 0.0, %v2146
      %v2148 = vpop.f32.mrb[0].mxu0
      %2149 = vmatprep.mubr.bf16.mxu0 0
      %2150 = vmatmul.mubr.bf16.gmra.mrb[0].mxu0 %v1997
      %v2151 = vpop.f32.mrb[0].mxu0
      %v2152 = vadd.f32 0.0, %v2151
      %v2153 = vpop.f32.mrb[0].mxu0
      %v2154 = vpop.f32.mrb[0].mxu0
      %v2155 = vadd.f32 0.0, %v2154
      %v2156 = vpop.f32.mrb[0].mxu0
      %2157 = vmatprep.mubr.bf16.mxu0 0
      %2158 = vmatmul.mubr.bf16.gmra.mrb[0].mxu0 %v2000
      %v2159 = vpop.f32.mrb[0].mxu0
      %v2160 = vadd.f32 0.0, %v2159
      %v2161 = vpop.f32.mrb[0].mxu0
      %v2162 = vpop.f32.mrb[0].mxu0
      %v2163 = vadd.f32 0.0, %v2162
      %v2164 = vpop.f32.mrb[0].mxu0
      %2165 = vdwg.mxu0
      %v2166 = vadd.f32 %v1648, %v2040
      %v2167 = vadd.f32 %v1649, %v2043
      %v2168 = vadd.f32 %v1650, %v2048
      %v2169 = vadd.f32 %v1651, %v2051
      %v2170 = vadd.f32 %v1652, %v2056
      %v2171 = vadd.f32 %v1653, %v2059
      %v2172 = vadd.f32 %v1654, %v2064
      %v2173 = vadd.f32 %v1655, %v2067
      %v2174 = vadd.f32 %v1656, %v2072
      %v2175 = vadd.f32 %v1657, %v2075
      %v2176 = vadd.f32 %v1658, %v2080
      %v2177 = vadd.f32 %v1659, %v2083
      %v2178 = vadd.f32 %v1660, %v2088
      %v2179 = vadd.f32 %v1661, %v2091
      %v2180 = vadd.f32 %v1662, %v2096
      %v2181 = vadd.f32 %v1663, %v2099
      %v2182 = vadd.f32 %v1664, %v2104
      %v2183 = vadd.f32 %v1665, %v2107
      %v2184 = vadd.f32 %v1666, %v2112
      %v2185 = vadd.f32 %v1667, %v2115
      %v2186 = vadd.f32 %v1668, %v2120
      %v2187 = vadd.f32 %v1669, %v2123
      %v2188 = vadd.f32 %v1670, %v2128
      %v2189 = vadd.f32 %v1671, %v2131
      %v2190 = vadd.f32 %v1672, %v2136
      %v2191 = vadd.f32 %v1673, %v2139
      %v2192 = vadd.f32 %v1674, %v2144
      %v2193 = vadd.f32 %v1675, %v2147
      %v2194 = vadd.f32 %v1676, %v2152
      %v2195 = vadd.f32 %v1677, %v2155
      %v2196 = vadd.f32 %v1678, %v2160
      %v2197 = vadd.f32 %v1679, %v2163
      %v2198 = vld [vmem:[%s1353] sm:$0xe]
      %v2199 = vld [vmem:[%s1353 + $0xc] sm:$0xe]
      %v2200 = vld [vmem:[%s1353 + $0x18] sm:$0xe]
      %v2201 = vld [vmem:[%s1353 + $0x24] sm:$0xe]
      %v2202 = vld [vmem:[%s1353 + $0x30] sm:$0xe]
      %v2203 = vld [vmem:[%s1353 + $0x3c] sm:$0xe]
      %v2204 = vld [vmem:[%s1353 + $0x48] sm:$0xe]
      %v2205 = vld [vmem:[%s1353 + $0x54] sm:$0xe]
      %v2206 = vld [vmem:[%s1353 + $0x60] sm:$0xe]
      %v2207 = vld [vmem:[%s1353 + $0x6c] sm:$0xe]
      %v2208 = vld [vmem:[%s1353 + $0x78] sm:$0xe]
      %v2209 = vld [vmem:[%s1353 + $0x84] sm:$0xe]
      %v2210 = vld [vmem:[%s1353 + $0x90] sm:$0xe]
      %v2211 = vld [vmem:[%s1353 + $0x9c] sm:$0xe]
      %v2212 = vld [vmem:[%s1353 + $0xa8] sm:$0xe]
      %v2213 = vld [vmem:[%s1353 + $0xb4] sm:$0xe]
      %v2214 = vunpack.c.l.bf16 %v2198
      %v2215 = vunpack.c.l.bf16 %v2199
      %v2216 = vunpack.c.l.bf16 %v2200
      %v2217 = vunpack.c.l.bf16 %v2201
      %v2218 = vunpack.c.l.bf16 %v2202
      %v2219 = vunpack.c.l.bf16 %v2203
      %v2220 = vunpack.c.l.bf16 %v2204
      %v2221 = vunpack.c.l.bf16 %v2205
      %v2222 = vunpack.c.l.bf16 %v2206
      %v2223 = vunpack.c.l.bf16 %v2207
      %v2224 = vunpack.c.l.bf16 %v2208
      %v2225 = vunpack.c.l.bf16 %v2209
      %v2226 = vunpack.c.l.bf16 %v2210
      %v2227 = vunpack.c.l.bf16 %v2211
      %v2228 = vunpack.c.l.bf16 %v2212
      %v2229 = vunpack.c.l.bf16 %v2213
      %v2246 = vrot.slane %v2214, 2
      %v2247 = vrot.slane %v1729, 2
      %v2248 = vsel %vm975, %v2246, %v2247
      %v2249 = vrot.slane %v1730, 2
      %v2250 = vsel %vm975, %v2247, %v2249
      %v2251 = vrot.slane %v2215, 2
      %v2252 = vrot.slane %v1732, 2
      %v2253 = vsel %vm975, %v2251, %v2252
      %v2254 = vrot.slane %v1733, 2
      %v2255 = vsel %vm975, %v2252, %v2254
      %v2256 = vrot.slane %v2216, 2
      %v2257 = vrot.slane %v1735, 2
      %v2258 = vsel %vm975, %v2256, %v2257
      %v2259 = vrot.slane %v1736, 2
      %v2260 = vsel %vm975, %v2257, %v2259
      %v2261 = vrot.slane %v2217, 2
      %v2262 = vrot.slane %v1738, 2
      %v2263 = vsel %vm975, %v2261, %v2262
      %v2264 = vrot.slane %v1739, 2
      %v2265 = vsel %vm975, %v2262, %v2264
      %v2266 = vrot.slane %v2218, 2
      %v2267 = vrot.slane %v1741, 2
      %v2268 = vsel %vm975, %v2266, %v2267
      %v2269 = vrot.slane %v1742, 2
      %v2270 = vsel %vm975, %v2267, %v2269
      %v2271 = vrot.slane %v2219, 2
      %v2272 = vrot.slane %v1744, 2
      %v2273 = vsel %vm975, %v2271, %v2272
      %v2274 = vrot.slane %v1745, 2
      %v2275 = vsel %vm975, %v2272, %v2274
      %v2276 = vrot.slane %v2220, 2
      %v2277 = vrot.slane %v1747, 2
      %v2278 = vsel %vm975, %v2276, %v2277
      %v2279 = vrot.slane %v1748, 2
      %v2280 = vsel %vm975, %v2277, %v2279
      %v2281 = vrot.slane %v2221, 2
      %v2282 = vrot.slane %v1750, 2
      %v2283 = vsel %vm975, %v2281, %v2282
      %v2284 = vrot.slane %v1751, 2
      %v2285 = vsel %vm975, %v2282, %v2284
      %v2286 = vrot.slane %v2222, 2
      %v2287 = vrot.slane %v1753, 2
      %v2288 = vsel %vm975, %v2286, %v2287
      %v2289 = vrot.slane %v1754, 2
      %v2290 = vsel %vm975, %v2287, %v2289
      %v2291 = vrot.slane %v2223, 2
      %v2292 = vrot.slane %v1756, 2
      %v2293 = vsel %vm975, %v2291, %v2292
      %v2294 = vrot.slane %v1757, 2
      %v2295 = vsel %vm975, %v2292, %v2294
      %v2296 = vrot.slane %v2224, 2
      %v2297 = vrot.slane %v1759, 2
      %v2298 = vsel %vm975, %v2296, %v2297
      %v2299 = vrot.slane %v1760, 2
      %v2300 = vsel %vm975, %v2297, %v2299
      %v2301 = vrot.slane %v2225, 2
      %v2302 = vrot.slane %v1762, 2
      %v2303 = vsel %vm975, %v2301, %v2302
      %v2304 = vrot.slane %v1763, 2
      %v2305 = vsel %vm975, %v2302, %v2304
      %v2306 = vrot.slane %v2226, 2
      %v2307 = vrot.slane %v1765, 2
      %v2308 = vsel %vm975, %v2306, %v2307
      %v2309 = vrot.slane %v1766, 2
      %v2310 = vsel %vm975, %v2307, %v2309
      %v2311 = vrot.slane %v2227, 2
      %v2312 = vrot.slane %v1768, 2
      %v2313 = vsel %vm975, %v2311, %v2312
      %v2314 = vrot.slane %v1769, 2
      %v2315 = vsel %vm975, %v2312, %v2314
      %v2316 = vrot.slane %v2228, 2
      %v2317 = vrot.slane %v1771, 2
      %v2318 = vsel %vm975, %v2316, %v2317
      %v2319 = vrot.slane %v1772, 2
      %v2320 = vsel %vm975, %v2317, %v2319
      %v2321 = vrot.slane %v2229, 2
      %v2322 = vrot.slane %v1774, 2
      %v2323 = vsel %vm975, %v2321, %v2322
      %v2324 = vrot.slane %v1775, 2
      %v2325 = vsel %vm975, %v2322, %v2324
      %v2358 = vpack.c.bf16 %v2250, %v2248
      %v2359 = vpack.c.bf16 %v2255, %v2253
      %v2360 = vpack.c.bf16 %v2260, %v2258
      %v2361 = vpack.c.bf16 %v2265, %v2263
      %v2362 = vpack.c.bf16 %v2270, %v2268
      %v2363 = vpack.c.bf16 %v2275, %v2273
      %v2364 = vpack.c.bf16 %v2280, %v2278
      %v2365 = vpack.c.bf16 %v2285, %v2283
      %v2366 = vpack.c.bf16 %v2290, %v2288
      %v2367 = vpack.c.bf16 %v2295, %v2293
      %v2368 = vpack.c.bf16 %v2300, %v2298
      %v2369 = vpack.c.bf16 %v2305, %v2303
      %v2370 = vpack.c.bf16 %v2310, %v2308
      %v2371 = vpack.c.bf16 %v2315, %v2313
      %v2372 = vpack.c.bf16 %v2320, %v2318
      %v2373 = vpack.c.bf16 %v2325, %v2323
      %s2374 = scalar_lea.vmem %s1, 10
      %v2375 = vld [vmem:[%s2374] sm:$0x3]
      %v2377 = vsel %vm501, %v2358, 0
      %v2380 = vsel %vm501, %v2359, 0
      %v2383 = vsel %vm501, %v2360, 0
      %v2386 = vsel %vm501, %v2361, 0
      %v2389 = vsel %vm501, %v2362, 0
      %v2392 = vsel %vm501, %v2363, 0
      %v2395 = vsel %vm501, %v2364, 0
      %v2398 = vsel %vm501, %v2365, 0
      %v2401 = vsel %vm501, %v2366, 0
      %v2404 = vsel %vm501, %v2367, 0
      %v2407 = vsel %vm501, %v2368, 0
      %v2410 = vsel %vm501, %v2369, 0
      %v2413 = vsel %vm501, %v2370, 0
      %v2416 = vsel %vm501, %v2371, 0
      %v2419 = vsel %vm501, %v2372, 0
      %v2422 = vsel %vm501, %v2373, 0
      %v2425 = vsel %vm550, %v2375, 0
      %2427 = vmatprep.subr.bf16.mxu0 0
      %2428 = vmatpush1.bf16.msra.mxu0 %v2425
      %2429 = vmatprep.subr.bf16.mxu0 0
      %2430 = vmatpush1.bf16.msra.mxu0 0
      %2431 = vmatprep.subr.bf16.mxu0 0
      %2432 = vmatpush1.bf16.msra.mxu0 0
      %2433 = vmatprep.subr.bf16.mxu0 0
      %2434 = vmatpush1.bf16.msra.mxu0 0
      %2435 = vmatprep.subr.bf16.mxu0 0
      %2436 = vmatpush1.bf16.msra.mxu0 0
      %2437 = vmatprep.subr.bf16.mxu0 0
      %2438 = vmatpush1.bf16.msra.mxu0 0
      %2439 = vmatprep.subr.bf16.mxu0 0
      %2440 = vmatpush1.bf16.msra.mxu0 0
      %2441 = vmatprep.subr.bf16.mxu0 0
      %2442 = vmatpush1.bf16.msra.mxu0 0
      %2443 = vmatprep.subr.bf16.mxu0 0
      %2444 = vmatpush1.bf16.msra.mxu0 0
      %2445 = vmatprep.subr.bf16.mxu0 0
      %2446 = vmatpush1.bf16.msra.mxu0 0
      %2447 = vmatprep.subr.bf16.mxu0 0
      %2448 = vmatpush1.bf16.msra.mxu0 0
      %2449 = vmatprep.subr.bf16.mxu0 0
      %2450 = vmatpush1.bf16.msra.mxu0 0
      %2451 = vmatprep.subr.bf16.mxu0 0
      %2452 = vmatpush1.bf16.msra.mxu0 0
      %2453 = vmatprep.subr.bf16.mxu0 0
      %2454 = vmatpush1.bf16.msra.mxu0 0
      %2455 = vmatprep.subr.bf16.mxu0 0
      %2456 = vmatpush1.bf16.msra.mxu0 0
      %2457 = vmatprep.subr.bf16.mxu0 0
      %2458 = vmatpush1.bf16.msra.mxu0 0
      %2459 = vmatprep.mubr.bf16.mxu0 0
      %2460 = vmatmul.mubr.bf16.gmra.mrb[0].mxu0 %v2377
      %v2461 = vpop.f32.mrb[0].mxu0
      %v2462 = vadd.f32 0.0, %v2461
      %v2463 = vpop.f32.mrb[0].mxu0
      %v2464 = vpop.f32.mrb[0].mxu0
      %v2465 = vadd.f32 0.0, %v2464
      %v2466 = vpop.f32.mrb[0].mxu0
      %2467 = vmatprep.mubr.bf16.mxu0 0
      %2468 = vmatmul.mubr.bf16.gmra.mrb[0].mxu0 %v2380
      %v2469 = vpop.f32.mrb[0].mxu0
      %v2470 = vadd.f32 0.0, %v2469
      %v2471 = vpop.f32.mrb[0].mxu0
      %v2472 = vpop.f32.mrb[0].mxu0
      %v2473 = vadd.f32 0.0, %v2472
      %v2474 = vpop.f32.mrb[0].mxu0
      %2475 = vmatprep.mubr.bf16.mxu0 0
      %2476 = vmatmul.mubr.bf16.gmra.mrb[0].mxu0 %v2383
      %v2477 = vpop.f32.mrb[0].mxu0
      %v2478 = vadd.f32 0.0, %v2477
      %v2479 = vpop.f32.mrb[0].mxu0
      %v2480 = vpop.f32.mrb[0].mxu0
      %v2481 = vadd.f32 0.0, %v2480
      %v2482 = vpop.f32.mrb[0].mxu0
      %2483 = vmatprep.mubr.bf16.mxu0 0
      %2484 = vmatmul.mubr.bf16.gmra.mrb[0].mxu0 %v2386
      %v2485 = vpop.f32.mrb[0].mxu0
      %v2486 = vadd.f32 0.0, %v2485
      %v2487 = vpop.f32.mrb[0].mxu0
      %v2488 = vpop.f32.mrb[0].mxu0
      %v2489 = vadd.f32 0.0, %v2488
      %v2490 = vpop.f32.mrb[0].mxu0
      %2491 = vmatprep.mubr.bf16.mxu0 0
      %2492 = vmatmul.mubr.bf16.gmra.mrb[0].mxu0 %v2389
      %v2493 = vpop.f32.mrb[0].mxu0
      %v2494 = vadd.f32 0.0, %v2493
      %v2495 = vpop.f32.mrb[0].mxu0
      %v2496 = vpop.f32.mrb[0].mxu0
      %v2497 = vadd.f32 0.0, %v2496
      %v2498 = vpop.f32.mrb[0].mxu0
      %2499 = vmatprep.mubr.bf16.mxu0 0
      %2500 = vmatmul.mubr.bf16.gmra.mrb[0].mxu0 %v2392
      %v2501 = vpop.f32.mrb[0].mxu0
      %v2502 = vadd.f32 0.0, %v2501
      %v2503 = vpop.f32.mrb[0].mxu0
      %v2504 = vpop.f32.mrb[0].mxu0
      %v2505 = vadd.f32 0.0, %v2504
      %v2506 = vpop.f32.mrb[0].mxu0
      %2507 = vmatprep.mubr.bf16.mxu0 0
      %2508 = vmatmul.mubr.bf16.gmra.mrb[0].mxu0 %v2395
      %v2509 = vpop.f32.mrb[0].mxu0
      %v2510 = vadd.f32 0.0, %v2509
      %v2511 = vpop.f32.mrb[0].mxu0
      %v2512 = vpop.f32.mrb[0].mxu0
      %v2513 = vadd.f32 0.0, %v2512
      %v2514 = vpop.f32.mrb[0].mxu0
      %2515 = vmatprep.mubr.bf16.mxu0 0
      %2516 = vmatmul.mubr.bf16.gmra.mrb[0].mxu0 %v2398
      %v2517 = vpop.f32.mrb[0].mxu0
      %v2518 = vadd.f32 0.0, %v2517
      %v2519 = vpop.f32.mrb[0].mxu0
      %v2520 = vpop.f32.mrb[0].mxu0
      %v2521 = vadd.f32 0.0, %v2520
      %v2522 = vpop.f32.mrb[0].mxu0
      %2523 = vmatprep.mubr.bf16.mxu0 0
      %2524 = vmatmul.mubr.bf16.gmra.mrb[0].mxu0 %v2401
      %v2525 = vpop.f32.mrb[0].mxu0
      %v2526 = vadd.f32 0.0, %v2525
      %v2527 = vpop.f32.mrb[0].mxu0
      %v2528 = vpop.f32.mrb[0].mxu0
      %v2529 = vadd.f32 0.0, %v2528
      %v2530 = vpop.f32.mrb[0].mxu0
      %2531 = vmatprep.mubr.bf16.mxu0 0
      %2532 = vmatmul.mubr.bf16.gmra.mrb[0].mxu0 %v2404
      %v2533 = vpop.f32.mrb[0].mxu0
      %v2534 = vadd.f32 0.0, %v2533
      %v2535 = vpop.f32.mrb[0].mxu0
      %v2536 = vpop.f32.mrb[0].mxu0
      %v2537 = vadd.f32 0.0, %v2536
      %v2538 = vpop.f32.mrb[0].mxu0
      %2539 = vmatprep.mubr.bf16.mxu0 0
      %2540 = vmatmul.mubr.bf16.gmra.mrb[0].mxu0 %v2407
      %v2541 = vpop.f32.mrb[0].mxu0
      %v2542 = vadd.f32 0.0, %v2541
      %v2543 = vpop.f32.mrb[0].mxu0
      %v2544 = vpop.f32.mrb[0].mxu0
      %v2545 = vadd.f32 0.0, %v2544
      %v2546 = vpop.f32.mrb[0].mxu0
      %2547 = vmatprep.mubr.bf16.mxu0 0
      %2548 = vmatmul.mubr.bf16.gmra.mrb[0].mxu0 %v2410
      %v2549 = vpop.f32.mrb[0].mxu0
      %v2550 = vadd.f32 0.0, %v2549
      %v2551 = vpop.f32.mrb[0].mxu0
      %v2552 = vpop.f32.mrb[0].mxu0
      %v2553 = vadd.f32 0.0, %v2552
      %v2554 = vpop.f32.mrb[0].mxu0
      %2555 = vmatprep.mubr.bf16.mxu0 0
      %2556 = vmatmul.mubr.bf16.gmra.mrb[0].mxu0 %v2413
      %v2557 = vpop.f32.mrb[0].mxu0
      %v2558 = vadd.f32 0.0, %v2557
      %v2559 = vpop.f32.mrb[0].mxu0
      %v2560 = vpop.f32.mrb[0].mxu0
      %v2561 = vadd.f32 0.0, %v2560
      %v2562 = vpop.f32.mrb[0].mxu0
      %2563 = vmatprep.mubr.bf16.mxu0 0
      %2564 = vmatmul.mubr.bf16.gmra.mrb[0].mxu0 %v2416
      %v2565 = vpop.f32.mrb[0].mxu0
      %v2566 = vadd.f32 0.0, %v2565
      %v2567 = vpop.f32.mrb[0].mxu0
      %v2568 = vpop.f32.mrb[0].mxu0
      %v2569 = vadd.f32 0.0, %v2568
      %v2570 = vpop.f32.mrb[0].mxu0
      %2571 = vmatprep.mubr.bf16.mxu0 0
      %2572 = vmatmul.mubr.bf16.gmra.mrb[0].mxu0 %v2419
      %v2573 = vpop.f32.mrb[0].mxu0
      %v2574 = vadd.f32 0.0, %v2573
      %v2575 = vpop.f32.mrb[0].mxu0
      %v2576 = vpop.f32.mrb[0].mxu0
      %v2577 = vadd.f32 0.0, %v2576
      %v2578 = vpop.f32.mrb[0].mxu0
      %2579 = vmatprep.mubr.bf16.mxu0 0
      %2580 = vmatmul.mubr.bf16.gmra.mrb[0].mxu0 %v2422
      %v2581 = vpop.f32.mrb[0].mxu0
      %v2582 = vadd.f32 0.0, %v2581
      %v2583 = vpop.f32.mrb[0].mxu0
      %v2584 = vpop.f32.mrb[0].mxu0
      %v2585 = vadd.f32 0.0, %v2584
      %v2586 = vpop.f32.mrb[0].mxu0
      %2587 = vdwg.mxu0
      %v2588 = vadd.f32 %v2166, %v2462
      %v2589 = vadd.f32 %v2167, %v2465
      %v2590 = vadd.f32 %v2168, %v2470
      %v2591 = vadd.f32 %v2169, %v2473
      %v2592 = vadd.f32 %v2170, %v2478
      %v2593 = vadd.f32 %v2171, %v2481
      %v2594 = vadd.f32 %v2172, %v2486
      %v2595 = vadd.f32 %v2173, %v2489
      %v2596 = vadd.f32 %v2174, %v2494
      %v2597 = vadd.f32 %v2175, %v2497
      %v2598 = vadd.f32 %v2176, %v2502
      %v2599 = vadd.f32 %v2177, %v2505
      %v2600 = vadd.f32 %v2178, %v2510
      %v2601 = vadd.f32 %v2179, %v2513
      %v2602 = vadd.f32 %v2180, %v2518
      %v2603 = vadd.f32 %v2181, %v2521
      %v2604 = vadd.f32 %v2182, %v2526
      %v2605 = vadd.f32 %v2183, %v2529
      %v2606 = vadd.f32 %v2184, %v2534
      %v2607 = vadd.f32 %v2185, %v2537
      %v2608 = vadd.f32 %v2186, %v2542
      %v2609 = vadd.f32 %v2187, %v2545
      %v2610 = vadd.f32 %v2188, %v2550
      %v2611 = vadd.f32 %v2189, %v2553
      %v2612 = vadd.f32 %v2190, %v2558
      %v2613 = vadd.f32 %v2191, %v2561
      %v2614 = vadd.f32 %v2192, %v2566
      %v2615 = vadd.f32 %v2193, %v2569
      %v2616 = vadd.f32 %v2194, %v2574
      %v2617 = vadd.f32 %v2195, %v2577
      %v2618 = vadd.f32 %v2196, %v2582
      %v2619 = vadd.f32 %v2197, %v2585
      %s2620 = sadd.s32 %s205, 2
      %s2621 = smul.u32 %s2620, 3
      %s2622 = smul.addr %s2621, 4
      %s2623 = scalar_lea.vmem %s190, %s2622
      %v2624 = vld [vmem:[%s2623] sm:$0xf]
      %v2625 = vld [vmem:[%s2623 + $0x4] sm:$0xf]
      %v2626 = vld [vmem:[%s2623 + $0xc] sm:$0xf]
      %v2627 = vld [vmem:[%s2623 + $0x10] sm:$0xf]
      %v2628 = vld [vmem:[%s2623 + $0x18] sm:$0xf]
      %v2629 = vld [vmem:[%s2623 + $0x1c] sm:$0xf]
      %v2630 = vld [vmem:[%s2623 + $0x24] sm:$0xf]
      %v2631 = vld [vmem:[%s2623 + $0x28] sm:$0xf]
      %v2632 = vld [vmem:[%s2623 + $0x30] sm:$0xf]
      %v2633 = vld [vmem:[%s2623 + $0x34] sm:$0xf]
      %v2634 = vld [vmem:[%s2623 + $0x3c] sm:$0xf]
      %v2635 = vld [vmem:[%s2623 + $0x40] sm:$0xf]
      %v2636 = vld [vmem:[%s2623 + $0x48] sm:$0xf]
      %v2637 = vld [vmem:[%s2623 + $0x4c] sm:$0xf]
      %v2638 = vld [vmem:[%s2623 + $0x54] sm:$0xf]
      %v2639 = vld [vmem:[%s2623 + $0x58] sm:$0xf]
      %v2640 = vld [vmem:[%s2623 + $0x60] sm:$0xf]
      %v2641 = vld [vmem:[%s2623 + $0x64] sm:$0xf]
      %v2642 = vld [vmem:[%s2623 + $0x6c] sm:$0xf]
      %v2643 = vld [vmem:[%s2623 + $0x70] sm:$0xf]
      %v2644 = vld [vmem:[%s2623 + $0x78] sm:$0xf]
      %v2645 = vld [vmem:[%s2623 + $0x7c] sm:$0xf]
      %v2646 = vld [vmem:[%s2623 + $0x84] sm:$0xf]
      %v2647 = vld [vmem:[%s2623 + $0x88] sm:$0xf]
      %v2648 = vld [vmem:[%s2623 + $0x90] sm:$0xf]
      %v2649 = vld [vmem:[%s2623 + $0x94] sm:$0xf]
      %v2650 = vld [vmem:[%s2623 + $0x9c] sm:$0xf]
      %v2651 = vld [vmem:[%s2623 + $0xa0] sm:$0xf]
      %v2652 = vld [vmem:[%s2623 + $0xa8] sm:$0xf]
      %v2653 = vld [vmem:[%s2623 + $0xac] sm:$0xf]
      %v2654 = vld [vmem:[%s2623 + $0xb4] sm:$0xf]
      %v2655 = vld [vmem:[%s2623 + $0xb8] sm:$0xf]
      %v2656 = vunpack.c.l.bf16 %v2624
      %v2657 = vunpack.c.l.bf16 %v2625
      %v2658 = vunpack.c.l.bf16 %v2626
      %v2659 = vunpack.c.l.bf16 %v2627
      %v2660 = vunpack.c.l.bf16 %v2628
      %v2661 = vunpack.c.l.bf16 %v2629
      %v2662 = vunpack.c.l.bf16 %v2630
      %v2663 = vunpack.c.l.bf16 %v2631
      %v2664 = vunpack.c.l.bf16 %v2632
      %v2665 = vunpack.c.l.bf16 %v2633
      %v2666 = vunpack.c.l.bf16 %v2634
      %v2667 = vunpack.c.l.bf16 %v2635
      %v2668 = vunpack.c.l.bf16 %v2636
      %v2669 = vunpack.c.l.bf16 %v2637
      %v2670 = vunpack.c.l.bf16 %v2638
      %v2671 = vunpack.c.l.bf16 %v2639
      %v2672 = vunpack.c.l.bf16 %v2640
      %v2673 = vunpack.c.l.bf16 %v2641
      %v2674 = vunpack.c.l.bf16 %v2642
      %v2675 = vunpack.c.l.bf16 %v2643
      %v2676 = vunpack.c.l.bf16 %v2644
      %v2677 = vunpack.c.l.bf16 %v2645
      %v2678 = vunpack.c.l.bf16 %v2646
      %v2679 = vunpack.c.l.bf16 %v2647
      %v2680 = vunpack.c.l.bf16 %v2648
      %v2681 = vunpack.c.l.bf16 %v2649
      %v2682 = vunpack.c.l.bf16 %v2650
      %v2683 = vunpack.c.l.bf16 %v2651
      %v2684 = vunpack.c.l.bf16 %v2652
      %v2685 = vunpack.c.l.bf16 %v2653
      %v2686 = vunpack.c.l.bf16 %v2654
      %v2687 = vunpack.c.l.bf16 %v2655
      %v2688 = vpack.c.bf16 %v2657, %v2656
      %v2689 = vpack.c.bf16 %v2659, %v2658
      %v2690 = vpack.c.bf16 %v2661, %v2660
      %v2691 = vpack.c.bf16 %v2663, %v2662
      %v2692 = vpack.c.bf16 %v2665, %v2664
      %v2693 = vpack.c.bf16 %v2667, %v2666
      %v2694 = vpack.c.bf16 %v2669, %v2668
      %v2695 = vpack.c.bf16 %v2671, %v2670
      %v2696 = vpack.c.bf16 %v2673, %v2672
      %v2697 = vpack.c.bf16 %v2675, %v2674
      %v2698 = vpack.c.bf16 %v2677, %v2676
      %v2699 = vpack.c.bf16 %v2679, %v2678
      %v2700 = vpack.c.bf16 %v2681, %v2680
      %v2701 = vpack.c.bf16 %v2683, %v2682
      %v2702 = vpack.c.bf16 %v2685, %v2684
      %v2703 = vpack.c.bf16 %v2687, %v2686
      %s2704 = scalar_lea.vmem %s1, 12
      %v2705 = vld [vmem:[%s2704] sm:$0x3]
      %v2707 = vsel %vm501, %v2688, 0
      %v2710 = vsel %vm501, %v2689, 0
      %v2713 = vsel %vm501, %v2690, 0
      %v2716 = vsel %vm501, %v2691, 0
      %v2719 = vsel %vm501, %v2692, 0
      %v2722 = vsel %vm501, %v2693, 0
      %v2725 = vsel %vm501, %v2694, 0
      %v2728 = vsel %vm501, %v2695, 0
      %v2731 = vsel %vm501, %v2696, 0
      %v2734 = vsel %vm501, %v2697, 0
      %v2737 = vsel %vm501, %v2698, 0
      %v2740 = vsel %vm501, %v2699, 0
      %v2743 = vsel %vm501, %v2700, 0
      %v2746 = vsel %vm501, %v2701, 0
      %v2749 = vsel %vm501, %v2702, 0
      %v2752 = vsel %vm501, %v2703, 0
      %v2755 = vsel %vm550, %v2705, 0
      %2757 = vmatprep.subr.bf16.mxu0 0
      %2758 = vmatpush1.bf16.msra.mxu0 %v2755
      %2759 = vmatprep.subr.bf16.mxu0 0
      %2760 = vmatpush1.bf16.msra.mxu0 0
      %2761 = vmatprep.subr.bf16.mxu0 0
      %2762 = vmatpush1.bf16.msra.mxu0 0
      %2763 = vmatprep.subr.bf16.mxu0 0
      %2764 = vmatpush1.bf16.msra.mxu0 0
      %2765 = vmatprep.subr.bf16.mxu0 0
      %2766 = vmatpush1.bf16.msra.mxu0 0
      %2767 = vmatprep.subr.bf16.mxu0 0
      %2768 = vmatpush1.bf16.msra.mxu0 0
      %2769 = vmatprep.subr.bf16.mxu0 0
      %2770 = vmatpush1.bf16.msra.mxu0 0
      %2771 = vmatprep.subr.bf16.mxu0 0
      %2772 = vmatpush1.bf16.msra.mxu0 0
      %2773 = vmatprep.subr.bf16.mxu0 0
      %2774 = vmatpush1.bf16.msra.mxu0 0
      %2775 = vmatprep.subr.bf16.mxu0 0
      %2776 = vmatpush1.bf16.msra.mxu0 0
      %2777 = vmatprep.subr.bf16.mxu0 0
      %2778 = vmatpush1.bf16.msra.mxu0 0
      %2779 = vmatprep.subr.bf16.mxu0 0
      %2780 = vmatpush1.bf16.msra.mxu0 0
      %2781 = vmatprep.subr.bf16.mxu0 0
      %2782 = vmatpush1.bf16.msra.mxu0 0
      %2783 = vmatprep.subr.bf16.mxu0 0
      %2784 = vmatpush1.bf16.msra.mxu0 0
      %2785 = vmatprep.subr.bf16.mxu0 0
      %2786 = vmatpush1.bf16.msra.mxu0 0
      %2787 = vmatprep.subr.bf16.mxu0 0
      %2788 = vmatpush1.bf16.msra.mxu0 0
      %2789 = vmatprep.mubr.bf16.mxu0 0
      %2790 = vmatmul.mubr.bf16.gmra.mrb[0].mxu0 %v2707
      %v2791 = vpop.f32.mrb[0].mxu0
      %v2792 = vadd.f32 0.0, %v2791
      %v2793 = vpop.f32.mrb[0].mxu0
      %v2794 = vpop.f32.mrb[0].mxu0
      %v2795 = vadd.f32 0.0, %v2794
      %v2796 = vpop.f32.mrb[0].mxu0
      %2797 = vmatprep.mubr.bf16.mxu0 0
      %2798 = vmatmul.mubr.bf16.gmra.mrb[0].mxu0 %v2710
      %v2799 = vpop.f32.mrb[0].mxu0
      %v2800 = vadd.f32 0.0, %v2799
      %v2801 = vpop.f32.mrb[0].mxu0
      %v2802 = vpop.f32.mrb[0].mxu0
      %v2803 = vadd.f32 0.0, %v2802
      %v2804 = vpop.f32.mrb[0].mxu0
      %2805 = vmatprep.mubr.bf16.mxu0 0
      %2806 = vmatmul.mubr.bf16.gmra.mrb[0].mxu0 %v2713
      %v2807 = vpop.f32.mrb[0].mxu0
      %v2808 = vadd.f32 0.0, %v2807
      %v2809 = vpop.f32.mrb[0].mxu0
      %v2810 = vpop.f32.mrb[0].mxu0
      %v2811 = vadd.f32 0.0, %v2810
      %v2812 = vpop.f32.mrb[0].mxu0
      %2813 = vmatprep.mubr.bf16.mxu0 0
      %2814 = vmatmul.mubr.bf16.gmra.mrb[0].mxu0 %v2716
      %v2815 = vpop.f32.mrb[0].mxu0
      %v2816 = vadd.f32 0.0, %v2815
      %v2817 = vpop.f32.mrb[0].mxu0
      %v2818 = vpop.f32.mrb[0].mxu0
      %v2819 = vadd.f32 0.0, %v2818
      %v2820 = vpop.f32.mrb[0].mxu0
      %2821 = vmatprep.mubr.bf16.mxu0 0
      %2822 = vmatmul.mubr.bf16.gmra.mrb[0].mxu0 %v2719
      %v2823 = vpop.f32.mrb[0].mxu0
      %v2824 = vadd.f32 0.0, %v2823
      %v2825 = vpop.f32.mrb[0].mxu0
      %v2826 = vpop.f32.mrb[0].mxu0
      %v2827 = vadd.f32 0.0, %v2826
      %v2828 = vpop.f32.mrb[0].mxu0
      %2829 = vmatprep.mubr.bf16.mxu0 0
      %2830 = vmatmul.mubr.bf16.gmra.mrb[0].mxu0 %v2722
      %v2831 = vpop.f32.mrb[0].mxu0
      %v2832 = vadd.f32 0.0, %v2831
      %v2833 = vpop.f32.mrb[0].mxu0
      %v2834 = vpop.f32.mrb[0].mxu0
      %v2835 = vadd.f32 0.0, %v2834
      %v2836 = vpop.f32.mrb[0].mxu0
      %2837 = vmatprep.mubr.bf16.mxu0 0
      %2838 = vmatmul.mubr.bf16.gmra.mrb[0].mxu0 %v2725
      %v2839 = vpop.f32.mrb[0].mxu0
      %v2840 = vadd.f32 0.0, %v2839
      %v2841 = vpop.f32.mrb[0].mxu0
      %v2842 = vpop.f32.mrb[0].mxu0
      %v2843 = vadd.f32 0.0, %v2842
      %v2844 = vpop.f32.mrb[0].mxu0
      %2845 = vmatprep.mubr.bf16.mxu0 0
      %2846 = vmatmul.mubr.bf16.gmra.mrb[0].mxu0 %v2728
      %v2847 = vpop.f32.mrb[0].mxu0
      %v2848 = vadd.f32 0.0, %v2847
      %v2849 = vpop.f32.mrb[0].mxu0
      %v2850 = vpop.f32.mrb[0].mxu0
      %v2851 = vadd.f32 0.0, %v2850
      %v2852 = vpop.f32.mrb[0].mxu0
      %2853 = vmatprep.mubr.bf16.mxu0 0
      %2854 = vmatmul.mubr.bf16.gmra.mrb[0].mxu0 %v2731
      %v2855 = vpop.f32.mrb[0].mxu0
      %v2856 = vadd.f32 0.0, %v2855
      %v2857 = vpop.f32.mrb[0].mxu0
      %v2858 = vpop.f32.mrb[0].mxu0
      %v2859 = vadd.f32 0.0, %v2858
      %v2860 = vpop.f32.mrb[0].mxu0
      %2861 = vmatprep.mubr.bf16.mxu0 0
      %2862 = vmatmul.mubr.bf16.gmra.mrb[0].mxu0 %v2734
      %v2863 = vpop.f32.mrb[0].mxu0
      %v2864 = vadd.f32 0.0, %v2863
      %v2865 = vpop.f32.mrb[0].mxu0
      %v2866 = vpop.f32.mrb[0].mxu0
      %v2867 = vadd.f32 0.0, %v2866
      %v2868 = vpop.f32.mrb[0].mxu0
      %2869 = vmatprep.mubr.bf16.mxu0 0
      %2870 = vmatmul.mubr.bf16.gmra.mrb[0].mxu0 %v2737
      %v2871 = vpop.f32.mrb[0].mxu0
      %v2872 = vadd.f32 0.0, %v2871
      %v2873 = vpop.f32.mrb[0].mxu0
      %v2874 = vpop.f32.mrb[0].mxu0
      %v2875 = vadd.f32 0.0, %v2874
      %v2876 = vpop.f32.mrb[0].mxu0
      %2877 = vmatprep.mubr.bf16.mxu0 0
      %2878 = vmatmul.mubr.bf16.gmra.mrb[0].mxu0 %v2740
      %v2879 = vpop.f32.mrb[0].mxu0
      %v2880 = vadd.f32 0.0, %v2879
      %v2881 = vpop.f32.mrb[0].mxu0
      %v2882 = vpop.f32.mrb[0].mxu0
      %v2883 = vadd.f32 0.0, %v2882
      %v2884 = vpop.f32.mrb[0].mxu0
      %2885 = vmatprep.mubr.bf16.mxu0 0
      %2886 = vmatmul.mubr.bf16.gmra.mrb[0].mxu0 %v2743
      %v2887 = vpop.f32.mrb[0].mxu0
      %v2888 = vadd.f32 0.0, %v2887
      %v2889 = vpop.f32.mrb[0].mxu0
      %v2890 = vpop.f32.mrb[0].mxu0
      %v2891 = vadd.f32 0.0, %v2890
      %v2892 = vpop.f32.mrb[0].mxu0
      %2893 = vmatprep.mubr.bf16.mxu0 0
      %2894 = vmatmul.mubr.bf16.gmra.mrb[0].mxu0 %v2746
      %v2895 = vpop.f32.mrb[0].mxu0
      %v2896 = vadd.f32 0.0, %v2895
      %v2897 = vpop.f32.mrb[0].mxu0
      %v2898 = vpop.f32.mrb[0].mxu0
      %v2899 = vadd.f32 0.0, %v2898
      %v2900 = vpop.f32.mrb[0].mxu0
      %2901 = vmatprep.mubr.bf16.mxu0 0
      %2902 = vmatmul.mubr.bf16.gmra.mrb[0].mxu0 %v2749
      %v2903 = vpop.f32.mrb[0].mxu0
      %v2904 = vadd.f32 0.0, %v2903
      %v2905 = vpop.f32.mrb[0].mxu0
      %v2906 = vpop.f32.mrb[0].mxu0
      %v2907 = vadd.f32 0.0, %v2906
      %v2908 = vpop.f32.mrb[0].mxu0
      %2909 = vmatprep.mubr.bf16.mxu0 0
      %2910 = vmatmul.mubr.bf16.gmra.mrb[0].mxu0 %v2752
      %v2911 = vpop.f32.mrb[0].mxu0
      %v2912 = vadd.f32 0.0, %v2911
      %v2913 = vpop.f32.mrb[0].mxu0
      %v2914 = vpop.f32.mrb[0].mxu0
      %v2915 = vadd.f32 0.0, %v2914
      %v2916 = vpop.f32.mrb[0].mxu0
      %2917 = vdwg.mxu0
      %v2918 = vadd.f32 %v2588, %v2792
      %v2919 = vadd.f32 %v2589, %v2795
      %v2920 = vadd.f32 %v2590, %v2800
      %v2921 = vadd.f32 %v2591, %v2803
      %v2922 = vadd.f32 %v2592, %v2808
      %v2923 = vadd.f32 %v2593, %v2811
      %v2924 = vadd.f32 %v2594, %v2816
      %v2925 = vadd.f32 %v2595, %v2819
      %v2926 = vadd.f32 %v2596, %v2824
      %v2927 = vadd.f32 %v2597, %v2827
      %v2928 = vadd.f32 %v2598, %v2832
      %v2929 = vadd.f32 %v2599, %v2835
      %v2930 = vadd.f32 %v2600, %v2840
      %v2931 = vadd.f32 %v2601, %v2843
      %v2932 = vadd.f32 %v2602, %v2848
      %v2933 = vadd.f32 %v2603, %v2851
      %v2934 = vadd.f32 %v2604, %v2856
      %v2935 = vadd.f32 %v2605, %v2859
      %v2936 = vadd.f32 %v2606, %v2864
      %v2937 = vadd.f32 %v2607, %v2867
      %v2938 = vadd.f32 %v2608, %v2872
      %v2939 = vadd.f32 %v2609, %v2875
      %v2940 = vadd.f32 %v2610, %v2880
      %v2941 = vadd.f32 %v2611, %v2883
      %v2942 = vadd.f32 %v2612, %v2888
      %v2943 = vadd.f32 %v2613, %v2891
      %v2944 = vadd.f32 %v2614, %v2896
      %v2945 = vadd.f32 %v2615, %v2899
      %v2946 = vadd.f32 %v2616, %v2904
      %v2947 = vadd.f32 %v2617, %v2907
      %v2948 = vadd.f32 %v2618, %v2912
      %v2949 = vadd.f32 %v2619, %v2915
      %v2950 = vld [vmem:[%s2623] sm:$0xf]
      %v2951 = vld [vmem:[%s2623 + $0x4] sm:$0xf]
      %v2952 = vld [vmem:[%s2623 + $0x8] sm:$0x1]
      %v2953 = vld [vmem:[%s2623 + $0xc] sm:$0xf]
      %v2954 = vld [vmem:[%s2623 + $0x10] sm:$0xf]
      %v2955 = vld [vmem:[%s2623 + $0x14] sm:$0x1]
      %v2956 = vld [vmem:[%s2623 + $0x18] sm:$0xf]
      %v2957 = vld [vmem:[%s2623 + $0x1c] sm:$0xf]
      %v2958 = vld [vmem:[%s2623 + $0x20] sm:$0x1]
      %v2959 = vld [vmem:[%s2623 + $0x24] sm:$0xf]
      %v2960 = vld [vmem:[%s2623 + $0x28] sm:$0xf]
      %v2961 = vld [vmem:[%s2623 + $0x2c] sm:$0x1]
      %v2962 = vld [vmem:[%s2623 + $0x30] sm:$0xf]
      %v2963 = vld [vmem:[%s2623 + $0x34] sm:$0xf]
      %v2964 = vld [vmem:[%s2623 + $0x38] sm:$0x1]
      %v2965 = vld [vmem:[%s2623 + $0x3c] sm:$0xf]
      %v2966 = vld [vmem:[%s2623 + $0x40] sm:$0xf]
      %v2967 = vld [vmem:[%s2623 + $0x44] sm:$0x1]
      %v2968 = vld [vmem:[%s2623 + $0x48] sm:$0xf]
      %v2969 = vld [vmem:[%s2623 + $0x4c] sm:$0xf]
      %v2970 = vld [vmem:[%s2623 + $0x50] sm:$0x1]
      %v2971 = vld [vmem:[%s2623 + $0x54] sm:$0xf]
      %v2972 = vld [vmem:[%s2623 + $0x58] sm:$0xf]
      %v2973 = vld [vmem:[%s2623 + $0x5c] sm:$0x1]
      %v2974 = vld [vmem:[%s2623 + $0x60] sm:$0xf]
      %v2975 = vld [vmem:[%s2623 + $0x64] sm:$0xf]
      %v2976 = vld [vmem:[%s2623 + $0x68] sm:$0x1]
      %v2977 = vld [vmem:[%s2623 + $0x6c] sm:$0xf]
      %v2978 = vld [vmem:[%s2623 + $0x70] sm:$0xf]
      %v2979 = vld [vmem:[%s2623 + $0x74] sm:$0x1]
      %v2980 = vld [vmem:[%s2623 + $0x78] sm:$0xf]
      %v2981 = vld [vmem:[%s2623 + $0x7c] sm:$0xf]
      %v2982 = vld [vmem:[%s2623 + $0x80] sm:$0x1]
      %v2983 = vld [vmem:[%s2623 + $0x84] sm:$0xf]
      %v2984 = vld [vmem:[%s2623 + $0x88] sm:$0xf]
      %v2985 = vld [vmem:[%s2623 + $0x8c] sm:$0x1]
      %v2986 = vld [vmem:[%s2623 + $0x90] sm:$0xf]
      %v2987 = vld [vmem:[%s2623 + $0x94] sm:$0xf]
      %v2988 = vld [vmem:[%s2623 + $0x98] sm:$0x1]
      %v2989 = vld [vmem:[%s2623 + $0x9c] sm:$0xf]
      %v2990 = vld [vmem:[%s2623 + $0xa0] sm:$0xf]
      %v2991 = vld [vmem:[%s2623 + $0xa4] sm:$0x1]
      %v2992 = vld [vmem:[%s2623 + $0xa8] sm:$0xf]
      %v2993 = vld [vmem:[%s2623 + $0xac] sm:$0xf]
      %v2994 = vld [vmem:[%s2623 + $0xb0] sm:$0x1]
      %v2995 = vld [vmem:[%s2623 + $0xb4] sm:$0xf]
      %v2996 = vld [vmem:[%s2623 + $0xb8] sm:$0xf]
      %v2997 = vld [vmem:[%s2623 + $0xbc] sm:$0x1]
      %v2998 = vunpack.c.l.bf16 %v2950
      %v2999 = vunpack.c.l.bf16 %v2951
      %v3000 = vunpack.c.l.bf16 %v2952
      %v3001 = vunpack.c.l.bf16 %v2953
      %v3002 = vunpack.c.l.bf16 %v2954
      %v3003 = vunpack.c.l.bf16 %v2955
      %v3004 = vunpack.c.l.bf16 %v2956
      %v3005 = vunpack.c.l.bf16 %v2957
      %v3006 = vunpack.c.l.bf16 %v2958
      %v3007 = vunpack.c.l.bf16 %v2959
      %v3008 = vunpack.c.l.bf16 %v2960
      %v3009 = vunpack.c.l.bf16 %v2961
      %v3010 = vunpack.c.l.bf16 %v2962
      %v3011 = vunpack.c.l.bf16 %v2963
      %v3012 = vunpack.c.l.bf16 %v2964
      %v3013 = vunpack.c.l.bf16 %v2965
      %v3014 = vunpack.c.l.bf16 %v2966
      %v3015 = vunpack.c.l.bf16 %v2967
      %v3016 = vunpack.c.l.bf16 %v2968
      %v3017 = vunpack.c.l.bf16 %v2969
      %v3018 = vunpack.c.l.bf16 %v2970
      %v3019 = vunpack.c.l.bf16 %v2971
      %v3020 = vunpack.c.l.bf16 %v2972
      %v3021 = vunpack.c.l.bf16 %v2973
      %v3022 = vunpack.c.l.bf16 %v2974
      %v3023 = vunpack.c.l.bf16 %v2975
      %v3024 = vunpack.c.l.bf16 %v2976
      %v3025 = vunpack.c.l.bf16 %v2977
      %v3026 = vunpack.c.l.bf16 %v2978
      %v3027 = vunpack.c.l.bf16 %v2979
      %v3028 = vunpack.c.l.bf16 %v2980
      %v3029 = vunpack.c.l.bf16 %v2981
      %v3030 = vunpack.c.l.bf16 %v2982
      %v3031 = vunpack.c.l.bf16 %v2983
      %v3032 = vunpack.c.l.bf16 %v2984
      %v3033 = vunpack.c.l.bf16 %v2985
      %v3034 = vunpack.c.l.bf16 %v2986
      %v3035 = vunpack.c.l.bf16 %v2987
      %v3036 = vunpack.c.l.bf16 %v2988
      %v3037 = vunpack.c.l.bf16 %v2989
      %v3038 = vunpack.c.l.bf16 %v2990
      %v3039 = vunpack.c.l.bf16 %v2991
      %v3040 = vunpack.c.l.bf16 %v2992
      %v3041 = vunpack.c.l.bf16 %v2993
      %v3042 = vunpack.c.l.bf16 %v2994
      %v3043 = vunpack.c.l.bf16 %v2995
      %v3044 = vunpack.c.l.bf16 %v2996
      %v3045 = vunpack.c.l.bf16 %v2997
      %v3094 = vrot.slane %v2998, 1
      %v3095 = vrot.slane %v2999, 1
      %v3096 = vsel %vm370, %v3094, %v3095
      %v3097 = vrot.slane %v3000, 1
      %v3098 = vsel %vm370, %v3095, %v3097
      %v3099 = vrot.slane %v3001, 1
      %v3100 = vrot.slane %v3002, 1
      %v3101 = vsel %vm370, %v3099, %v3100
      %v3102 = vrot.slane %v3003, 1
      %v3103 = vsel %vm370, %v3100, %v3102
      %v3104 = vrot.slane %v3004, 1
      %v3105 = vrot.slane %v3005, 1
      %v3106 = vsel %vm370, %v3104, %v3105
      %v3107 = vrot.slane %v3006, 1
      %v3108 = vsel %vm370, %v3105, %v3107
      %v3109 = vrot.slane %v3007, 1
      %v3110 = vrot.slane %v3008, 1
      %v3111 = vsel %vm370, %v3109, %v3110
      %v3112 = vrot.slane %v3009, 1
      %v3113 = vsel %vm370, %v3110, %v3112
      %v3114 = vrot.slane %v3010, 1
      %v3115 = vrot.slane %v3011, 1
      %v3116 = vsel %vm370, %v3114, %v3115
      %v3117 = vrot.slane %v3012, 1
      %v3118 = vsel %vm370, %v3115, %v3117
      %v3119 = vrot.slane %v3013, 1
      %v3120 = vrot.slane %v3014, 1
      %v3121 = vsel %vm370, %v3119, %v3120
      %v3122 = vrot.slane %v3015, 1
      %v3123 = vsel %vm370, %v3120, %v3122
      %v3124 = vrot.slane %v3016, 1
      %v3125 = vrot.slane %v3017, 1
      %v3126 = vsel %vm370, %v3124, %v3125
      %v3127 = vrot.slane %v3018, 1
      %v3128 = vsel %vm370, %v3125, %v3127
      %v3129 = vrot.slane %v3019, 1
      %v3130 = vrot.slane %v3020, 1
      %v3131 = vsel %vm370, %v3129, %v3130
      %v3132 = vrot.slane %v3021, 1
      %v3133 = vsel %vm370, %v3130, %v3132
      %v3134 = vrot.slane %v3022, 1
      %v3135 = vrot.slane %v3023, 1
      %v3136 = vsel %vm370, %v3134, %v3135
      %v3137 = vrot.slane %v3024, 1
      %v3138 = vsel %vm370, %v3135, %v3137
      %v3139 = vrot.slane %v3025, 1
      %v3140 = vrot.slane %v3026, 1
      %v3141 = vsel %vm370, %v3139, %v3140
      %v3142 = vrot.slane %v3027, 1
      %v3143 = vsel %vm370, %v3140, %v3142
      %v3144 = vrot.slane %v3028, 1
      %v3145 = vrot.slane %v3029, 1
      %v3146 = vsel %vm370, %v3144, %v3145
      %v3147 = vrot.slane %v3030, 1
      %v3148 = vsel %vm370, %v3145, %v3147
      %v3149 = vrot.slane %v3031, 1
      %v3150 = vrot.slane %v3032, 1
      %v3151 = vsel %vm370, %v3149, %v3150
      %v3152 = vrot.slane %v3033, 1
      %v3153 = vsel %vm370, %v3150, %v3152
      %v3154 = vrot.slane %v3034, 1
      %v3155 = vrot.slane %v3035, 1
      %v3156 = vsel %vm370, %v3154, %v3155
      %v3157 = vrot.slane %v3036, 1
      %v3158 = vsel %vm370, %v3155, %v3157
      %v3159 = vrot.slane %v3037, 1
      %v3160 = vrot.slane %v3038, 1
      %v3161 = vsel %vm370, %v3159, %v3160
      %v3162 = vrot.slane %v3039, 1
      %v3163 = vsel %vm370, %v3160, %v3162
      %v3164 = vrot.slane %v3040, 1
      %v3165 = vrot.slane %v3041, 1
      %v3166 = vsel %vm370, %v3164, %v3165
      %v3167 = vrot.slane %v3042, 1
      %v3168 = vsel %vm370, %v3165, %v3167
      %v3169 = vrot.slane %v3043, 1
      %v3170 = vrot.slane %v3044, 1
      %v3171 = vsel %vm370, %v3169, %v3170
      %v3172 = vrot.slane %v3045, 1
      %v3173 = vsel %vm370, %v3170, %v3172
      %v3206 = vpack.c.bf16 %v3098, %v3096
      %v3207 = vpack.c.bf16 %v3103, %v3101
      %v3208 = vpack.c.bf16 %v3108, %v3106
      %v3209 = vpack.c.bf16 %v3113, %v3111
      %v3210 = vpack.c.bf16 %v3118, %v3116
      %v3211 = vpack.c.bf16 %v3123, %v3121
      %v3212 = vpack.c.bf16 %v3128, %v3126
      %v3213 = vpack.c.bf16 %v3133, %v3131
      %v3214 = vpack.c.bf16 %v3138, %v3136
      %v3215 = vpack.c.bf16 %v3143, %v3141
      %v3216 = vpack.c.bf16 %v3148, %v3146
      %v3217 = vpack.c.bf16 %v3153, %v3151
      %v3218 = vpack.c.bf16 %v3158, %v3156
      %v3219 = vpack.c.bf16 %v3163, %v3161
      %v3220 = vpack.c.bf16 %v3168, %v3166
      %v3221 = vpack.c.bf16 %v3173, %v3171
      %s3222 = scalar_lea.vmem %s1, 14
      %v3223 = vld [vmem:[%s3222] sm:$0x3]
      %v3225 = vsel %vm501, %v3206, 0
      %v3228 = vsel %vm501, %v3207, 0
      %v3231 = vsel %vm501, %v3208, 0
      %v3234 = vsel %vm501, %v3209, 0
      %v3237 = vsel %vm501, %v3210, 0
      %v3240 = vsel %vm501, %v3211, 0
      %v3243 = vsel %vm501, %v3212, 0
      %v3246 = vsel %vm501, %v3213, 0
      %v3249 = vsel %vm501, %v3214, 0
      %v3252 = vsel %vm501, %v3215, 0
      %v3255 = vsel %vm501, %v3216, 0
      %v3258 = vsel %vm501, %v3217, 0
      %v3261 = vsel %vm501, %v3218, 0
      %v3264 = vsel %vm501, %v3219, 0
      %v3267 = vsel %vm501, %v3220, 0
      %v3270 = vsel %vm501, %v3221, 0
      %v3273 = vsel %vm550, %v3223, 0
      %3275 = vmatprep.subr.bf16.mxu0 0
      %3276 = vmatpush1.bf16.msra.mxu0 %v3273
      %3277 = vmatprep.subr.bf16.mxu0 0
      %3278 = vmatpush1.bf16.msra.mxu0 0
      %3279 = vmatprep.subr.bf16.mxu0 0
      %3280 = vmatpush1.bf16.msra.mxu0 0
      %3281 = vmatprep.subr.bf16.mxu0 0
      %3282 = vmatpush1.bf16.msra.mxu0 0
      %3283 = vmatprep.subr.bf16.mxu0 0
      %3284 = vmatpush1.bf16.msra.mxu0 0
      %3285 = vmatprep.subr.bf16.mxu0 0
      %3286 = vmatpush1.bf16.msra.mxu0 0
      %3287 = vmatprep.subr.bf16.mxu0 0
      %3288 = vmatpush1.bf16.msra.mxu0 0
      %3289 = vmatprep.subr.bf16.mxu0 0
      %3290 = vmatpush1.bf16.msra.mxu0 0
      %3291 = vmatprep.subr.bf16.mxu0 0
      %3292 = vmatpush1.bf16.msra.mxu0 0
      %3293 = vmatprep.subr.bf16.mxu0 0
      %3294 = vmatpush1.bf16.msra.mxu0 0
      %3295 = vmatprep.subr.bf16.mxu0 0
      %3296 = vmatpush1.bf16.msra.mxu0 0
      %3297 = vmatprep.subr.bf16.mxu0 0
      %3298 = vmatpush1.bf16.msra.mxu0 0
      %3299 = vmatprep.subr.bf16.mxu0 0
      %3300 = vmatpush1.bf16.msra.mxu0 0
      %3301 = vmatprep.subr.bf16.mxu0 0
      %3302 = vmatpush1.bf16.msra.mxu0 0
      %3303 = vmatprep.subr.bf16.mxu0 0
      %3304 = vmatpush1.bf16.msra.mxu0 0
      %3305 = vmatprep.subr.bf16.mxu0 0
      %3306 = vmatpush1.bf16.msra.mxu0 0
      %3307 = vmatprep.mubr.bf16.mxu0 0
      %3308 = vmatmul.mubr.bf16.gmra.mrb[0].mxu0 %v3225
      %v3309 = vpop.f32.mrb[0].mxu0
      %v3310 = vadd.f32 0.0, %v3309
      %v3311 = vpop.f32.mrb[0].mxu0
      %v3312 = vpop.f32.mrb[0].mxu0
      %v3313 = vadd.f32 0.0, %v3312
      %v3314 = vpop.f32.mrb[0].mxu0
      %3315 = vmatprep.mubr.bf16.mxu0 0
      %3316 = vmatmul.mubr.bf16.gmra.mrb[0].mxu0 %v3228
      %v3317 = vpop.f32.mrb[0].mxu0
      %v3318 = vadd.f32 0.0, %v3317
      %v3319 = vpop.f32.mrb[0].mxu0
      %v3320 = vpop.f32.mrb[0].mxu0
      %v3321 = vadd.f32 0.0, %v3320
      %v3322 = vpop.f32.mrb[0].mxu0
      %3323 = vmatprep.mubr.bf16.mxu0 0
      %3324 = vmatmul.mubr.bf16.gmra.mrb[0].mxu0 %v3231
      %v3325 = vpop.f32.mrb[0].mxu0
      %v3326 = vadd.f32 0.0, %v3325
      %v3327 = vpop.f32.mrb[0].mxu0
      %v3328 = vpop.f32.mrb[0].mxu0
      %v3329 = vadd.f32 0.0, %v3328
      %v3330 = vpop.f32.mrb[0].mxu0
      %3331 = vmatprep.mubr.bf16.mxu0 0
      %3332 = vmatmul.mubr.bf16.gmra.mrb[0].mxu0 %v3234
      %v3333 = vpop.f32.mrb[0].mxu0
      %v3334 = vadd.f32 0.0, %v3333
      %v3335 = vpop.f32.mrb[0].mxu0
      %v3336 = vpop.f32.mrb[0].mxu0
      %v3337 = vadd.f32 0.0, %v3336
      %v3338 = vpop.f32.mrb[0].mxu0
      %3339 = vmatprep.mubr.bf16.mxu0 0
      %3340 = vmatmul.mubr.bf16.gmra.mrb[0].mxu0 %v3237
      %v3341 = vpop.f32.mrb[0].mxu0
      %v3342 = vadd.f32 0.0, %v3341
      %v3343 = vpop.f32.mrb[0].mxu0
      %v3344 = vpop.f32.mrb[0].mxu0
      %v3345 = vadd.f32 0.0, %v3344
      %v3346 = vpop.f32.mrb[0].mxu0
      %3347 = vmatprep.mubr.bf16.mxu0 0
      %3348 = vmatmul.mubr.bf16.gmra.mrb[0].mxu0 %v3240
      %v3349 = vpop.f32.mrb[0].mxu0
      %v3350 = vadd.f32 0.0, %v3349
      %v3351 = vpop.f32.mrb[0].mxu0
      %v3352 = vpop.f32.mrb[0].mxu0
      %v3353 = vadd.f32 0.0, %v3352
      %v3354 = vpop.f32.mrb[0].mxu0
      %3355 = vmatprep.mubr.bf16.mxu0 0
      %3356 = vmatmul.mubr.bf16.gmra.mrb[0].mxu0 %v3243
      %v3357 = vpop.f32.mrb[0].mxu0
      %v3358 = vadd.f32 0.0, %v3357
      %v3359 = vpop.f32.mrb[0].mxu0
      %v3360 = vpop.f32.mrb[0].mxu0
      %v3361 = vadd.f32 0.0, %v3360
      %v3362 = vpop.f32.mrb[0].mxu0
      %3363 = vmatprep.mubr.bf16.mxu0 0
      %3364 = vmatmul.mubr.bf16.gmra.mrb[0].mxu0 %v3246
      %v3365 = vpop.f32.mrb[0].mxu0
      %v3366 = vadd.f32 0.0, %v3365
      %v3367 = vpop.f32.mrb[0].mxu0
      %v3368 = vpop.f32.mrb[0].mxu0
      %v3369 = vadd.f32 0.0, %v3368
      %v3370 = vpop.f32.mrb[0].mxu0
      %3371 = vmatprep.mubr.bf16.mxu0 0
      %3372 = vmatmul.mubr.bf16.gmra.mrb[0].mxu0 %v3249
      %v3373 = vpop.f32.mrb[0].mxu0
      %v3374 = vadd.f32 0.0, %v3373
      %v3375 = vpop.f32.mrb[0].mxu0
      %v3376 = vpop.f32.mrb[0].mxu0
      %v3377 = vadd.f32 0.0, %v3376
      %v3378 = vpop.f32.mrb[0].mxu0
      %3379 = vmatprep.mubr.bf16.mxu0 0
      %3380 = vmatmul.mubr.bf16.gmra.mrb[0].mxu0 %v3252
      %v3381 = vpop.f32.mrb[0].mxu0
      %v3382 = vadd.f32 0.0, %v3381
      %v3383 = vpop.f32.mrb[0].mxu0
      %v3384 = vpop.f32.mrb[0].mxu0
      %v3385 = vadd.f32 0.0, %v3384
      %v3386 = vpop.f32.mrb[0].mxu0
      %3387 = vmatprep.mubr.bf16.mxu0 0
      %3388 = vmatmul.mubr.bf16.gmra.mrb[0].mxu0 %v3255
      %v3389 = vpop.f32.mrb[0].mxu0
      %v3390 = vadd.f32 0.0, %v3389
      %v3391 = vpop.f32.mrb[0].mxu0
      %v3392 = vpop.f32.mrb[0].mxu0
      %v3393 = vadd.f32 0.0, %v3392
      %v3394 = vpop.f32.mrb[0].mxu0
      %3395 = vmatprep.mubr.bf16.mxu0 0
      %3396 = vmatmul.mubr.bf16.gmra.mrb[0].mxu0 %v3258
      %v3397 = vpop.f32.mrb[0].mxu0
      %v3398 = vadd.f32 0.0, %v3397
      %v3399 = vpop.f32.mrb[0].mxu0
      %v3400 = vpop.f32.mrb[0].mxu0
      %v3401 = vadd.f32 0.0, %v3400
      %v3402 = vpop.f32.mrb[0].mxu0
      %3403 = vmatprep.mubr.bf16.mxu0 0
      %3404 = vmatmul.mubr.bf16.gmra.mrb[0].mxu0 %v3261
      %v3405 = vpop.f32.mrb[0].mxu0
      %v3406 = vadd.f32 0.0, %v3405
      %v3407 = vpop.f32.mrb[0].mxu0
      %v3408 = vpop.f32.mrb[0].mxu0
      %v3409 = vadd.f32 0.0, %v3408
      %v3410 = vpop.f32.mrb[0].mxu0
      %3411 = vmatprep.mubr.bf16.mxu0 0
      %3412 = vmatmul.mubr.bf16.gmra.mrb[0].mxu0 %v3264
      %v3413 = vpop.f32.mrb[0].mxu0
      %v3414 = vadd.f32 0.0, %v3413
      %v3415 = vpop.f32.mrb[0].mxu0
      %v3416 = vpop.f32.mrb[0].mxu0
      %v3417 = vadd.f32 0.0, %v3416
      %v3418 = vpop.f32.mrb[0].mxu0
      %3419 = vmatprep.mubr.bf16.mxu0 0
      %3420 = vmatmul.mubr.bf16.gmra.mrb[0].mxu0 %v3267
      %v3421 = vpop.f32.mrb[0].mxu0
      %v3422 = vadd.f32 0.0, %v3421
      %v3423 = vpop.f32.mrb[0].mxu0
      %v3424 = vpop.f32.mrb[0].mxu0
      %v3425 = vadd.f32 0.0, %v3424
      %v3426 = vpop.f32.mrb[0].mxu0
      %3427 = vmatprep.mubr.bf16.mxu0 0
      %3428 = vmatmul.mubr.bf16.gmra.mrb[0].mxu0 %v3270
      %v3429 = vpop.f32.mrb[0].mxu0
      %v3430 = vadd.f32 0.0, %v3429
      %v3431 = vpop.f32.mrb[0].mxu0
      %v3432 = vpop.f32.mrb[0].mxu0
      %v3433 = vadd.f32 0.0, %v3432
      %v3434 = vpop.f32.mrb[0].mxu0
      %3435 = vdwg.mxu0
      %v3436 = vadd.f32 %v2918, %v3310
      %v3437 = vadd.f32 %v2919, %v3313
      %v3438 = vadd.f32 %v2920, %v3318
      %v3439 = vadd.f32 %v2921, %v3321
      %v3440 = vadd.f32 %v2922, %v3326
      %v3441 = vadd.f32 %v2923, %v3329
      %v3442 = vadd.f32 %v2924, %v3334
      %v3443 = vadd.f32 %v2925, %v3337
      %v3444 = vadd.f32 %v2926, %v3342
      %v3445 = vadd.f32 %v2927, %v3345
      %v3446 = vadd.f32 %v2928, %v3350
      %v3447 = vadd.f32 %v2929, %v3353
      %v3448 = vadd.f32 %v2930, %v3358
      %v3449 = vadd.f32 %v2931, %v3361
      %v3450 = vadd.f32 %v2932, %v3366
      %v3451 = vadd.f32 %v2933, %v3369
      %v3452 = vadd.f32 %v2934, %v3374
      %v3453 = vadd.f32 %v2935, %v3377
      %v3454 = vadd.f32 %v2936, %v3382
      %v3455 = vadd.f32 %v2937, %v3385
      %v3456 = vadd.f32 %v2938, %v3390
      %v3457 = vadd.f32 %v2939, %v3393
      %v3458 = vadd.f32 %v2940, %v3398
      %v3459 = vadd.f32 %v2941, %v3401
      %v3460 = vadd.f32 %v2942, %v3406
      %v3461 = vadd.f32 %v2943, %v3409
      %v3462 = vadd.f32 %v2944, %v3414
      %v3463 = vadd.f32 %v2945, %v3417
      %v3464 = vadd.f32 %v2946, %v3422
      %v3465 = vadd.f32 %v2947, %v3425
      %v3466 = vadd.f32 %v2948, %v3430
      %v3467 = vadd.f32 %v2949, %v3433
      %v3468 = vld [vmem:[%s2623] sm:$0xe]
      %v3469 = vld [vmem:[%s2623 + $0xc] sm:$0xe]
      %v3470 = vld [vmem:[%s2623 + $0x18] sm:$0xe]
      %v3471 = vld [vmem:[%s2623 + $0x24] sm:$0xe]
      %v3472 = vld [vmem:[%s2623 + $0x30] sm:$0xe]
      %v3473 = vld [vmem:[%s2623 + $0x3c] sm:$0xe]
      %v3474 = vld [vmem:[%s2623 + $0x48] sm:$0xe]
      %v3475 = vld [vmem:[%s2623 + $0x54] sm:$0xe]
      %v3476 = vld [vmem:[%s2623 + $0x60] sm:$0xe]
      %v3477 = vld [vmem:[%s2623 + $0x6c] sm:$0xe]
      %v3478 = vld [vmem:[%s2623 + $0x78] sm:$0xe]
      %v3479 = vld [vmem:[%s2623 + $0x84] sm:$0xe]
      %v3480 = vld [vmem:[%s2623 + $0x90] sm:$0xe]
      %v3481 = vld [vmem:[%s2623 + $0x9c] sm:$0xe]
      %v3482 = vld [vmem:[%s2623 + $0xa8] sm:$0xe]
      %v3483 = vld [vmem:[%s2623 + $0xb4] sm:$0xe]
      %v3484 = vunpack.c.l.bf16 %v3468
      %v3485 = vunpack.c.l.bf16 %v3469
      %v3486 = vunpack.c.l.bf16 %v3470
      %v3487 = vunpack.c.l.bf16 %v3471
      %v3488 = vunpack.c.l.bf16 %v3472
      %v3489 = vunpack.c.l.bf16 %v3473
      %v3490 = vunpack.c.l.bf16 %v3474
      %v3491 = vunpack.c.l.bf16 %v3475
      %v3492 = vunpack.c.l.bf16 %v3476
      %v3493 = vunpack.c.l.bf16 %v3477
      %v3494 = vunpack.c.l.bf16 %v3478
      %v3495 = vunpack.c.l.bf16 %v3479
      %v3496 = vunpack.c.l.bf16 %v3480
      %v3497 = vunpack.c.l.bf16 %v3481
      %v3498 = vunpack.c.l.bf16 %v3482
      %v3499 = vunpack.c.l.bf16 %v3483
      %v3516 = vrot.slane %v3484, 2
      %v3517 = vrot.slane %v2999, 2
      %v3518 = vsel %vm975, %v3516, %v3517
      %v3519 = vrot.slane %v3000, 2
      %v3520 = vsel %vm975, %v3517, %v3519
      %v3521 = vrot.slane %v3485, 2
      %v3522 = vrot.slane %v3002, 2
      %v3523 = vsel %vm975, %v3521, %v3522
      %v3524 = vrot.slane %v3003, 2
      %v3525 = vsel %vm975, %v3522, %v3524
      %v3526 = vrot.slane %v3486, 2
      %v3527 = vrot.slane %v3005, 2
      %v3528 = vsel %vm975, %v3526, %v3527
      %v3529 = vrot.slane %v3006, 2
      %v3530 = vsel %vm975, %v3527, %v3529
      %v3531 = vrot.slane %v3487, 2
      %v3532 = vrot.slane %v3008, 2
      %v3533 = vsel %vm975, %v3531, %v3532
      %v3534 = vrot.slane %v3009, 2
      %v3535 = vsel %vm975, %v3532, %v3534
      %v3536 = vrot.slane %v3488, 2
      %v3537 = vrot.slane %v3011, 2
      %v3538 = vsel %vm975, %v3536, %v3537
      %v3539 = vrot.slane %v3012, 2
      %v3540 = vsel %vm975, %v3537, %v3539
      %v3541 = vrot.slane %v3489, 2
      %v3542 = vrot.slane %v3014, 2
      %v3543 = vsel %vm975, %v3541, %v3542
      %v3544 = vrot.slane %v3015, 2
      %v3545 = vsel %vm975, %v3542, %v3544
      %v3546 = vrot.slane %v3490, 2
      %v3547 = vrot.slane %v3017, 2
      %v3548 = vsel %vm975, %v3546, %v3547
      %v3549 = vrot.slane %v3018, 2
      %v3550 = vsel %vm975, %v3547, %v3549
      %v3551 = vrot.slane %v3491, 2
      %v3552 = vrot.slane %v3020, 2
      %v3553 = vsel %vm975, %v3551, %v3552
      %v3554 = vrot.slane %v3021, 2
      %v3555 = vsel %vm975, %v3552, %v3554
      %v3556 = vrot.slane %v3492, 2
      %v3557 = vrot.slane %v3023, 2
      %v3558 = vsel %vm975, %v3556, %v3557
      %v3559 = vrot.slane %v3024, 2
      %v3560 = vsel %vm975, %v3557, %v3559
      %v3561 = vrot.slane %v3493, 2
      %v3562 = vrot.slane %v3026, 2
      %v3563 = vsel %vm975, %v3561, %v3562
      %v3564 = vrot.slane %v3027, 2
      %v3565 = vsel %vm975, %v3562, %v3564
      %v3566 = vrot.slane %v3494, 2
      %v3567 = vrot.slane %v3029, 2
      %v3568 = vsel %vm975, %v3566, %v3567
      %v3569 = vrot.slane %v3030, 2
      %v3570 = vsel %vm975, %v3567, %v3569
      %v3571 = vrot.slane %v3495, 2
      %v3572 = vrot.slane %v3032, 2
      %v3573 = vsel %vm975, %v3571, %v3572
      %v3574 = vrot.slane %v3033, 2
      %v3575 = vsel %vm975, %v3572, %v3574
      %v3576 = vrot.slane %v3496, 2
      %v3577 = vrot.slane %v3035, 2
      %v3578 = vsel %vm975, %v3576, %v3577
      %v3579 = vrot.slane %v3036, 2
      %v3580 = vsel %vm975, %v3577, %v3579
      %v3581 = vrot.slane %v3497, 2
      %v3582 = vrot.slane %v3038, 2
      %v3583 = vsel %vm975, %v3581, %v3582
      %v3584 = vrot.slane %v3039, 2
      %v3585 = vsel %vm975, %v3582, %v3584
      %v3586 = vrot.slane %v3498, 2
      %v3587 = vrot.slane %v3041, 2
      %v3588 = vsel %vm975, %v3586, %v3587
      %v3589 = vrot.slane %v3042, 2
      %v3590 = vsel %vm975, %v3587, %v3589
      %v3591 = vrot.slane %v3499, 2
      %v3592 = vrot.slane %v3044, 2
      %v3593 = vsel %vm975, %v3591, %v3592
      %v3594 = vrot.slane %v3045, 2
      %v3595 = vsel %vm975, %v3592, %v3594
      %v3628 = vpack.c.bf16 %v3520, %v3518
      %v3629 = vpack.c.bf16 %v3525, %v3523
      %v3630 = vpack.c.bf16 %v3530, %v3528
      %v3631 = vpack.c.bf16 %v3535, %v3533
      %v3632 = vpack.c.bf16 %v3540, %v3538
      %v3633 = vpack.c.bf16 %v3545, %v3543
      %v3634 = vpack.c.bf16 %v3550, %v3548
      %v3635 = vpack.c.bf16 %v3555, %v3553
      %v3636 = vpack.c.bf16 %v3560, %v3558
      %v3637 = vpack.c.bf16 %v3565, %v3563
      %v3638 = vpack.c.bf16 %v3570, %v3568
      %v3639 = vpack.c.bf16 %v3575, %v3573
      %v3640 = vpack.c.bf16 %v3580, %v3578
      %v3641 = vpack.c.bf16 %v3585, %v3583
      %v3642 = vpack.c.bf16 %v3590, %v3588
      %v3643 = vpack.c.bf16 %v3595, %v3593
      %s3644 = scalar_lea.vmem %s1, 16
      %v3645 = vld [vmem:[%s3644] sm:$0x3]
      %v3647 = vsel %vm501, %v3628, 0
      %v3650 = vsel %vm501, %v3629, 0
      %v3653 = vsel %vm501, %v3630, 0
      %v3656 = vsel %vm501, %v3631, 0
      %v3659 = vsel %vm501, %v3632, 0
      %v3662 = vsel %vm501, %v3633, 0
      %v3665 = vsel %vm501, %v3634, 0
      %v3668 = vsel %vm501, %v3635, 0
      %v3671 = vsel %vm501, %v3636, 0
      %v3674 = vsel %vm501, %v3637, 0
      %v3677 = vsel %vm501, %v3638, 0
      %v3680 = vsel %vm501, %v3639, 0
      %v3683 = vsel %vm501, %v3640, 0
      %v3686 = vsel %vm501, %v3641, 0
      %v3689 = vsel %vm501, %v3642, 0
      %v3692 = vsel %vm501, %v3643, 0
      %v3695 = vsel %vm550, %v3645, 0
      %3697 = vmatprep.subr.bf16.mxu0 0
      %3698 = vmatpush1.bf16.msra.mxu0 %v3695
      %3699 = vmatprep.subr.bf16.mxu0 0
      %3700 = vmatpush1.bf16.msra.mxu0 0
      %3701 = vmatprep.subr.bf16.mxu0 0
      %3702 = vmatpush1.bf16.msra.mxu0 0
      %3703 = vmatprep.subr.bf16.mxu0 0
      %3704 = vmatpush1.bf16.msra.mxu0 0
      %3705 = vmatprep.subr.bf16.mxu0 0
      %3706 = vmatpush1.bf16.msra.mxu0 0
      %3707 = vmatprep.subr.bf16.mxu0 0
      %3708 = vmatpush1.bf16.msra.mxu0 0
      %3709 = vmatprep.subr.bf16.mxu0 0
      %3710 = vmatpush1.bf16.msra.mxu0 0
      %3711 = vmatprep.subr.bf16.mxu0 0
      %3712 = vmatpush1.bf16.msra.mxu0 0
      %3713 = vmatprep.subr.bf16.mxu0 0
      %3714 = vmatpush1.bf16.msra.mxu0 0
      %3715 = vmatprep.subr.bf16.mxu0 0
      %3716 = vmatpush1.bf16.msra.mxu0 0
      %3717 = vmatprep.subr.bf16.mxu0 0
      %3718 = vmatpush1.bf16.msra.mxu0 0
      %3719 = vmatprep.subr.bf16.mxu0 0
      %3720 = vmatpush1.bf16.msra.mxu0 0
      %3721 = vmatprep.subr.bf16.mxu0 0
      %3722 = vmatpush1.bf16.msra.mxu0 0
      %3723 = vmatprep.subr.bf16.mxu0 0
      %3724 = vmatpush1.bf16.msra.mxu0 0
      %3725 = vmatprep.subr.bf16.mxu0 0
      %3726 = vmatpush1.bf16.msra.mxu0 0
      %3727 = vmatprep.subr.bf16.mxu0 0
      %3728 = vmatpush1.bf16.msra.mxu0 0
      %3729 = vmatprep.mubr.bf16.mxu0 0
      %3730 = vmatmul.mubr.bf16.gmra.mrb[0].mxu0 %v3647
      %v3731 = vpop.f32.mrb[0].mxu0
      %v3732 = vadd.f32 0.0, %v3731
      %v3733 = vpop.f32.mrb[0].mxu0
      %v3734 = vpop.f32.mrb[0].mxu0
      %v3735 = vadd.f32 0.0, %v3734
      %v3736 = vpop.f32.mrb[0].mxu0
      %3737 = vmatprep.mubr.bf16.mxu0 0
      %3738 = vmatmul.mubr.bf16.gmra.mrb[0].mxu0 %v3650
      %v3739 = vpop.f32.mrb[0].mxu0
      %v3740 = vadd.f32 0.0, %v3739
      %v3741 = vpop.f32.mrb[0].mxu0
      %v3742 = vpop.f32.mrb[0].mxu0
      %v3743 = vadd.f32 0.0, %v3742
      %v3744 = vpop.f32.mrb[0].mxu0
      %3745 = vmatprep.mubr.bf16.mxu0 0
      %3746 = vmatmul.mubr.bf16.gmra.mrb[0].mxu0 %v3653
      %v3747 = vpop.f32.mrb[0].mxu0
      %v3748 = vadd.f32 0.0, %v3747
      %v3749 = vpop.f32.mrb[0].mxu0
      %v3750 = vpop.f32.mrb[0].mxu0
      %v3751 = vadd.f32 0.0, %v3750
      %v3752 = vpop.f32.mrb[0].mxu0
      %3753 = vmatprep.mubr.bf16.mxu0 0
      %3754 = vmatmul.mubr.bf16.gmra.mrb[0].mxu0 %v3656
      %v3755 = vpop.f32.mrb[0].mxu0
      %v3756 = vadd.f32 0.0, %v3755
      %v3757 = vpop.f32.mrb[0].mxu0
      %v3758 = vpop.f32.mrb[0].mxu0
      %v3759 = vadd.f32 0.0, %v3758
      %v3760 = vpop.f32.mrb[0].mxu0
      %3761 = vmatprep.mubr.bf16.mxu0 0
      %3762 = vmatmul.mubr.bf16.gmra.mrb[0].mxu0 %v3659
      %v3763 = vpop.f32.mrb[0].mxu0
      %v3764 = vadd.f32 0.0, %v3763
      %v3765 = vpop.f32.mrb[0].mxu0
      %v3766 = vpop.f32.mrb[0].mxu0
      %v3767 = vadd.f32 0.0, %v3766
      %v3768 = vpop.f32.mrb[0].mxu0
      %3769 = vmatprep.mubr.bf16.mxu0 0
      %3770 = vmatmul.mubr.bf16.gmra.mrb[0].mxu0 %v3662
      %v3771 = vpop.f32.mrb[0].mxu0
      %v3772 = vadd.f32 0.0, %v3771
      %v3773 = vpop.f32.mrb[0].mxu0
      %v3774 = vpop.f32.mrb[0].mxu0
      %v3775 = vadd.f32 0.0, %v3774
      %v3776 = vpop.f32.mrb[0].mxu0
      %3777 = vmatprep.mubr.bf16.mxu0 0
      %3778 = vmatmul.mubr.bf16.gmra.mrb[0].mxu0 %v3665
      %v3779 = vpop.f32.mrb[0].mxu0
      %v3780 = vadd.f32 0.0, %v3779
      %v3781 = vpop.f32.mrb[0].mxu0
      %v3782 = vpop.f32.mrb[0].mxu0
      %v3783 = vadd.f32 0.0, %v3782
      %v3784 = vpop.f32.mrb[0].mxu0
      %3785 = vmatprep.mubr.bf16.mxu0 0
      %3786 = vmatmul.mubr.bf16.gmra.mrb[0].mxu0 %v3668
      %v3787 = vpop.f32.mrb[0].mxu0
      %v3788 = vadd.f32 0.0, %v3787
      %v3789 = vpop.f32.mrb[0].mxu0
      %v3790 = vpop.f32.mrb[0].mxu0
      %v3791 = vadd.f32 0.0, %v3790
      %v3792 = vpop.f32.mrb[0].mxu0
      %3793 = vmatprep.mubr.bf16.mxu0 0
      %3794 = vmatmul.mubr.bf16.gmra.mrb[0].mxu0 %v3671
      %v3795 = vpop.f32.mrb[0].mxu0
      %v3796 = vadd.f32 0.0, %v3795
      %v3797 = vpop.f32.mrb[0].mxu0
      %v3798 = vpop.f32.mrb[0].mxu0
      %v3799 = vadd.f32 0.0, %v3798
      %v3800 = vpop.f32.mrb[0].mxu0
      %3801 = vmatprep.mubr.bf16.mxu0 0
      %3802 = vmatmul.mubr.bf16.gmra.mrb[0].mxu0 %v3674
      %v3803 = vpop.f32.mrb[0].mxu0
      %v3804 = vadd.f32 0.0, %v3803
      %v3805 = vpop.f32.mrb[0].mxu0
      %v3806 = vpop.f32.mrb[0].mxu0
      %v3807 = vadd.f32 0.0, %v3806
      %v3808 = vpop.f32.mrb[0].mxu0
      %3809 = vmatprep.mubr.bf16.mxu0 0
      %3810 = vmatmul.mubr.bf16.gmra.mrb[0].mxu0 %v3677
      %v3811 = vpop.f32.mrb[0].mxu0
      %v3812 = vadd.f32 0.0, %v3811
      %v3813 = vpop.f32.mrb[0].mxu0
      %v3814 = vpop.f32.mrb[0].mxu0
      %v3815 = vadd.f32 0.0, %v3814
      %v3816 = vpop.f32.mrb[0].mxu0
      %3817 = vmatprep.mubr.bf16.mxu0 0
      %3818 = vmatmul.mubr.bf16.gmra.mrb[0].mxu0 %v3680
      %v3819 = vpop.f32.mrb[0].mxu0
      %v3820 = vadd.f32 0.0, %v3819
      %v3821 = vpop.f32.mrb[0].mxu0
      %v3822 = vpop.f32.mrb[0].mxu0
      %v3823 = vadd.f32 0.0, %v3822
      %v3824 = vpop.f32.mrb[0].mxu0
      %3825 = vmatprep.mubr.bf16.mxu0 0
      %3826 = vmatmul.mubr.bf16.gmra.mrb[0].mxu0 %v3683
      %v3827 = vpop.f32.mrb[0].mxu0
      %v3828 = vadd.f32 0.0, %v3827
      %v3829 = vpop.f32.mrb[0].mxu0
      %v3830 = vpop.f32.mrb[0].mxu0
      %v3831 = vadd.f32 0.0, %v3830
      %v3832 = vpop.f32.mrb[0].mxu0
      %3833 = vmatprep.mubr.bf16.mxu0 0
      %3834 = vmatmul.mubr.bf16.gmra.mrb[0].mxu0 %v3686
      %v3835 = vpop.f32.mrb[0].mxu0
      %v3836 = vadd.f32 0.0, %v3835
      %v3837 = vpop.f32.mrb[0].mxu0
      %v3838 = vpop.f32.mrb[0].mxu0
      %v3839 = vadd.f32 0.0, %v3838
      %v3840 = vpop.f32.mrb[0].mxu0
      %3841 = vmatprep.mubr.bf16.mxu0 0
      %3842 = vmatmul.mubr.bf16.gmra.mrb[0].mxu0 %v3689
      %v3843 = vpop.f32.mrb[0].mxu0
      %v3844 = vadd.f32 0.0, %v3843
      %v3845 = vpop.f32.mrb[0].mxu0
      %v3846 = vpop.f32.mrb[0].mxu0
      %v3847 = vadd.f32 0.0, %v3846
      %v3848 = vpop.f32.mrb[0].mxu0
      %3849 = vmatprep.mubr.bf16.mxu0 0
      %3850 = vmatmul.mubr.bf16.gmra.mrb[0].mxu0 %v3692
      %v3851 = vpop.f32.mrb[0].mxu0
      %v3852 = vadd.f32 0.0, %v3851
      %v3853 = vpop.f32.mrb[0].mxu0
      %v3854 = vpop.f32.mrb[0].mxu0
      %v3855 = vadd.f32 0.0, %v3854
      %v3856 = vpop.f32.mrb[0].mxu0
      %3857 = vdwg.mxu0
      %v3858 = vadd.f32 %v3436, %v3732
      %v3859 = vadd.f32 %v3437, %v3735
      %v3860 = vadd.f32 %v3438, %v3740
      %v3861 = vadd.f32 %v3439, %v3743
      %v3862 = vadd.f32 %v3440, %v3748
      %v3863 = vadd.f32 %v3441, %v3751
      %v3864 = vadd.f32 %v3442, %v3756
      %v3865 = vadd.f32 %v3443, %v3759
      %v3866 = vadd.f32 %v3444, %v3764
      %v3867 = vadd.f32 %v3445, %v3767
      %v3868 = vadd.f32 %v3446, %v3772
      %v3869 = vadd.f32 %v3447, %v3775
      %v3870 = vadd.f32 %v3448, %v3780
      %v3871 = vadd.f32 %v3449, %v3783
      %v3872 = vadd.f32 %v3450, %v3788
      %v3873 = vadd.f32 %v3451, %v3791
      %v3874 = vadd.f32 %v3452, %v3796
      %v3875 = vadd.f32 %v3453, %v3799
      %v3876 = vadd.f32 %v3454, %v3804
      %v3877 = vadd.f32 %v3455, %v3807
      %v3878 = vadd.f32 %v3456, %v3812
      %v3879 = vadd.f32 %v3457, %v3815
      %v3880 = vadd.f32 %v3458, %v3820
      %v3881 = vadd.f32 %v3459, %v3823
      %v3882 = vadd.f32 %v3460, %v3828
      %v3883 = vadd.f32 %v3461, %v3831
      %v3884 = vadd.f32 %v3462, %v3836
      %v3885 = vadd.f32 %v3463, %v3839
      %v3886 = vadd.f32 %v3464, %v3844
      %v3887 = vadd.f32 %v3465, %v3847
      %v3888 = vadd.f32 %v3466, %v3852
      %v3889 = vadd.f32 %v3467, %v3855
      %v3890 = vadd.f32 %v3858, %v3859
      %v3891 = vadd.f32 %v3890, %v3860
      %v3892 = vadd.f32 %v3891, %v3861
      %v3893 = vadd.f32 %v3892, %v3862
      %v3894 = vadd.f32 %v3893, %v3863
      %v3895 = vadd.f32 %v3894, %v3864
      %v3896 = vadd.f32 %v3895, %v3865
      %v3897 = vadd.f32 %v3896, %v3866
      %v3898 = vadd.f32 %v3897, %v3867
      %v3899 = vadd.f32 %v3898, %v3868
      %v3900 = vadd.f32 %v3899, %v3869
      %v3901 = vadd.f32 %v3900, %v3870
      %v3902 = vadd.f32 %v3901, %v3871
      %v3903 = vadd.f32 %v3902, %v3872
      %v3904 = vadd.f32 %v3903, %v3873
      %v3905 = vadd.f32 %v3904, %v3874
      %v3906 = vadd.f32 %v3905, %v3875
      %v3907 = vadd.f32 %v3906, %v3876
      %v3908 = vadd.f32 %v3907, %v3877
      %v3909 = vadd.f32 %v3908, %v3878
      %v3910 = vadd.f32 %v3909, %v3879
      %v3911 = vadd.f32 %v3910, %v3880
      %v3912 = vadd.f32 %v3911, %v3881
      %v3913 = vadd.f32 %v3912, %v3882
      %v3914 = vadd.f32 %v3913, %v3883
      %v3915 = vadd.f32 %v3914, %v3884
      %v3916 = vadd.f32 %v3915, %v3885
      %v3917 = vadd.f32 %v3916, %v3886
      %v3918 = vadd.f32 %v3917, %v3887
      %v3919 = vadd.f32 %v3918, %v3888
      %v3920 = vadd.f32 %v3919, %v3889
      %v3921 = vrot.slane %v3920, 4
      %v3922 = vadd.f32 %v3920, %v3921
      %v3923 = vrot.slane %v3922, 2
      %v3924 = vadd.f32 %v3922, %v3923
      %v3925 = vrot.slane %v3924, 1
      %v3926 = vadd.f32 %v3924, %v3925
      %3927 = vst [vmem:[%s202] sm:$0x1] %v3926
      %v3928 = vmul.f32 %v3858, %v3858
      %v3929 = vmul.f32 %v3859, %v3859
      %v3930 = vmul.f32 %v3860, %v3860
      %v3931 = vmul.f32 %v3861, %v3861
      %v3932 = vmul.f32 %v3862, %v3862
      %v3933 = vmul.f32 %v3863, %v3863
      %v3934 = vmul.f32 %v3864, %v3864
      %v3935 = vmul.f32 %v3865, %v3865
      %v3936 = vmul.f32 %v3866, %v3866
      %v3937 = vmul.f32 %v3867, %v3867
      %v3938 = vmul.f32 %v3868, %v3868
      %v3939 = vmul.f32 %v3869, %v3869
      %v3940 = vmul.f32 %v3870, %v3870
      %v3941 = vmul.f32 %v3871, %v3871
      %v3942 = vmul.f32 %v3872, %v3872
      %v3943 = vmul.f32 %v3873, %v3873
      %v3944 = vmul.f32 %v3874, %v3874
      %v3945 = vmul.f32 %v3875, %v3875
      %v3946 = vmul.f32 %v3876, %v3876
      %v3947 = vmul.f32 %v3877, %v3877
      %v3948 = vmul.f32 %v3878, %v3878
      %v3949 = vmul.f32 %v3879, %v3879
      %v3950 = vmul.f32 %v3880, %v3880
      %v3951 = vmul.f32 %v3881, %v3881
      %v3952 = vmul.f32 %v3882, %v3882
      %v3953 = vmul.f32 %v3883, %v3883
      %v3954 = vmul.f32 %v3884, %v3884
      %v3955 = vmul.f32 %v3885, %v3885
      %v3956 = vmul.f32 %v3886, %v3886
      %v3957 = vmul.f32 %v3887, %v3887
      %v3958 = vmul.f32 %v3888, %v3888
      %v3959 = vmul.f32 %v3889, %v3889
      %v3960 = vadd.f32 %v3928, %v3929
      %v3961 = vadd.f32 %v3960, %v3930
      %v3962 = vadd.f32 %v3961, %v3931
      %v3963 = vadd.f32 %v3962, %v3932
      %v3964 = vadd.f32 %v3963, %v3933
      %v3965 = vadd.f32 %v3964, %v3934
      %v3966 = vadd.f32 %v3965, %v3935
      %v3967 = vadd.f32 %v3966, %v3936
      %v3968 = vadd.f32 %v3967, %v3937
      %v3969 = vadd.f32 %v3968, %v3938
      %v3970 = vadd.f32 %v3969, %v3939
      %v3971 = vadd.f32 %v3970, %v3940
      %v3972 = vadd.f32 %v3971, %v3941
      %v3973 = vadd.f32 %v3972, %v3942
      %v3974 = vadd.f32 %v3973, %v3943
      %v3975 = vadd.f32 %v3974, %v3944
      %v3976 = vadd.f32 %v3975, %v3945
      %v3977 = vadd.f32 %v3976, %v3946
      %v3978 = vadd.f32 %v3977, %v3947
      %v3979 = vadd.f32 %v3978, %v3948
      %v3980 = vadd.f32 %v3979, %v3949
      %v3981 = vadd.f32 %v3980, %v3950
      %v3982 = vadd.f32 %v3981, %v3951
      %v3983 = vadd.f32 %v3982, %v3952
      %v3984 = vadd.f32 %v3983, %v3953
      %v3985 = vadd.f32 %v3984, %v3954
      %v3986 = vadd.f32 %v3985, %v3955
      %v3987 = vadd.f32 %v3986, %v3956
      %v3988 = vadd.f32 %v3987, %v3957
      %v3989 = vadd.f32 %v3988, %v3958
      %v3990 = vadd.f32 %v3989, %v3959
      %v3991 = vrot.slane %v3990, 4
      %v3992 = vadd.f32 %v3990, %v3991
      %v3993 = vrot.slane %v3992, 2
      %v3994 = vadd.f32 %v3992, %v3993
      %v3995 = vrot.slane %v3994, 1
      %v3996 = vadd.f32 %v3994, %v3995
      %3997 = vst [vmem:[%s202 + $0x1] sm:$0x1] %v3996
      %3998 = vxpose.xlu0.b32.start [1/16] %v3858, 128
      %3999 = vxpose.xlu0.b32.cont [2/16] %v3859, 128
      %4000 = vxpose.xlu0.b32.cont [3/16] %v3860, 128
      %4001 = vxpose.xlu0.b32.cont [4/16] %v3861, 128
      %4002 = vxpose.xlu0.b32.cont [5/16] %v3862, 128
      %4003 = vxpose.xlu0.b32.cont [6/16] %v3863, 128
      %4004 = vxpose.xlu0.b32.cont [7/16] %v3864, 128
      %4005 = vxpose.xlu0.b32.cont [8/16] %v3865, 128
      %4006 = vxpose.xlu0.b32.cont [9/16] %v3866, 128
      %4007 = vxpose.xlu0.b32.cont [10/16] %v3867, 128
      %4008 = vxpose.xlu0.b32.cont [11/16] %v3868, 128
      %4009 = vxpose.xlu0.b32.cont [12/16] %v3869, 128
      %4010 = vxpose.xlu0.b32.cont [13/16] %v3870, 128
      %4011 = vxpose.xlu0.b32.cont [14/16] %v3871, 128
      %4012 = vxpose.xlu0.b32.cont [15/16] %v3872, 128
      %4013 = vxpose.xlu0.b32.end [16/16] %v3873, 128
      %v4014 = vpop.trf.xlu0
      %v4015 = vpop.trf.xlu0
      %v4016 = vpop.trf.xlu0
      %v4017 = vpop.trf.xlu0
      %v4018 = vpop.trf.xlu0
      %v4019 = vpop.trf.xlu0
      %v4020 = vpop.trf.xlu0
      %v4021 = vpop.trf.xlu0
      %v4022 = vpop.trf.xlu0
      %v4023 = vpop.trf.xlu0
      %v4024 = vpop.trf.xlu0
      %v4025 = vpop.trf.xlu0
      %v4026 = vpop.trf.xlu0
      %v4027 = vpop.trf.xlu0
      %v4028 = vpop.trf.xlu0
      %v4029 = vpop.trf.xlu0
      %4030 = vxpose.xlu0.b32.start [1/16] %v3874, 128
      %4031 = vxpose.xlu0.b32.cont [2/16] %v3875, 128
      %4032 = vxpose.xlu0.b32.cont [3/16] %v3876, 128
      %4033 = vxpose.xlu0.b32.cont [4/16] %v3877, 128
      %4034 = vxpose.xlu0.b32.cont [5/16] %v3878, 128
      %4035 = vxpose.xlu0.b32.cont [6/16] %v3879, 128
      %4036 = vxpose.xlu0.b32.cont [7/16] %v3880, 128
      %4037 = vxpose.xlu0.b32.cont [8/16] %v3881, 128
      %4038 = vxpose.xlu0.b32.cont [9/16] %v3882, 128
      %4039 = vxpose.xlu0.b32.cont [10/16] %v3883, 128
      %4040 = vxpose.xlu0.b32.cont [11/16] %v3884, 128
      %4041 = vxpose.xlu0.b32.cont [12/16] %v3885, 128
      %4042 = vxpose.xlu0.b32.cont [13/16] %v3886, 128
      %4043 = vxpose.xlu0.b32.cont [14/16] %v3887, 128
      %4044 = vxpose.xlu0.b32.cont [15/16] %v3888, 128
      %4045 = vxpose.xlu0.b32.end [16/16] %v3889, 128
      %v4046 = vpop.trf.xlu0
      %v4047 = vpop.trf.xlu0
      %v4048 = vpop.trf.xlu0
      %v4049 = vpop.trf.xlu0
      %v4050 = vpop.trf.xlu0
      %v4051 = vpop.trf.xlu0
      %v4052 = vpop.trf.xlu0
      %v4053 = vpop.trf.xlu0
      %v4054 = vpop.trf.xlu0
      %v4055 = vpop.trf.xlu0
      %v4056 = vpop.trf.xlu0
      %v4057 = vpop.trf.xlu0
      %v4058 = vpop.trf.xlu0
      %v4059 = vpop.trf.xlu0
      %v4060 = vpop.trf.xlu0
      %v4061 = vpop.trf.xlu0
      %v4062 = vpack.c.bf16 %v4014, %v4014
      %v4063 = vpack.c.bf16 %v4046, %v4046
      %v4066 = vunpack.c.l.b16 %v4062
      %v4067 = vunpack.c.l.b16 %v4063
      %v4068 = vpack.c.b16 %v4067, %v4066
      %4070 = vst [vmem:[%s196] sm:$0xff] %v4068
      %s4071 = sadd.s32 %s19, %s20
      %p4072 = scmp.lt.s32.totalorder %s4071, 1
      %s4073 = scalar_select %p4072, %s4071, 1
      %s4074 = smul.addr %s4073, 2
      %s4075 = smul.addr %s4074, 4
      %s4076 = scalar_lea.vmem %s2, %s4075
      %s4077 = sadd.s32 %s19, %s20
      %p4078 = scmp.lt.s32.totalorder %s4077, 1
      %s4079 = scalar_select %p4078, %s4077, 1
      %s4080 = smul.addr %s4079, 2
      %s4081 = scalar_lea.vmem %s3, %s4080
      // Predicated region
      $region29: #{conv2d_batchnorm.2} parent=27 // pred_check
        %p4082 = pneg %p94
      $region30: #{conv2d_batchnorm.2} parent=27 // pred_check_branch
        %4084 = sbr.rel (%p4082) target = $region32
      $region31: #{conv2d_batchnorm.2} parent=27 // pred_region
        %s4085 = sadd.s32 %s19, %s20
      $region32: #{conv2d_batchnorm.2} parent=27 // pred_fallthru
        _
      // Predicated region
      $region33: #{conv2d_batchnorm.2} parent=27 // pred_check
        %p4086 = pneg %p122
      $region34: #{conv2d_batchnorm.2} parent=27 // pred_check_branch
        %4088 = sbr.rel (%p4086) target = $region36
      $region35: #{conv2d_batchnorm.2} parent=27 // pred_region
        %s4089 = sadd.s32 %s19, %s20
      $region36: #{conv2d_batchnorm.2} parent=27 // pred_fallthru
        _
    $region28: #{conv2d_batchnorm.2} parent=5 // pred_fallthru
      _
    %p4090 = scmp.le.s32.totalorder 2, %s10
    // Predicated region
    $region37: #{conv2d_batchnorm.2} parent=5 // pred_check
      %p4091 = pneg %p4090
    $region38: #{conv2d_batchnorm.2} parent=5 // pred_check_branch
      %4093 = sbr.rel (%p4091) target = $region40
    $region39: #{conv2d_batchnorm.2} parent=5 // pred_region
      %s4094 = ssub.s32 %s10, 2
      // Predicated region
      $region41: #{conv2d_batchnorm.2} parent=39 // pred_check
        %p4095 = pneg %p100
      $region42: #{conv2d_batchnorm.2} parent=39 // pred_check_branch
        %4097 = sbr.rel (%p4095) target = $region44
      $region43: #{conv2d_batchnorm.2} parent=39 // pred_region
        %s4098 = sadd.s32 %s21, %s22
        %p4099 = scmp.lt.s32.totalorder %s4098, 1
        %s4100 = scalar_select %p4099, %s4098, 1
        %s4101 = smul.addr %s4100, 2
        %s4102 = smul.addr %s4101, 4
        %s4103 = scalar_lea.vmem %s2, %s4102
      $region44: #{conv2d_batchnorm.2} parent=39 // pred_fallthru
        _
      // Predicated region
      $region45: #{conv2d_batchnorm.2} parent=39 // pred_check
        %p4104 = pneg %p128
      $region46: #{conv2d_batchnorm.2} parent=39 // pred_check_branch
        %4106 = sbr.rel (%p4104) target = $region48
      $region47: #{conv2d_batchnorm.2} parent=39 // pred_region
        %s4107 = sadd.s32 %s21, %s22
        %p4108 = scmp.lt.s32.totalorder %s4107, 1
        %s4109 = scalar_select %p4108, %s4107, 1
        %s4110 = smul.addr %s4109, 2
        %s4111 = scalar_lea.vmem %s3, %s4110
      $region48: #{conv2d_batchnorm.2} parent=39 // pred_fallthru
        _
    $region40: #{conv2d_batchnorm.2} parent=5 // pred_fallthru
      _
  $region6: #{conv2d_batchnorm.2} parent=0 // loop_footer
    %s14 = sadd.s32 1, %s10
  $region7: #{conv2d_batchnorm.2} parent=0 // loop_footer_branch
    %9 = sbr.rel target = $region3
  $region8: #{conv2d_batchnorm.2} parent=0 // loop_exit
    _

</llo_original>
